<compile_context>
chip_gen: v7x
topology: tpu7x:2x2x1
jax: 0.10.0
libtpu: 0.0.40
codegen_flags: <defaults>
</compile_context>

<pallas_src>
import math

import jax
import jax.numpy as jnp
from jax.experimental import pallas as pl
from jax.experimental.pallas import tpu as pltpu

# ----------------------------- model dims (small stand-ins for BERT-base) ---
B = 2        # batch (number of sentences)
S = 8        # fixed sequence length ([CLS] ... [SEP])
H = 32       # hidden size   (stand-in for 768)
NH = 4       # attention heads (stand-in for 12)
DH = H // NH
F = 64       # FFN intermediate size (stand-in for 3072)
NL = 2       # encoder layers (stand-in for 12)
V = 100      # vocab size
EPS = 1e-12  # BERT LayerNorm eps
BF16 = jnp.bfloat16

# rows of the packed per-layer [NL, 8, H] vector array
VEC_BO, VEC_G1, VEC_B1, VEC_BI2, VEC_G2, VEC_B2 = range(6)


# ------------------------------- shared math (usable in- and out-of-kernel) -
def _layernorm(x, gamma, beta):
    mu = jnp.mean(x, axis=-1, keepdims=True)
    var = jnp.mean((x - mu) ** 2, axis=-1, keepdims=True)
    return (x - mu) * jax.lax.rsqrt(var + EPS) * gamma + beta


def _gelu(x):
    # tanh-approximation of GELU (transcendentals go to the EUP)
    return 0.5 * x * (1.0 + jnp.tanh(0.7978845608028654 * (x + 0.044715 * x * x * x)))


# ------------------------------------------------------------- fused kernel -
def bert_encoder_kernel(emb_ref, ln0_ref, wqkv_ref, bqkv_ref, wo_ref,
                        vec_ref, w1_ref, bi1_ref, w2_ref, o_ref):
    """Whole BERT forward for one sentence (grid step = one sentence).

    emb_ref : [1, S, H]  token+pos+type embedding sum (f32)
    weights : stacked along a leading NL axis, bf16 matmul weights + f32
              bias/LayerNorm vectors, indexed with a static layer loop.
    o_ref   : [1, 1, H]  mean-pooled sentence embedding.
    """
    x = _layernorm(emb_ref[0], ln0_ref[0:1, :], ln0_ref[1:2, :])       # [S, H] f32

    # NL=2 -> static unroll.  TODO(synk): for NL=12 use a layer grid axis
    # ("arbitrary") or lax.fori_loop over the stacked weights to bound vreg
    # live ranges and enable per-layer weight streaming.
    for l in range(NL):
        # ---- fused QKV projection: one MXU issue, bf16 inputs, f32 accum ----
        # (1/sqrt(DH) is already folded into the Q slice of wqkv/bqkv)
        qkv = jnp.dot(x.astype(BF16), wqkv_ref[l],
                      preferred_element_type=jnp.float32) + bqkv_ref[l]  # [S, 3H]

        # ---- head split: ONE 2-D transpose puts (qkv, head, dh) on the
        # sublane axis, where the DH=8 split is tile-aligned for f32, so the
        # reshape and the per-head slices below are free views (no masked
        # 8-lane slice copies / stacks / concats).
        qkv_t = qkv.T.reshape(3 * NH, DH, S)            # [3*NH, DH, S] head-major
        q_t, k_t, v_t = qkv_t[:NH], qkv_t[NH:2 * NH], qkv_t[2 * NH:]

        # ---- per-head attention.  At S=8 / DH=8 each MXU pass is push/pop
        # latency-bound whether issued batched or per head (a batched einsum
        # lowers to the same 2*NH serial passes), so keep simple 2-D dots.
        ctx_cols = []
        for h in range(NH):
            qh = q_t[h].astype(BF16)                    # [DH, S]
            kh = k_t[h].astype(BF16)                    # [DH, S]
            s = jnp.dot(qh.T, kh, preferred_element_type=jnp.float32)   # [S, S]
            s = s - jnp.max(s, axis=-1, keepdims=True)
            p = jnp.exp(s)
            p = p * pl.reciprocal(jnp.sum(p, axis=-1, keepdims=True), approx=True)
            # ctx_t[d, i] = sum_j v[d, j] * p[i, j]  (rhs-transposed MXU path)
            ctx_cols.append(jnp.einsum("dj,ij->di",
                                       v_t[h].astype(BF16), p.astype(BF16),
                                       preferred_element_type=jnp.float32))
        # merge heads: tile-aligned stack [NH, DH, S] -> [H, S] -> [S, H]
        ctx = jnp.stack(ctx_cols, axis=0).reshape(H, S).T               # [S, H]

        vecs = vec_ref[l]                                               # [8, H] f32
        attn_out = jnp.dot(ctx.astype(BF16), wo_ref[l],
                           preferred_element_type=jnp.float32) + vecs[VEC_BO:VEC_BO + 1, :]
        x = _layernorm(x + attn_out,
                       vecs[VEC_G1:VEC_G1 + 1, :], vecs[VEC_B1:VEC_B1 + 1, :])

        # ---- feed-forward (f32 GELU on the EUP, bf16 MXU operands) ----------
        hmid = _gelu(jnp.dot(x.astype(BF16), w1_ref[l],
                             preferred_element_type=jnp.float32) + bi1_ref[l])
        ffn_out = jnp.dot(hmid.astype(BF16), w2_ref[l],
                          preferred_element_type=jnp.float32) + vecs[VEC_BI2:VEC_BI2 + 1, :]
        x = _layernorm(x + ffn_out,
                       vecs[VEC_G2:VEC_G2 + 1, :], vecs[VEC_B2:VEC_B2 + 1, :])

    # ---- mean-pool over tokens (fused epilogue, no extra launch) ------------
    o_ref[...] = jnp.mean(x, axis=0, keepdims=True).reshape(1, 1, H).astype(o_ref.dtype)


# ------------------------------------------------------------ Pallas wrapper
def pack_params(params):
    """Pack per-layer weights into 8 stacked kernel inputs:
       fused (pre-scaled) QKV weights/bias, bf16 matmul weights, and all
       H-wide bias / LayerNorm vectors in one [NL, 8, H] array."""
    scale = 1.0 / math.sqrt(DH)
    layers = params["layers"]
    stack = lambda f: jnp.stack([f(l) for l in layers])
    return dict(
        word_emb=params["word_emb"], pos_emb=params["pos_emb"],
        type_emb=params["type_emb"],
        ln0=jnp.concatenate([params["emb_ln_g"], params["emb_ln_b"]], axis=0),  # [2, H]
        w_qkv=stack(lambda l: jnp.concatenate(
            [l["wq"] * scale, l["wk"], l["wv"]], axis=1)).astype(BF16),         # [NL, H, 3H]
        b_qkv=stack(lambda l: jnp.concatenate(
            [l["bq"] * scale, l["bk"], l["bv"]], axis=1)),                      # [NL, 1, 3H] f32
        wo=stack(lambda l: l["wo"]).astype(BF16),                               # [NL, H, H]
        vec_h=stack(lambda l: jnp.concatenate(
            [l["bo"], l["g1"], l["b1"], l["bi2"], l["g2"], l["b2"],
             jnp.zeros((2, H), jnp.float32)], axis=0)),                         # [NL, 8, H] f32
        w1=stack(lambda l: l["w1"]).astype(BF16),                               # [NL, H, F]
        bi1=stack(lambda l: l["bi1"]),                                          # [NL, 1, F] f32
        w2=stack(lambda l: l["w2"]).astype(BF16),                               # [NL, F, H]
    )


@jax.jit
def bert_encoder_forward(token_ids, packed):
    """token_ids: [B, S] int32 -> sentence embeddings [B, H] (mean over tokens)."""
    # embedding lookup (gather) + position + token-type (segment ids = all 1s,
    # exactly as in the original module); gather stays in XLA.
    emb = (packed["word_emb"][token_ids]
           + packed["pos_emb"][None, :, :]
           + packed["type_emb"][1][None, None, :])                # [B, S, H] f32

    wspec = lambda shape: pl.BlockSpec(shape, lambda b: (0,) * len(shape))
    out = pl.pallas_call(
        bert_encoder_kernel,
        out_shape=jax.ShapeDtypeStruct((B, 1, H), jnp.float32),
        grid=(B,),
        in_specs=[
            pl.BlockSpec((1, S, H), lambda b: (b, 0, 0)),         # emb, per sentence
            wspec((2, H)),                                        # ln0
            wspec((NL, H, 3 * H)),                                # w_qkv (bf16)
            wspec((NL, 1, 3 * H)),                                # b_qkv
            wspec((NL, H, H)),                                    # wo    (bf16)
            wspec((NL, 8, H)),                                    # vec_h
            wspec((NL, H, F)),                                    # w1    (bf16)
            wspec((NL, 1, F)),                                    # bi1
            wspec((NL, F, H)),                                    # w2    (bf16)
        ],
        out_specs=pl.BlockSpec((1, 1, H), lambda b: (b, 0, 0)),
        compiler_params=pltpu.CompilerParams(
            # shards the sentence axis across both v7x TensorCores; weights use
            # constant index maps so they are fetched once, not per grid step.
            dimension_semantics=("parallel",)),
    )(emb, packed["ln0"], packed["w_qkv"], packed["b_qkv"], packed["wo"],
      packed["vec_h"], packed["w1"], packed["bi1"], packed["w2"])
    return out.reshape(B, H)


# ------------------------------------------------------------------ glue code
def init_params(key):
    def nrm(k, shape):
        return 0.02 * jax.random.normal(k, shape, jnp.float32)

    keys = iter(jax.random.split(key, 5 + NL * 16))
    params = {
        "word_emb": nrm(next(keys), (V, H)),
        "pos_emb": nrm(next(keys), (S, H)),
        "type_emb": nrm(next(keys), (2, H)),
        "emb_ln_g": 1.0 + nrm(next(keys), (1, H)),
        "emb_ln_b": nrm(next(keys), (1, H)),
        "layers": [],
    }
    for _ in range(NL):
        params["layers"].append(dict(
            wq=nrm(next(keys), (H, H)), bq=nrm(next(keys), (1, H)),
            wk=nrm(next(keys), (H, H)), bk=nrm(next(keys), (1, H)),
            wv=nrm(next(keys), (H, H)), bv=nrm(next(keys), (1, H)),
            wo=nrm(next(keys), (H, H)), bo=nrm(next(keys), (1, H)),
            g1=1.0 + nrm(next(keys), (1, H)), b1=nrm(next(keys), (1, H)),
            w1=nrm(next(keys), (H, F)), bi1=nrm(next(keys), (1, F)),
            w2=nrm(next(keys), (F, H)), bi2=nrm(next(keys), (1, H)),
            g2=1.0 + nrm(next(keys), (1, H)), b2=nrm(next(keys), (1, H)),
        ))
    return params


# pure-JAX reference (mirrors the kernel's intended mixed precision: bf16 MXU
# operands + f32 accumulation, f32 LayerNorm/GELU, scale folded into Q).
def _reference_forward(token_ids, params):
    scale = 1.0 / math.sqrt(DH)
    emb = (params["word_emb"][token_ids] + params["pos_emb"][None, :, :]
           + params["type_emb"][1][None, None, :])
    x = _layernorm(emb, params["emb_ln_g"], params["emb_ln_b"])
    for lyr in params["layers"]:
        xb = x.astype(BF16)
        q = jnp.dot(xb, (lyr["wq"] * scale).astype(BF16),
                    preferred_element_type=jnp.float32) + lyr["bq"] * scale
        k = jnp.dot(xb, lyr["wk"].astype(BF16),
                    preferred_element_type=jnp.float32) + lyr["bk"]
        v = jnp.dot(xb, lyr["wv"].astype(BF16),
                    preferred_element_type=jnp.float32) + lyr["bv"]
        qh = q.reshape(B, S, NH, DH).astype(BF16)
        kh = k.reshape(B, S, NH, DH).astype(BF16)
        vh = v.reshape(B, S, NH, DH).astype(BF16)
        s = jnp.einsum("bqhd,bkhd->bhqk", qh, kh, preferred_element_type=jnp.float32)
        p = jax.nn.softmax(s, axis=-1)
        ctx = jnp.einsum("bhqk,bkhd->bqhd", p.astype(BF16), vh,
                         preferred_element_type=jnp.float32).reshape(B, S, H)
        attn = jnp.dot(ctx.astype(BF16), lyr["wo"].astype(BF16),
                       preferred_element_type=jnp.float32) + lyr["bo"]
        x = _layernorm(x + attn, lyr["g1"], lyr["b1"])
        hmid = _gelu(jnp.dot(x.astype(BF16), lyr["w1"].astype(BF16),
                             preferred_element_type=jnp.float32) + lyr["bi1"])
        ffn = jnp.dot(hmid.astype(BF16), lyr["w2"].astype(BF16),
                      preferred_element_type=jnp.float32) + lyr["bi2"]
        x = _layernorm(x + ffn, lyr["g2"], lyr["b2"])
    return jnp.mean(x, axis=1)


if __name__ == "__main__":
    root = jax.random.PRNGKey(0)
    tok_key, param_key = jax.random.split(root)
    token_ids = jax.random.randint(tok_key, (B, S), 0, V, dtype=jnp.int32)
    params = init_params(param_key)
    packed = pack_params(params)

    out = bert_encoder_forward(token_ids, packed)
    out = jax.block_until_ready(out)

    assert out.shape == (B, H), out.shape
    ref = _reference_forward(token_ids, params)
    err = float(jnp.max(jnp.abs(out - ref)))
    # approx=True EUP reciprocal in the softmax (and f32 accumulation-order
    # differences) are the only deliberate deviations from the reference math.
    assert jnp.allclose(out, ref, atol=3e-3, rtol=3e-3), err

    print("KERNEL_OK")
</pallas_src>

<mosaic_0001>
module attributes {stable_mosaic.version = 11 : i64} {
  func.func @bert_encoder_kernel(%arg0: i32, %arg1: memref<1x8x32xf32, #tpu.memory_space<vmem>>, %arg2: memref<2x32xf32, #tpu.memory_space<vmem>>, %arg3: memref<2x32x96xbf16, #tpu.memory_space<vmem>>, %arg4: memref<2x1x96xf32, #tpu.memory_space<vmem>>, %arg5: memref<2x32x32xbf16, #tpu.memory_space<vmem>>, %arg6: memref<2x8x32xf32, #tpu.memory_space<vmem>>, %arg7: memref<2x32x64xbf16, #tpu.memory_space<vmem>>, %arg8: memref<2x1x64xf32, #tpu.memory_space<vmem>>, %arg9: memref<2x64x32xbf16, #tpu.memory_space<vmem>>, %arg10: memref<1x1x32xf32, #tpu.memory_space<vmem>>) attributes {dimension_semantics = [#tpu.dimension_semantics<parallel>], iteration_bounds = array<i64: 2>, scalar_prefetch = 0 : i64, scratch_operands = 0 : i64, tpu.core_type = #tpu.core_type<tc>, window_params = [{transform_indices = @transform_0, window_bounds = array<i64: 1, 8, 32>}, {pipeline_mode = #tpu.pipeline_mode<synchronous>, transform_indices = @transform_1, window_bounds = array<i64: 2, 32>}, {pipeline_mode = #tpu.pipeline_mode<synchronous>, transform_indices = @transform_2, window_bounds = array<i64: 2, 32, 96>}, {pipeline_mode = #tpu.pipeline_mode<synchronous>, transform_indices = @transform_3, window_bounds = array<i64: 2, 1, 96>}, {pipeline_mode = #tpu.pipeline_mode<synchronous>, transform_indices = @transform_4, window_bounds = array<i64: 2, 32, 32>}, {pipeline_mode = #tpu.pipeline_mode<synchronous>, transform_indices = @transform_5, window_bounds = array<i64: 2, 8, 32>}, {pipeline_mode = #tpu.pipeline_mode<synchronous>, transform_indices = @transform_6, window_bounds = array<i64: 2, 32, 64>}, {pipeline_mode = #tpu.pipeline_mode<synchronous>, transform_indices = @transform_7, window_bounds = array<i64: 2, 1, 64>}, {pipeline_mode = #tpu.pipeline_mode<synchronous>, transform_indices = @transform_8, window_bounds = array<i64: 2, 64, 32>}, {transform_indices = @transform_9, window_bounds = array<i64: 1, 1, 32>}]} {
    %c0 = arith.constant 0 : index
    %c0_0 = arith.constant 0 : index
    %c0_1 = arith.constant 0 : index
    %0 = vector.load %arg1[%c0, %c0_0, %c0_1] : memref<1x8x32xf32, #tpu.memory_space<vmem>>, vector<1x8x32xf32>
    %1 = vector.shape_cast %0 : vector<1x8x32xf32> to vector<8x32xf32>
    %c0_2 = arith.constant 0 : index
    %c0_3 = arith.constant 0 : index
    %2 = vector.load %arg2[%c0_2, %c0_3] : memref<2x32xf32, #tpu.memory_space<vmem>>, vector<1x32xf32>
    %c1 = arith.constant 1 : index
    %c0_4 = arith.constant 0 : index
    %3 = vector.load %arg2[%c1, %c0_4] : memref<2x32xf32, #tpu.memory_space<vmem>>, vector<1x32xf32>
    %cst = arith.constant dense<0.000000e+00> : vector<8xf32>
    %4 = vector.multi_reduction <add>, %1, %cst [1] : vector<8x32xf32> to vector<8xf32>
    %5 = vector.shape_cast %4 : vector<8xf32> to vector<8x1xf32>
    %cst_5 = arith.constant 3.200000e+01 : f32
    %6 = vector.broadcast %cst_5 : f32 to vector<8x1xf32>
    %7 = arith.divf %5, %6 : vector<8x1xf32>
    %8 = vector.broadcast %7 : vector<8x1xf32> to vector<8x32xf32>
    %9 = arith.subf %1, %8 : vector<8x32xf32>
    %10 = arith.mulf %9, %9 : vector<8x32xf32>
    %cst_6 = arith.constant dense<0.000000e+00> : vector<8xf32>
    %11 = vector.multi_reduction <add>, %10, %cst_6 [1] : vector<8x32xf32> to vector<8xf32>
    %12 = vector.shape_cast %11 : vector<8xf32> to vector<8x1xf32>
    %cst_7 = arith.constant 3.200000e+01 : f32
    %13 = vector.broadcast %cst_7 : f32 to vector<8x1xf32>
    %14 = arith.divf %12, %13 : vector<8x1xf32>
    %15 = vector.broadcast %7 : vector<8x1xf32> to vector<8x32xf32>
    %16 = arith.subf %1, %15 : vector<8x32xf32>
    %cst_8 = arith.constant 9.99999996E-13 : f32
    %17 = vector.broadcast %cst_8 : f32 to vector<8x1xf32>
    %18 = arith.addf %14, %17 : vector<8x1xf32>
    %19 = math.rsqrt %18 : vector<8x1xf32>
    %20 = vector.broadcast %19 : vector<8x1xf32> to vector<8x32xf32>
    %21 = arith.mulf %16, %20 : vector<8x32xf32>
    %22 = vector.broadcast %2 : vector<1x32xf32> to vector<8x32xf32>
    %23 = arith.mulf %21, %22 : vector<8x32xf32>
    %24 = vector.broadcast %3 : vector<1x32xf32> to vector<8x32xf32>
    %25 = arith.addf %23, %24 : vector<8x32xf32>
    %26 = arith.truncf %25 : vector<8x32xf32> to vector<8x32xbf16>
    %c0_9 = arith.constant 0 : index
    %c0_10 = arith.constant 0 : index
    %c0_11 = arith.constant 0 : index
    %27 = vector.load %arg3[%c0_9, %c0_10, %c0_11] : memref<2x32x96xbf16, #tpu.memory_space<vmem>>, vector<1x32x96xbf16>
    %28 = vector.shape_cast %27 : vector<1x32x96xbf16> to vector<32x96xbf16>
    %cst_12 = arith.constant dense<0.000000e+00> : vector<8x96xf32>
    %29 = tpu.matmul %26, %28, %cst_12 {dimension_numbers = #tpu.dot_dimension_numbers<[1], [0], [0], [1], [0, 0, 1, 1], [], []>} : vector<8x32xbf16>, vector<32x96xbf16>, vector<8x96xf32> -> vector<8x96xf32>
    %c0_13 = arith.constant 0 : index
    %c0_14 = arith.constant 0 : index
    %c0_15 = arith.constant 0 : index
    %30 = vector.load %arg4[%c0_13, %c0_14, %c0_15] : memref<2x1x96xf32, #tpu.memory_space<vmem>>, vector<1x1x96xf32>
    %31 = vector.shape_cast %30 : vector<1x1x96xf32> to vector<1x96xf32>
    %32 = vector.broadcast %31 : vector<1x96xf32> to vector<8x96xf32>
    %33 = arith.addf %29, %32 : vector<8x96xf32>
    %34 = tpu.transpose %33, [1, 0] : vector<8x96xf32> -> vector<96x8xf32>
    %35 = vector.shape_cast %34 : vector<96x8xf32> to vector<12x8x8xf32>
    %36 = vector.extract_strided_slice %35 {offsets = [0, 0, 0], sizes = [4, 8, 8], strides = [1, 1, 1]} : vector<12x8x8xf32> to vector<4x8x8xf32>
    %37 = vector.extract_strided_slice %35 {offsets = [4, 0, 0], sizes = [4, 8, 8], strides = [1, 1, 1]} : vector<12x8x8xf32> to vector<4x8x8xf32>
    %38 = vector.extract_strided_slice %35 {offsets = [8, 0, 0], sizes = [4, 8, 8], strides = [1, 1, 1]} : vector<12x8x8xf32> to vector<4x8x8xf32>
    %39 = vector.extract_strided_slice %36 {offsets = [0, 0, 0], sizes = [1, 8, 8], strides = [1, 1, 1]} : vector<4x8x8xf32> to vector<1x8x8xf32>
    %40 = vector.shape_cast %39 : vector<1x8x8xf32> to vector<8x8xf32>
    %41 = arith.truncf %40 : vector<8x8xf32> to vector<8x8xbf16>
    %42 = vector.extract_strided_slice %37 {offsets = [0, 0, 0], sizes = [1, 8, 8], strides = [1, 1, 1]} : vector<4x8x8xf32> to vector<1x8x8xf32>
    %43 = vector.shape_cast %42 : vector<1x8x8xf32> to vector<8x8xf32>
    %44 = arith.truncf %43 : vector<8x8xf32> to vector<8x8xbf16>
    %45 = tpu.transpose %41, [1, 0] : vector<8x8xbf16> -> vector<8x8xbf16>
    %cst_16 = arith.constant dense<0.000000e+00> : vector<8x8xf32>
    %46 = tpu.matmul %45, %44, %cst_16 {dimension_numbers = #tpu.dot_dimension_numbers<[1], [0], [0], [1], [0, 0, 1, 1], [], []>} : vector<8x8xbf16>, vector<8x8xbf16>, vector<8x8xf32> -> vector<8x8xf32>
    %cst_17 = arith.constant dense<0xFF800000> : vector<8xf32>
    %47 = vector.multi_reduction <maximumf>, %46, %cst_17 [1] : vector<8x8xf32> to vector<8xf32>
    %48 = vector.shape_cast %47 : vector<8xf32> to vector<8x1xf32>
    %49 = vector.broadcast %48 : vector<8x1xf32> to vector<8x8xf32>
    %50 = arith.subf %46, %49 : vector<8x8xf32>
    %51 = math.exp %50 : vector<8x8xf32>
    %cst_18 = arith.constant dense<0.000000e+00> : vector<8xf32>
    %52 = vector.multi_reduction <add>, %51, %cst_18 [1] : vector<8x8xf32> to vector<8xf32>
    %53 = vector.shape_cast %52 : vector<8xf32> to vector<8x1xf32>
    %54 = tpu.reciprocal %53 {approx = true} : vector<8x1xf32> -> vector<8x1xf32>
    %55 = vector.broadcast %54 : vector<8x1xf32> to vector<8x8xf32>
    %56 = arith.mulf %51, %55 : vector<8x8xf32>
    %57 = vector.extract_strided_slice %38 {offsets = [0, 0, 0], sizes = [1, 8, 8], strides = [1, 1, 1]} : vector<4x8x8xf32> to vector<1x8x8xf32>
    %58 = vector.shape_cast %57 : vector<1x8x8xf32> to vector<8x8xf32>
    %59 = arith.truncf %58 : vector<8x8xf32> to vector<8x8xbf16>
    %60 = arith.truncf %56 : vector<8x8xf32> to vector<8x8xbf16>
    "tpu.trace_start"() <{level = 10 : i32, message = "dj,ij->di"}> : () -> ()
    %cst_19 = arith.constant dense<0.000000e+00> : vector<8x8xf32>
    %61 = tpu.matmul %59, %60, %cst_19 {dimension_numbers = #tpu.dot_dimension_numbers<[1], [1], [0], [0], [0, 0, 1, 0], [], []>} : vector<8x8xbf16>, vector<8x8xbf16>, vector<8x8xf32> -> vector<8x8xf32>
    "tpu.trace_stop"() : () -> ()
    %62 = vector.extract_strided_slice %36 {offsets = [1, 0, 0], sizes = [1, 8, 8], strides = [1, 1, 1]} : vector<4x8x8xf32> to vector<1x8x8xf32>
    %63 = vector.shape_cast %62 : vector<1x8x8xf32> to vector<8x8xf32>
    %64 = arith.truncf %63 : vector<8x8xf32> to vector<8x8xbf16>
    %65 = vector.extract_strided_slice %37 {offsets = [1, 0, 0], sizes = [1, 8, 8], strides = [1, 1, 1]} : vector<4x8x8xf32> to vector<1x8x8xf32>
    %66 = vector.shape_cast %65 : vector<1x8x8xf32> to vector<8x8xf32>
    %67 = arith.truncf %66 : vector<8x8xf32> to vector<8x8xbf16>
    %68 = tpu.transpose %64, [1, 0] : vector<8x8xbf16> -> vector<8x8xbf16>
    %cst_20 = arith.constant dense<0.000000e+00> : vector<8x8xf32>
    %69 = tpu.matmul %68, %67, %cst_20 {dimension_numbers = #tpu.dot_dimension_numbers<[1], [0], [0], [1], [0, 0, 1, 1], [], []>} : vector<8x8xbf16>, vector<8x8xbf16>, vector<8x8xf32> -> vector<8x8xf32>
    %cst_21 = arith.constant dense<0xFF800000> : vector<8xf32>
    %70 = vector.multi_reduction <maximumf>, %69, %cst_21 [1] : vector<8x8xf32> to vector<8xf32>
    %71 = vector.shape_cast %70 : vector<8xf32> to vector<8x1xf32>
    %72 = vector.broadcast %71 : vector<8x1xf32> to vector<8x8xf32>
    %73 = arith.subf %69, %72 : vector<8x8xf32>
    %74 = math.exp %73 : vector<8x8xf32>
    %cst_22 = arith.constant dense<0.000000e+00> : vector<8xf32>
    %75 = vector.multi_reduction <add>, %74, %cst_22 [1] : vector<8x8xf32> to vector<8xf32>
    %76 = vector.shape_cast %75 : vector<8xf32> to vector<8x1xf32>
    %77 = tpu.reciprocal %76 {approx = true} : vector<8x1xf32> -> vector<8x1xf32>
    %78 = vector.broadcast %77 : vector<8x1xf32> to vector<8x8xf32>
    %79 = arith.mulf %74, %78 : vector<8x8xf32>
    %80 = vector.extract_strided_slice %38 {offsets = [1, 0, 0], sizes = [1, 8, 8], strides = [1, 1, 1]} : vector<4x8x8xf32> to vector<1x8x8xf32>
    %81 = vector.shape_cast %80 : vector<1x8x8xf32> to vector<8x8xf32>
    %82 = arith.truncf %81 : vector<8x8xf32> to vector<8x8xbf16>
    %83 = arith.truncf %79 : vector<8x8xf32> to vector<8x8xbf16>
    "tpu.trace_start"() <{level = 10 : i32, message = "dj,ij->di"}> : () -> ()
    %cst_23 = arith.constant dense<0.000000e+00> : vector<8x8xf32>
    %84 = tpu.matmul %82, %83, %cst_23 {dimension_numbers = #tpu.dot_dimension_numbers<[1], [1], [0], [0], [0, 0, 1, 0], [], []>} : vector<8x8xbf16>, vector<8x8xbf16>, vector<8x8xf32> -> vector<8x8xf32>
    "tpu.trace_stop"() : () -> ()
    %85 = vector.extract_strided_slice %36 {offsets = [2, 0, 0], sizes = [1, 8, 8], strides = [1, 1, 1]} : vector<4x8x8xf32> to vector<1x8x8xf32>
    %86 = vector.shape_cast %85 : vector<1x8x8xf32> to vector<8x8xf32>
    %87 = arith.truncf %86 : vector<8x8xf32> to vector<8x8xbf16>
    %88 = vector.extract_strided_slice %37 {offsets = [2, 0, 0], sizes = [1, 8, 8], strides = [1, 1, 1]} : vector<4x8x8xf32> to vector<1x8x8xf32>
    %89 = vector.shape_cast %88 : vector<1x8x8xf32> to vector<8x8xf32>
    %90 = arith.truncf %89 : vector<8x8xf32> to vector<8x8xbf16>
    %91 = tpu.transpose %87, [1, 0] : vector<8x8xbf16> -> vector<8x8xbf16>
    %cst_24 = arith.constant dense<0.000000e+00> : vector<8x8xf32>
    %92 = tpu.matmul %91, %90, %cst_24 {dimension_numbers = #tpu.dot_dimension_numbers<[1], [0], [0], [1], [0, 0, 1, 1], [], []>} : vector<8x8xbf16>, vector<8x8xbf16>, vector<8x8xf32> -> vector<8x8xf32>
    %cst_25 = arith.constant dense<0xFF800000> : vector<8xf32>
    %93 = vector.multi_reduction <maximumf>, %92, %cst_25 [1] : vector<8x8xf32> to vector<8xf32>
    %94 = vector.shape_cast %93 : vector<8xf32> to vector<8x1xf32>
    %95 = vector.broadcast %94 : vector<8x1xf32> to vector<8x8xf32>
    %96 = arith.subf %92, %95 : vector<8x8xf32>
    %97 = math.exp %96 : vector<8x8xf32>
    %cst_26 = arith.constant dense<0.000000e+00> : vector<8xf32>
    %98 = vector.multi_reduction <add>, %97, %cst_26 [1] : vector<8x8xf32> to vector<8xf32>
    %99 = vector.shape_cast %98 : vector<8xf32> to vector<8x1xf32>
    %100 = tpu.reciprocal %99 {approx = true} : vector<8x1xf32> -> vector<8x1xf32>
    %101 = vector.broadcast %100 : vector<8x1xf32> to vector<8x8xf32>
    %102 = arith.mulf %97, %101 : vector<8x8xf32>
    %103 = vector.extract_strided_slice %38 {offsets = [2, 0, 0], sizes = [1, 8, 8], strides = [1, 1, 1]} : vector<4x8x8xf32> to vector<1x8x8xf32>
    %104 = vector.shape_cast %103 : vector<1x8x8xf32> to vector<8x8xf32>
    %105 = arith.truncf %104 : vector<8x8xf32> to vector<8x8xbf16>
    %106 = arith.truncf %102 : vector<8x8xf32> to vector<8x8xbf16>
    "tpu.trace_start"() <{level = 10 : i32, message = "dj,ij->di"}> : () -> ()
    %cst_27 = arith.constant dense<0.000000e+00> : vector<8x8xf32>
    %107 = tpu.matmul %105, %106, %cst_27 {dimension_numbers = #tpu.dot_dimension_numbers<[1], [1], [0], [0], [0, 0, 1, 0], [], []>} : vector<8x8xbf16>, vector<8x8xbf16>, vector<8x8xf32> -> vector<8x8xf32>
    "tpu.trace_stop"() : () -> ()
    %108 = vector.extract_strided_slice %36 {offsets = [3, 0, 0], sizes = [1, 8, 8], strides = [1, 1, 1]} : vector<4x8x8xf32> to vector<1x8x8xf32>
    %109 = vector.shape_cast %108 : vector<1x8x8xf32> to vector<8x8xf32>
    %110 = arith.truncf %109 : vector<8x8xf32> to vector<8x8xbf16>
    %111 = vector.extract_strided_slice %37 {offsets = [3, 0, 0], sizes = [1, 8, 8], strides = [1, 1, 1]} : vector<4x8x8xf32> to vector<1x8x8xf32>
    %112 = vector.shape_cast %111 : vector<1x8x8xf32> to vector<8x8xf32>
    %113 = arith.truncf %112 : vector<8x8xf32> to vector<8x8xbf16>
    %114 = tpu.transpose %110, [1, 0] : vector<8x8xbf16> -> vector<8x8xbf16>
    %cst_28 = arith.constant dense<0.000000e+00> : vector<8x8xf32>
    %115 = tpu.matmul %114, %113, %cst_28 {dimension_numbers = #tpu.dot_dimension_numbers<[1], [0], [0], [1], [0, 0, 1, 1], [], []>} : vector<8x8xbf16>, vector<8x8xbf16>, vector<8x8xf32> -> vector<8x8xf32>
    %cst_29 = arith.constant dense<0xFF800000> : vector<8xf32>
    %116 = vector.multi_reduction <maximumf>, %115, %cst_29 [1] : vector<8x8xf32> to vector<8xf32>
    %117 = vector.shape_cast %116 : vector<8xf32> to vector<8x1xf32>
    %118 = vector.broadcast %117 : vector<8x1xf32> to vector<8x8xf32>
    %119 = arith.subf %115, %118 : vector<8x8xf32>
    %120 = math.exp %119 : vector<8x8xf32>
    %cst_30 = arith.constant dense<0.000000e+00> : vector<8xf32>
    %121 = vector.multi_reduction <add>, %120, %cst_30 [1] : vector<8x8xf32> to vector<8xf32>
    %122 = vector.shape_cast %121 : vector<8xf32> to vector<8x1xf32>
    %123 = tpu.reciprocal %122 {approx = true} : vector<8x1xf32> -> vector<8x1xf32>
    %124 = vector.broadcast %123 : vector<8x1xf32> to vector<8x8xf32>
    %125 = arith.mulf %120, %124 : vector<8x8xf32>
    %126 = vector.extract_strided_slice %38 {offsets = [3, 0, 0], sizes = [1, 8, 8], strides = [1, 1, 1]} : vector<4x8x8xf32> to vector<1x8x8xf32>
    %127 = vector.shape_cast %126 : vector<1x8x8xf32> to vector<8x8xf32>
    %128 = arith.truncf %127 : vector<8x8xf32> to vector<8x8xbf16>
    %129 = arith.truncf %125 : vector<8x8xf32> to vector<8x8xbf16>
    "tpu.trace_start"() <{level = 10 : i32, message = "dj,ij->di"}> : () -> ()
    %cst_31 = arith.constant dense<0.000000e+00> : vector<8x8xf32>
    %130 = tpu.matmul %128, %129, %cst_31 {dimension_numbers = #tpu.dot_dimension_numbers<[1], [1], [0], [0], [0, 0, 1, 0], [], []>} : vector<8x8xbf16>, vector<8x8xbf16>, vector<8x8xf32> -> vector<8x8xf32>
    "tpu.trace_stop"() : () -> ()
    %131 = vector.shape_cast %61 : vector<8x8xf32> to vector<1x8x8xf32>
    %132 = vector.shape_cast %84 : vector<8x8xf32> to vector<1x8x8xf32>
    %133 = vector.shape_cast %107 : vector<8x8xf32> to vector<1x8x8xf32>
    %134 = vector.shape_cast %130 : vector<8x8xf32> to vector<1x8x8xf32>
    %135 = tpu.concatenate %131, %132, %133, %134 in 0 : vector<1x8x8xf32>, vector<1x8x8xf32>, vector<1x8x8xf32>, vector<1x8x8xf32> -> vector<4x8x8xf32>
    %136 = vector.shape_cast %135 : vector<4x8x8xf32> to vector<32x8xf32>
    %137 = tpu.transpose %136, [1, 0] : vector<32x8xf32> -> vector<8x32xf32>
    %c0_32 = arith.constant 0 : index
    %c0_33 = arith.constant 0 : index
    %c0_34 = arith.constant 0 : index
    %138 = vector.load %arg6[%c0_32, %c0_33, %c0_34] : memref<2x8x32xf32, #tpu.memory_space<vmem>>, vector<1x8x32xf32>
    %139 = vector.shape_cast %138 : vector<1x8x32xf32> to vector<8x32xf32>
    %140 = arith.truncf %137 : vector<8x32xf32> to vector<8x32xbf16>
    %c0_35 = arith.constant 0 : index
    %c0_36 = arith.constant 0 : index
    %c0_37 = arith.constant 0 : index
    %141 = vector.load %arg5[%c0_35, %c0_36, %c0_37] : memref<2x32x32xbf16, #tpu.memory_space<vmem>>, vector<1x32x32xbf16>
    %142 = vector.shape_cast %141 : vector<1x32x32xbf16> to vector<32x32xbf16>
    %cst_38 = arith.constant dense<0.000000e+00> : vector<8x32xf32>
    %143 = tpu.matmul %140, %142, %cst_38 {dimension_numbers = #tpu.dot_dimension_numbers<[1], [0], [0], [1], [0, 0, 1, 1], [], []>} : vector<8x32xbf16>, vector<32x32xbf16>, vector<8x32xf32> -> vector<8x32xf32>
    %144 = vector.extract_strided_slice %139 {offsets = [0, 0], sizes = [1, 32], strides = [1, 1]} : vector<8x32xf32> to vector<1x32xf32>
    %145 = vector.broadcast %144 : vector<1x32xf32> to vector<8x32xf32>
    %146 = arith.addf %143, %145 : vector<8x32xf32>
    %147 = arith.addf %25, %146 : vector<8x32xf32>
    %148 = vector.extract_strided_slice %139 {offsets = [1, 0], sizes = [1, 32], strides = [1, 1]} : vector<8x32xf32> to vector<1x32xf32>
    %149 = vector.extract_strided_slice %139 {offsets = [2, 0], sizes = [1, 32], strides = [1, 1]} : vector<8x32xf32> to vector<1x32xf32>
    %cst_39 = arith.constant dense<0.000000e+00> : vector<8xf32>
    %150 = vector.multi_reduction <add>, %147, %cst_39 [1] : vector<8x32xf32> to vector<8xf32>
    %151 = vector.shape_cast %150 : vector<8xf32> to vector<8x1xf32>
    %cst_40 = arith.constant 3.200000e+01 : f32
    %152 = vector.broadcast %cst_40 : f32 to vector<8x1xf32>
    %153 = arith.divf %151, %152 : vector<8x1xf32>
    %154 = vector.broadcast %153 : vector<8x1xf32> to vector<8x32xf32>
    %155 = arith.subf %147, %154 : vector<8x32xf32>
    %156 = arith.mulf %155, %155 : vector<8x32xf32>
    %cst_41 = arith.constant dense<0.000000e+00> : vector<8xf32>
    %157 = vector.multi_reduction <add>, %156, %cst_41 [1] : vector<8x32xf32> to vector<8xf32>
    %158 = vector.shape_cast %157 : vector<8xf32> to vector<8x1xf32>
    %cst_42 = arith.constant 3.200000e+01 : f32
    %159 = vector.broadcast %cst_42 : f32 to vector<8x1xf32>
    %160 = arith.divf %158, %159 : vector<8x1xf32>
    %161 = vector.broadcast %153 : vector<8x1xf32> to vector<8x32xf32>
    %162 = arith.subf %147, %161 : vector<8x32xf32>
    %cst_43 = arith.constant 9.99999996E-13 : f32
    %163 = vector.broadcast %cst_43 : f32 to vector<8x1xf32>
    %164 = arith.addf %160, %163 : vector<8x1xf32>
    %165 = math.rsqrt %164 : vector<8x1xf32>
    %166 = vector.broadcast %165 : vector<8x1xf32> to vector<8x32xf32>
    %167 = arith.mulf %162, %166 : vector<8x32xf32>
    %168 = vector.broadcast %148 : vector<1x32xf32> to vector<8x32xf32>
    %169 = arith.mulf %167, %168 : vector<8x32xf32>
    %170 = vector.broadcast %149 : vector<1x32xf32> to vector<8x32xf32>
    %171 = arith.addf %169, %170 : vector<8x32xf32>
    %172 = arith.truncf %171 : vector<8x32xf32> to vector<8x32xbf16>
    %c0_44 = arith.constant 0 : index
    %c0_45 = arith.constant 0 : index
    %c0_46 = arith.constant 0 : index
    %173 = vector.load %arg7[%c0_44, %c0_45, %c0_46] : memref<2x32x64xbf16, #tpu.memory_space<vmem>>, vector<1x32x64xbf16>
    %174 = vector.shape_cast %173 : vector<1x32x64xbf16> to vector<32x64xbf16>
    %cst_47 = arith.constant dense<0.000000e+00> : vector<8x64xf32>
    %175 = tpu.matmul %172, %174, %cst_47 {dimension_numbers = #tpu.dot_dimension_numbers<[1], [0], [0], [1], [0, 0, 1, 1], [], []>} : vector<8x32xbf16>, vector<32x64xbf16>, vector<8x64xf32> -> vector<8x64xf32>
    %c0_48 = arith.constant 0 : index
    %c0_49 = arith.constant 0 : index
    %c0_50 = arith.constant 0 : index
    %176 = vector.load %arg8[%c0_48, %c0_49, %c0_50] : memref<2x1x64xf32, #tpu.memory_space<vmem>>, vector<1x1x64xf32>
    %177 = vector.shape_cast %176 : vector<1x1x64xf32> to vector<1x64xf32>
    %178 = vector.broadcast %177 : vector<1x64xf32> to vector<8x64xf32>
    %179 = arith.addf %175, %178 : vector<8x64xf32>
    %cst_51 = arith.constant 5.000000e-01 : f32
    %180 = vector.broadcast %cst_51 : f32 to vector<8x64xf32>
    %181 = arith.mulf %180, %179 : vector<8x64xf32>
    %cst_52 = arith.constant 4.471500e-02 : f32
    %182 = vector.broadcast %cst_52 : f32 to vector<8x64xf32>
    %183 = arith.mulf %182, %179 : vector<8x64xf32>
    %184 = arith.mulf %183, %179 : vector<8x64xf32>
    %185 = arith.mulf %184, %179 : vector<8x64xf32>
    %186 = arith.addf %179, %185 : vector<8x64xf32>
    %cst_53 = arith.constant 0.797884583 : f32
    %187 = vector.broadcast %cst_53 : f32 to vector<8x64xf32>
    %188 = arith.mulf %187, %186 : vector<8x64xf32>
    %189 = math.tanh %188 : vector<8x64xf32>
    %cst_54 = arith.constant 1.000000e+00 : f32
    %190 = vector.broadcast %cst_54 : f32 to vector<8x64xf32>
    %191 = arith.addf %190, %189 : vector<8x64xf32>
    %192 = arith.mulf %181, %191 : vector<8x64xf32>
    %193 = arith.truncf %192 : vector<8x64xf32> to vector<8x64xbf16>
    %c0_55 = arith.constant 0 : index
    %c0_56 = arith.constant 0 : index
    %c0_57 = arith.constant 0 : index
    %194 = vector.load %arg9[%c0_55, %c0_56, %c0_57] : memref<2x64x32xbf16, #tpu.memory_space<vmem>>, vector<1x64x32xbf16>
    %195 = vector.shape_cast %194 : vector<1x64x32xbf16> to vector<64x32xbf16>
    %cst_58 = arith.constant dense<0.000000e+00> : vector<8x32xf32>
    %196 = tpu.matmul %193, %195, %cst_58 {dimension_numbers = #tpu.dot_dimension_numbers<[1], [0], [0], [1], [0, 0, 1, 1], [], []>} : vector<8x64xbf16>, vector<64x32xbf16>, vector<8x32xf32> -> vector<8x32xf32>
    %197 = vector.extract_strided_slice %139 {offsets = [3, 0], sizes = [1, 32], strides = [1, 1]} : vector<8x32xf32> to vector<1x32xf32>
    %198 = vector.broadcast %197 : vector<1x32xf32> to vector<8x32xf32>
    %199 = arith.addf %196, %198 : vector<8x32xf32>
    %200 = arith.addf %171, %199 : vector<8x32xf32>
    %201 = vector.extract_strided_slice %139 {offsets = [4, 0], sizes = [1, 32], strides = [1, 1]} : vector<8x32xf32> to vector<1x32xf32>
    %202 = vector.extract_strided_slice %139 {offsets = [5, 0], sizes = [1, 32], strides = [1, 1]} : vector<8x32xf32> to vector<1x32xf32>
    %cst_59 = arith.constant dense<0.000000e+00> : vector<8xf32>
    %203 = vector.multi_reduction <add>, %200, %cst_59 [1] : vector<8x32xf32> to vector<8xf32>
    %204 = vector.shape_cast %203 : vector<8xf32> to vector<8x1xf32>
    %cst_60 = arith.constant 3.200000e+01 : f32
    %205 = vector.broadcast %cst_60 : f32 to vector<8x1xf32>
    %206 = arith.divf %204, %205 : vector<8x1xf32>
    %207 = vector.broadcast %206 : vector<8x1xf32> to vector<8x32xf32>
    %208 = arith.subf %200, %207 : vector<8x32xf32>
    %209 = arith.mulf %208, %208 : vector<8x32xf32>
    %cst_61 = arith.constant dense<0.000000e+00> : vector<8xf32>
    %210 = vector.multi_reduction <add>, %209, %cst_61 [1] : vector<8x32xf32> to vector<8xf32>
    %211 = vector.shape_cast %210 : vector<8xf32> to vector<8x1xf32>
    %cst_62 = arith.constant 3.200000e+01 : f32
    %212 = vector.broadcast %cst_62 : f32 to vector<8x1xf32>
    %213 = arith.divf %211, %212 : vector<8x1xf32>
    %214 = vector.broadcast %206 : vector<8x1xf32> to vector<8x32xf32>
    %215 = arith.subf %200, %214 : vector<8x32xf32>
    %cst_63 = arith.constant 9.99999996E-13 : f32
    %216 = vector.broadcast %cst_63 : f32 to vector<8x1xf32>
    %217 = arith.addf %213, %216 : vector<8x1xf32>
    %218 = math.rsqrt %217 : vector<8x1xf32>
    %219 = vector.broadcast %218 : vector<8x1xf32> to vector<8x32xf32>
    %220 = arith.mulf %215, %219 : vector<8x32xf32>
    %221 = vector.broadcast %201 : vector<1x32xf32> to vector<8x32xf32>
    %222 = arith.mulf %220, %221 : vector<8x32xf32>
    %223 = vector.broadcast %202 : vector<1x32xf32> to vector<8x32xf32>
    %224 = arith.addf %222, %223 : vector<8x32xf32>
    %225 = arith.truncf %224 : vector<8x32xf32> to vector<8x32xbf16>
    %c1_64 = arith.constant 1 : index
    %c0_65 = arith.constant 0 : index
    %c0_66 = arith.constant 0 : index
    %226 = vector.load %arg3[%c1_64, %c0_65, %c0_66] : memref<2x32x96xbf16, #tpu.memory_space<vmem>>, vector<1x32x96xbf16>
    %227 = vector.shape_cast %226 : vector<1x32x96xbf16> to vector<32x96xbf16>
    %cst_67 = arith.constant dense<0.000000e+00> : vector<8x96xf32>
    %228 = tpu.matmul %225, %227, %cst_67 {dimension_numbers = #tpu.dot_dimension_numbers<[1], [0], [0], [1], [0, 0, 1, 1], [], []>} : vector<8x32xbf16>, vector<32x96xbf16>, vector<8x96xf32> -> vector<8x96xf32>
    %c1_68 = arith.constant 1 : index
    %c0_69 = arith.constant 0 : index
    %c0_70 = arith.constant 0 : index
    %229 = vector.load %arg4[%c1_68, %c0_69, %c0_70] : memref<2x1x96xf32, #tpu.memory_space<vmem>>, vector<1x1x96xf32>
    %230 = vector.shape_cast %229 : vector<1x1x96xf32> to vector<1x96xf32>
    %231 = vector.broadcast %230 : vector<1x96xf32> to vector<8x96xf32>
    %232 = arith.addf %228, %231 : vector<8x96xf32>
    %233 = tpu.transpose %232, [1, 0] : vector<8x96xf32> -> vector<96x8xf32>
    %234 = vector.shape_cast %233 : vector<96x8xf32> to vector<12x8x8xf32>
    %235 = vector.extract_strided_slice %234 {offsets = [0, 0, 0], sizes = [4, 8, 8], strides = [1, 1, 1]} : vector<12x8x8xf32> to vector<4x8x8xf32>
    %236 = vector.extract_strided_slice %234 {offsets = [4, 0, 0], sizes = [4, 8, 8], strides = [1, 1, 1]} : vector<12x8x8xf32> to vector<4x8x8xf32>
    %237 = vector.extract_strided_slice %234 {offsets = [8, 0, 0], sizes = [4, 8, 8], strides = [1, 1, 1]} : vector<12x8x8xf32> to vector<4x8x8xf32>
    %238 = vector.extract_strided_slice %235 {offsets = [0, 0, 0], sizes = [1, 8, 8], strides = [1, 1, 1]} : vector<4x8x8xf32> to vector<1x8x8xf32>
    %239 = vector.shape_cast %238 : vector<1x8x8xf32> to vector<8x8xf32>
    %240 = arith.truncf %239 : vector<8x8xf32> to vector<8x8xbf16>
    %241 = vector.extract_strided_slice %236 {offsets = [0, 0, 0], sizes = [1, 8, 8], strides = [1, 1, 1]} : vector<4x8x8xf32> to vector<1x8x8xf32>
    %242 = vector.shape_cast %241 : vector<1x8x8xf32> to vector<8x8xf32>
    %243 = arith.truncf %242 : vector<8x8xf32> to vector<8x8xbf16>
    %244 = tpu.transpose %240, [1, 0] : vector<8x8xbf16> -> vector<8x8xbf16>
    %cst_71 = arith.constant dense<0.000000e+00> : vector<8x8xf32>
    %245 = tpu.matmul %244, %243, %cst_71 {dimension_numbers = #tpu.dot_dimension_numbers<[1], [0], [0], [1], [0, 0, 1, 1], [], []>} : vector<8x8xbf16>, vector<8x8xbf16>, vector<8x8xf32> -> vector<8x8xf32>
    %cst_72 = arith.constant dense<0xFF800000> : vector<8xf32>
    %246 = vector.multi_reduction <maximumf>, %245, %cst_72 [1] : vector<8x8xf32> to vector<8xf32>
    %247 = vector.shape_cast %246 : vector<8xf32> to vector<8x1xf32>
    %248 = vector.broadcast %247 : vector<8x1xf32> to vector<8x8xf32>
    %249 = arith.subf %245, %248 : vector<8x8xf32>
    %250 = math.exp %249 : vector<8x8xf32>
    %cst_73 = arith.constant dense<0.000000e+00> : vector<8xf32>
    %251 = vector.multi_reduction <add>, %250, %cst_73 [1] : vector<8x8xf32> to vector<8xf32>
    %252 = vector.shape_cast %251 : vector<8xf32> to vector<8x1xf32>
    %253 = tpu.reciprocal %252 {approx = true} : vector<8x1xf32> -> vector<8x1xf32>
    %254 = vector.broadcast %253 : vector<8x1xf32> to vector<8x8xf32>
    %255 = arith.mulf %250, %254 : vector<8x8xf32>
    %256 = vector.extract_strided_slice %237 {offsets = [0, 0, 0], sizes = [1, 8, 8], strides = [1, 1, 1]} : vector<4x8x8xf32> to vector<1x8x8xf32>
    %257 = vector.shape_cast %256 : vector<1x8x8xf32> to vector<8x8xf32>
    %258 = arith.truncf %257 : vector<8x8xf32> to vector<8x8xbf16>
    %259 = arith.truncf %255 : vector<8x8xf32> to vector<8x8xbf16>
    "tpu.trace_start"() <{level = 10 : i32, message = "dj,ij->di"}> : () -> ()
    %cst_74 = arith.constant dense<0.000000e+00> : vector<8x8xf32>
    %260 = tpu.matmul %258, %259, %cst_74 {dimension_numbers = #tpu.dot_dimension_numbers<[1], [1], [0], [0], [0, 0, 1, 0], [], []>} : vector<8x8xbf16>, vector<8x8xbf16>, vector<8x8xf32> -> vector<8x8xf32>
    "tpu.trace_stop"() : () -> ()
    %261 = vector.extract_strided_slice %235 {offsets = [1, 0, 0], sizes = [1, 8, 8], strides = [1, 1, 1]} : vector<4x8x8xf32> to vector<1x8x8xf32>
    %262 = vector.shape_cast %261 : vector<1x8x8xf32> to vector<8x8xf32>
    %263 = arith.truncf %262 : vector<8x8xf32> to vector<8x8xbf16>
    %264 = vector.extract_strided_slice %236 {offsets = [1, 0, 0], sizes = [1, 8, 8], strides = [1, 1, 1]} : vector<4x8x8xf32> to vector<1x8x8xf32>
    %265 = vector.shape_cast %264 : vector<1x8x8xf32> to vector<8x8xf32>
    %266 = arith.truncf %265 : vector<8x8xf32> to vector<8x8xbf16>
    %267 = tpu.transpose %263, [1, 0] : vector<8x8xbf16> -> vector<8x8xbf16>
    %cst_75 = arith.constant dense<0.000000e+00> : vector<8x8xf32>
    %268 = tpu.matmul %267, %266, %cst_75 {dimension_numbers = #tpu.dot_dimension_numbers<[1], [0], [0], [1], [0, 0, 1, 1], [], []>} : vector<8x8xbf16>, vector<8x8xbf16>, vector<8x8xf32> -> vector<8x8xf32>
    %cst_76 = arith.constant dense<0xFF800000> : vector<8xf32>
    %269 = vector.multi_reduction <maximumf>, %268, %cst_76 [1] : vector<8x8xf32> to vector<8xf32>
    %270 = vector.shape_cast %269 : vector<8xf32> to vector<8x1xf32>
    %271 = vector.broadcast %270 : vector<8x1xf32> to vector<8x8xf32>
    %272 = arith.subf %268, %271 : vector<8x8xf32>
    %273 = math.exp %272 : vector<8x8xf32>
    %cst_77 = arith.constant dense<0.000000e+00> : vector<8xf32>
    %274 = vector.multi_reduction <add>, %273, %cst_77 [1] : vector<8x8xf32> to vector<8xf32>
    %275 = vector.shape_cast %274 : vector<8xf32> to vector<8x1xf32>
    %276 = tpu.reciprocal %275 {approx = true} : vector<8x1xf32> -> vector<8x1xf32>
    %277 = vector.broadcast %276 : vector<8x1xf32> to vector<8x8xf32>
    %278 = arith.mulf %273, %277 : vector<8x8xf32>
    %279 = vector.extract_strided_slice %237 {offsets = [1, 0, 0], sizes = [1, 8, 8], strides = [1, 1, 1]} : vector<4x8x8xf32> to vector<1x8x8xf32>
    %280 = vector.shape_cast %279 : vector<1x8x8xf32> to vector<8x8xf32>
    %281 = arith.truncf %280 : vector<8x8xf32> to vector<8x8xbf16>
    %282 = arith.truncf %278 : vector<8x8xf32> to vector<8x8xbf16>
    "tpu.trace_start"() <{level = 10 : i32, message = "dj,ij->di"}> : () -> ()
    %cst_78 = arith.constant dense<0.000000e+00> : vector<8x8xf32>
    %283 = tpu.matmul %281, %282, %cst_78 {dimension_numbers = #tpu.dot_dimension_numbers<[1], [1], [0], [0], [0, 0, 1, 0], [], []>} : vector<8x8xbf16>, vector<8x8xbf16>, vector<8x8xf32> -> vector<8x8xf32>
    "tpu.trace_stop"() : () -> ()
    %284 = vector.extract_strided_slice %235 {offsets = [2, 0, 0], sizes = [1, 8, 8], strides = [1, 1, 1]} : vector<4x8x8xf32> to vector<1x8x8xf32>
    %285 = vector.shape_cast %284 : vector<1x8x8xf32> to vector<8x8xf32>
    %286 = arith.truncf %285 : vector<8x8xf32> to vector<8x8xbf16>
    %287 = vector.extract_strided_slice %236 {offsets = [2, 0, 0], sizes = [1, 8, 8], strides = [1, 1, 1]} : vector<4x8x8xf32> to vector<1x8x8xf32>
    %288 = vector.shape_cast %287 : vector<1x8x8xf32> to vector<8x8xf32>
    %289 = arith.truncf %288 : vector<8x8xf32> to vector<8x8xbf16>
    %290 = tpu.transpose %286, [1, 0] : vector<8x8xbf16> -> vector<8x8xbf16>
    %cst_79 = arith.constant dense<0.000000e+00> : vector<8x8xf32>
    %291 = tpu.matmul %290, %289, %cst_79 {dimension_numbers = #tpu.dot_dimension_numbers<[1], [0], [0], [1], [0, 0, 1, 1], [], []>} : vector<8x8xbf16>, vector<8x8xbf16>, vector<8x8xf32> -> vector<8x8xf32>
    %cst_80 = arith.constant dense<0xFF800000> : vector<8xf32>
    %292 = vector.multi_reduction <maximumf>, %291, %cst_80 [1] : vector<8x8xf32> to vector<8xf32>
    %293 = vector.shape_cast %292 : vector<8xf32> to vector<8x1xf32>
    %294 = vector.broadcast %293 : vector<8x1xf32> to vector<8x8xf32>
    %295 = arith.subf %291, %294 : vector<8x8xf32>
    %296 = math.exp %295 : vector<8x8xf32>
    %cst_81 = arith.constant dense<0.000000e+00> : vector<8xf32>
    %297 = vector.multi_reduction <add>, %296, %cst_81 [1] : vector<8x8xf32> to vector<8xf32>
    %298 = vector.shape_cast %297 : vector<8xf32> to vector<8x1xf32>
    %299 = tpu.reciprocal %298 {approx = true} : vector<8x1xf32> -> vector<8x1xf32>
    %300 = vector.broadcast %299 : vector<8x1xf32> to vector<8x8xf32>
    %301 = arith.mulf %296, %300 : vector<8x8xf32>
    %302 = vector.extract_strided_slice %237 {offsets = [2, 0, 0], sizes = [1, 8, 8], strides = [1, 1, 1]} : vector<4x8x8xf32> to vector<1x8x8xf32>
    %303 = vector.shape_cast %302 : vector<1x8x8xf32> to vector<8x8xf32>
    %304 = arith.truncf %303 : vector<8x8xf32> to vector<8x8xbf16>
    %305 = arith.truncf %301 : vector<8x8xf32> to vector<8x8xbf16>
    "tpu.trace_start"() <{level = 10 : i32, message = "dj,ij->di"}> : () -> ()
    %cst_82 = arith.constant dense<0.000000e+00> : vector<8x8xf32>
    %306 = tpu.matmul %304, %305, %cst_82 {dimension_numbers = #tpu.dot_dimension_numbers<[1], [1], [0], [0], [0, 0, 1, 0], [], []>} : vector<8x8xbf16>, vector<8x8xbf16>, vector<8x8xf32> -> vector<8x8xf32>
    "tpu.trace_stop"() : () -> ()
    %307 = vector.extract_strided_slice %235 {offsets = [3, 0, 0], sizes = [1, 8, 8], strides = [1, 1, 1]} : vector<4x8x8xf32> to vector<1x8x8xf32>
    %308 = vector.shape_cast %307 : vector<1x8x8xf32> to vector<8x8xf32>
    %309 = arith.truncf %308 : vector<8x8xf32> to vector<8x8xbf16>
    %310 = vector.extract_strided_slice %236 {offsets = [3, 0, 0], sizes = [1, 8, 8], strides = [1, 1, 1]} : vector<4x8x8xf32> to vector<1x8x8xf32>
    %311 = vector.shape_cast %310 : vector<1x8x8xf32> to vector<8x8xf32>
    %312 = arith.truncf %311 : vector<8x8xf32> to vector<8x8xbf16>
    %313 = tpu.transpose %309, [1, 0] : vector<8x8xbf16> -> vector<8x8xbf16>
    %cst_83 = arith.constant dense<0.000000e+00> : vector<8x8xf32>
    %314 = tpu.matmul %313, %312, %cst_83 {dimension_numbers = #tpu.dot_dimension_numbers<[1], [0], [0], [1], [0, 0, 1, 1], [], []>} : vector<8x8xbf16>, vector<8x8xbf16>, vector<8x8xf32> -> vector<8x8xf32>
    %cst_84 = arith.constant dense<0xFF800000> : vector<8xf32>
    %315 = vector.multi_reduction <maximumf>, %314, %cst_84 [1] : vector<8x8xf32> to vector<8xf32>
    %316 = vector.shape_cast %315 : vector<8xf32> to vector<8x1xf32>
    %317 = vector.broadcast %316 : vector<8x1xf32> to vector<8x8xf32>
    %318 = arith.subf %314, %317 : vector<8x8xf32>
    %319 = math.exp %318 : vector<8x8xf32>
    %cst_85 = arith.constant dense<0.000000e+00> : vector<8xf32>
    %320 = vector.multi_reduction <add>, %319, %cst_85 [1] : vector<8x8xf32> to vector<8xf32>
    %321 = vector.shape_cast %320 : vector<8xf32> to vector<8x1xf32>
    %322 = tpu.reciprocal %321 {approx = true} : vector<8x1xf32> -> vector<8x1xf32>
    %323 = vector.broadcast %322 : vector<8x1xf32> to vector<8x8xf32>
    %324 = arith.mulf %319, %323 : vector<8x8xf32>
    %325 = vector.extract_strided_slice %237 {offsets = [3, 0, 0], sizes = [1, 8, 8], strides = [1, 1, 1]} : vector<4x8x8xf32> to vector<1x8x8xf32>
    %326 = vector.shape_cast %325 : vector<1x8x8xf32> to vector<8x8xf32>
    %327 = arith.truncf %326 : vector<8x8xf32> to vector<8x8xbf16>
    %328 = arith.truncf %324 : vector<8x8xf32> to vector<8x8xbf16>
    "tpu.trace_start"() <{level = 10 : i32, message = "dj,ij->di"}> : () -> ()
    %cst_86 = arith.constant dense<0.000000e+00> : vector<8x8xf32>
    %329 = tpu.matmul %327, %328, %cst_86 {dimension_numbers = #tpu.dot_dimension_numbers<[1], [1], [0], [0], [0, 0, 1, 0], [], []>} : vector<8x8xbf16>, vector<8x8xbf16>, vector<8x8xf32> -> vector<8x8xf32>
    "tpu.trace_stop"() : () -> ()
    %330 = vector.shape_cast %260 : vector<8x8xf32> to vector<1x8x8xf32>
    %331 = vector.shape_cast %283 : vector<8x8xf32> to vector<1x8x8xf32>
    %332 = vector.shape_cast %306 : vector<8x8xf32> to vector<1x8x8xf32>
    %333 = vector.shape_cast %329 : vector<8x8xf32> to vector<1x8x8xf32>
    %334 = tpu.concatenate %330, %331, %332, %333 in 0 : vector<1x8x8xf32>, vector<1x8x8xf32>, vector<1x8x8xf32>, vector<1x8x8xf32> -> vector<4x8x8xf32>
    %335 = vector.shape_cast %334 : vector<4x8x8xf32> to vector<32x8xf32>
    %336 = tpu.transpose %335, [1, 0] : vector<32x8xf32> -> vector<8x32xf32>
    %c1_87 = arith.constant 1 : index
    %c0_88 = arith.constant 0 : index
    %c0_89 = arith.constant 0 : index
    %337 = vector.load %arg6[%c1_87, %c0_88, %c0_89] : memref<2x8x32xf32, #tpu.memory_space<vmem>>, vector<1x8x32xf32>
    %338 = vector.shape_cast %337 : vector<1x8x32xf32> to vector<8x32xf32>
    %339 = arith.truncf %336 : vector<8x32xf32> to vector<8x32xbf16>
    %c1_90 = arith.constant 1 : index
    %c0_91 = arith.constant 0 : index
    %c0_92 = arith.constant 0 : index
    %340 = vector.load %arg5[%c1_90, %c0_91, %c0_92] : memref<2x32x32xbf16, #tpu.memory_space<vmem>>, vector<1x32x32xbf16>
    %341 = vector.shape_cast %340 : vector<1x32x32xbf16> to vector<32x32xbf16>
    %cst_93 = arith.constant dense<0.000000e+00> : vector<8x32xf32>
    %342 = tpu.matmul %339, %341, %cst_93 {dimension_numbers = #tpu.dot_dimension_numbers<[1], [0], [0], [1], [0, 0, 1, 1], [], []>} : vector<8x32xbf16>, vector<32x32xbf16>, vector<8x32xf32> -> vector<8x32xf32>
    %343 = vector.extract_strided_slice %338 {offsets = [0, 0], sizes = [1, 32], strides = [1, 1]} : vector<8x32xf32> to vector<1x32xf32>
    %344 = vector.broadcast %343 : vector<1x32xf32> to vector<8x32xf32>
    %345 = arith.addf %342, %344 : vector<8x32xf32>
    %346 = arith.addf %224, %345 : vector<8x32xf32>
    %347 = vector.extract_strided_slice %338 {offsets = [1, 0], sizes = [1, 32], strides = [1, 1]} : vector<8x32xf32> to vector<1x32xf32>
    %348 = vector.extract_strided_slice %338 {offsets = [2, 0], sizes = [1, 32], strides = [1, 1]} : vector<8x32xf32> to vector<1x32xf32>
    %cst_94 = arith.constant dense<0.000000e+00> : vector<8xf32>
    %349 = vector.multi_reduction <add>, %346, %cst_94 [1] : vector<8x32xf32> to vector<8xf32>
    %350 = vector.shape_cast %349 : vector<8xf32> to vector<8x1xf32>
    %cst_95 = arith.constant 3.200000e+01 : f32
    %351 = vector.broadcast %cst_95 : f32 to vector<8x1xf32>
    %352 = arith.divf %350, %351 : vector<8x1xf32>
    %353 = vector.broadcast %352 : vector<8x1xf32> to vector<8x32xf32>
    %354 = arith.subf %346, %353 : vector<8x32xf32>
    %355 = arith.mulf %354, %354 : vector<8x32xf32>
    %cst_96 = arith.constant dense<0.000000e+00> : vector<8xf32>
    %356 = vector.multi_reduction <add>, %355, %cst_96 [1] : vector<8x32xf32> to vector<8xf32>
    %357 = vector.shape_cast %356 : vector<8xf32> to vector<8x1xf32>
    %cst_97 = arith.constant 3.200000e+01 : f32
    %358 = vector.broadcast %cst_97 : f32 to vector<8x1xf32>
    %359 = arith.divf %357, %358 : vector<8x1xf32>
    %360 = vector.broadcast %352 : vector<8x1xf32> to vector<8x32xf32>
    %361 = arith.subf %346, %360 : vector<8x32xf32>
    %cst_98 = arith.constant 9.99999996E-13 : f32
    %362 = vector.broadcast %cst_98 : f32 to vector<8x1xf32>
    %363 = arith.addf %359, %362 : vector<8x1xf32>
    %364 = math.rsqrt %363 : vector<8x1xf32>
    %365 = vector.broadcast %364 : vector<8x1xf32> to vector<8x32xf32>
    %366 = arith.mulf %361, %365 : vector<8x32xf32>
    %367 = vector.broadcast %347 : vector<1x32xf32> to vector<8x32xf32>
    %368 = arith.mulf %366, %367 : vector<8x32xf32>
    %369 = vector.broadcast %348 : vector<1x32xf32> to vector<8x32xf32>
    %370 = arith.addf %368, %369 : vector<8x32xf32>
    %371 = arith.truncf %370 : vector<8x32xf32> to vector<8x32xbf16>
    %c1_99 = arith.constant 1 : index
    %c0_100 = arith.constant 0 : index
    %c0_101 = arith.constant 0 : index
    %372 = vector.load %arg7[%c1_99, %c0_100, %c0_101] : memref<2x32x64xbf16, #tpu.memory_space<vmem>>, vector<1x32x64xbf16>
    %373 = vector.shape_cast %372 : vector<1x32x64xbf16> to vector<32x64xbf16>
    %cst_102 = arith.constant dense<0.000000e+00> : vector<8x64xf32>
    %374 = tpu.matmul %371, %373, %cst_102 {dimension_numbers = #tpu.dot_dimension_numbers<[1], [0], [0], [1], [0, 0, 1, 1], [], []>} : vector<8x32xbf16>, vector<32x64xbf16>, vector<8x64xf32> -> vector<8x64xf32>
    %c1_103 = arith.constant 1 : index
    %c0_104 = arith.constant 0 : index
    %c0_105 = arith.constant 0 : index
    %375 = vector.load %arg8[%c1_103, %c0_104, %c0_105] : memref<2x1x64xf32, #tpu.memory_space<vmem>>, vector<1x1x64xf32>
    %376 = vector.shape_cast %375 : vector<1x1x64xf32> to vector<1x64xf32>
    %377 = vector.broadcast %376 : vector<1x64xf32> to vector<8x64xf32>
    %378 = arith.addf %374, %377 : vector<8x64xf32>
    %cst_106 = arith.constant 5.000000e-01 : f32
    %379 = vector.broadcast %cst_106 : f32 to vector<8x64xf32>
    %380 = arith.mulf %379, %378 : vector<8x64xf32>
    %cst_107 = arith.constant 4.471500e-02 : f32
    %381 = vector.broadcast %cst_107 : f32 to vector<8x64xf32>
    %382 = arith.mulf %381, %378 : vector<8x64xf32>
    %383 = arith.mulf %382, %378 : vector<8x64xf32>
    %384 = arith.mulf %383, %378 : vector<8x64xf32>
    %385 = arith.addf %378, %384 : vector<8x64xf32>
    %cst_108 = arith.constant 0.797884583 : f32
    %386 = vector.broadcast %cst_108 : f32 to vector<8x64xf32>
    %387 = arith.mulf %386, %385 : vector<8x64xf32>
    %388 = math.tanh %387 : vector<8x64xf32>
    %cst_109 = arith.constant 1.000000e+00 : f32
    %389 = vector.broadcast %cst_109 : f32 to vector<8x64xf32>
    %390 = arith.addf %389, %388 : vector<8x64xf32>
    %391 = arith.mulf %380, %390 : vector<8x64xf32>
    %392 = arith.truncf %391 : vector<8x64xf32> to vector<8x64xbf16>
    %c1_110 = arith.constant 1 : index
    %c0_111 = arith.constant 0 : index
    %c0_112 = arith.constant 0 : index
    %393 = vector.load %arg9[%c1_110, %c0_111, %c0_112] : memref<2x64x32xbf16, #tpu.memory_space<vmem>>, vector<1x64x32xbf16>
    %394 = vector.shape_cast %393 : vector<1x64x32xbf16> to vector<64x32xbf16>
    %cst_113 = arith.constant dense<0.000000e+00> : vector<8x32xf32>
    %395 = tpu.matmul %392, %394, %cst_113 {dimension_numbers = #tpu.dot_dimension_numbers<[1], [0], [0], [1], [0, 0, 1, 1], [], []>} : vector<8x64xbf16>, vector<64x32xbf16>, vector<8x32xf32> -> vector<8x32xf32>
    %396 = vector.extract_strided_slice %338 {offsets = [3, 0], sizes = [1, 32], strides = [1, 1]} : vector<8x32xf32> to vector<1x32xf32>
    %397 = vector.broadcast %396 : vector<1x32xf32> to vector<8x32xf32>
    %398 = arith.addf %395, %397 : vector<8x32xf32>
    %399 = arith.addf %370, %398 : vector<8x32xf32>
    %400 = vector.extract_strided_slice %338 {offsets = [4, 0], sizes = [1, 32], strides = [1, 1]} : vector<8x32xf32> to vector<1x32xf32>
    %401 = vector.extract_strided_slice %338 {offsets = [5, 0], sizes = [1, 32], strides = [1, 1]} : vector<8x32xf32> to vector<1x32xf32>
    %cst_114 = arith.constant dense<0.000000e+00> : vector<8xf32>
    %402 = vector.multi_reduction <add>, %399, %cst_114 [1] : vector<8x32xf32> to vector<8xf32>
    %403 = vector.shape_cast %402 : vector<8xf32> to vector<8x1xf32>
    %cst_115 = arith.constant 3.200000e+01 : f32
    %404 = vector.broadcast %cst_115 : f32 to vector<8x1xf32>
    %405 = arith.divf %403, %404 : vector<8x1xf32>
    %406 = vector.broadcast %405 : vector<8x1xf32> to vector<8x32xf32>
    %407 = arith.subf %399, %406 : vector<8x32xf32>
    %408 = arith.mulf %407, %407 : vector<8x32xf32>
    %cst_116 = arith.constant dense<0.000000e+00> : vector<8xf32>
    %409 = vector.multi_reduction <add>, %408, %cst_116 [1] : vector<8x32xf32> to vector<8xf32>
    %410 = vector.shape_cast %409 : vector<8xf32> to vector<8x1xf32>
    %cst_117 = arith.constant 3.200000e+01 : f32
    %411 = vector.broadcast %cst_117 : f32 to vector<8x1xf32>
    %412 = arith.divf %410, %411 : vector<8x1xf32>
    %413 = vector.broadcast %405 : vector<8x1xf32> to vector<8x32xf32>
    %414 = arith.subf %399, %413 : vector<8x32xf32>
    %cst_118 = arith.constant 9.99999996E-13 : f32
    %415 = vector.broadcast %cst_118 : f32 to vector<8x1xf32>
    %416 = arith.addf %412, %415 : vector<8x1xf32>
    %417 = math.rsqrt %416 : vector<8x1xf32>
    %418 = vector.broadcast %417 : vector<8x1xf32> to vector<8x32xf32>
    %419 = arith.mulf %414, %418 : vector<8x32xf32>
    %420 = vector.broadcast %400 : vector<1x32xf32> to vector<8x32xf32>
    %421 = arith.mulf %419, %420 : vector<8x32xf32>
    %422 = vector.broadcast %401 : vector<1x32xf32> to vector<8x32xf32>
    %423 = arith.addf %421, %422 : vector<8x32xf32>
    %cst_119 = arith.constant dense<0.000000e+00> : vector<32xf32>
    %424 = vector.multi_reduction <add>, %423, %cst_119 [0] : vector<8x32xf32> to vector<32xf32>
    %425 = vector.shape_cast %424 : vector<32xf32> to vector<1x32xf32>
    %cst_120 = arith.constant 8.000000e+00 : f32
    %426 = vector.broadcast %cst_120 : f32 to vector<1x32xf32>
    %427 = arith.divf %425, %426 : vector<1x32xf32>
    %428 = vector.shape_cast %427 : vector<1x32xf32> to vector<1x1x32xf32>
    %c0_121 = arith.constant 0 : index
    %c0_122 = arith.constant 0 : index
    %c0_123 = arith.constant 0 : index
    %429 = vector.load %arg10[%c0_121, %c0_122, %c0_123] : memref<1x1x32xf32, #tpu.memory_space<vmem>>, vector<1x1x32xf32>
    tpu.vector_store %arg10[%c0_121, %c0_122, %c0_123], %428 {strides = array<i32>} : memref<1x1x32xf32, #tpu.memory_space<vmem>>, vector<1x1x32xf32>,
    return
  }
  func.func @transform_0(%arg0: i32) -> (i32, i32, i32) {
    %c0_i32 = arith.constant 0 : i32
    %c0_i32_0 = arith.constant 0 : i32
    %c0_i32_1 = arith.constant 0 : i32
    return %arg0, %c0_i32, %c0_i32_0 : i32, i32, i32
  }
  func.func @transform_1(%arg0: i32) -> (i32, i32) {
    %c0_i32 = arith.constant 0 : i32
    %c0_i32_0 = arith.constant 0 : i32
    %c0_i32_1 = arith.constant 0 : i32
    return %c0_i32, %c0_i32_0 : i32, i32
  }
  func.func @transform_2(%arg0: i32) -> (i32, i32, i32) {
    %c0_i32 = arith.constant 0 : i32
    %c0_i32_0 = arith.constant 0 : i32
    %c0_i32_1 = arith.constant 0 : i32
    %c0_i32_2 = arith.constant 0 : i32
    return %c0_i32, %c0_i32_0, %c0_i32_1 : i32, i32, i32
  }
  func.func @transform_3(%arg0: i32) -> (i32, i32, i32) {
    %c0_i32 = arith.constant 0 : i32
    %c0_i32_0 = arith.constant 0 : i32
    %c0_i32_1 = arith.constant 0 : i32
    %c0_i32_2 = arith.constant 0 : i32
    return %c0_i32, %c0_i32_0, %c0_i32_1 : i32, i32, i32
  }
  func.func @transform_4(%arg0: i32) -> (i32, i32, i32) {
    %c0_i32 = arith.constant 0 : i32
    %c0_i32_0 = arith.constant 0 : i32
    %c0_i32_1 = arith.constant 0 : i32
    %c0_i32_2 = arith.constant 0 : i32
    return %c0_i32, %c0_i32_0, %c0_i32_1 : i32, i32, i32
  }
  func.func @transform_5(%arg0: i32) -> (i32, i32, i32) {
    %c0_i32 = arith.constant 0 : i32
    %c0_i32_0 = arith.constant 0 : i32
    %c0_i32_1 = arith.constant 0 : i32
    %c0_i32_2 = arith.constant 0 : i32
    return %c0_i32, %c0_i32_0, %c0_i32_1 : i32, i32, i32
  }
  func.func @transform_6(%arg0: i32) -> (i32, i32, i32) {
    %c0_i32 = arith.constant 0 : i32
    %c0_i32_0 = arith.constant 0 : i32
    %c0_i32_1 = arith.constant 0 : i32
    %c0_i32_2 = arith.constant 0 : i32
    return %c0_i32, %c0_i32_0, %c0_i32_1 : i32, i32, i32
  }
  func.func @transform_7(%arg0: i32) -> (i32, i32, i32) {
    %c0_i32 = arith.constant 0 : i32
    %c0_i32_0 = arith.constant 0 : i32
    %c0_i32_1 = arith.constant 0 : i32
    %c0_i32_2 = arith.constant 0 : i32
    return %c0_i32, %c0_i32_0, %c0_i32_1 : i32, i32, i32
  }
  func.func @transform_8(%arg0: i32) -> (i32, i32, i32) {
    %c0_i32 = arith.constant 0 : i32
    %c0_i32_0 = arith.constant 0 : i32
    %c0_i32_1 = arith.constant 0 : i32
    %c0_i32_2 = arith.constant 0 : i32
    return %c0_i32, %c0_i32_0, %c0_i32_1 : i32, i32, i32
  }
  func.func @transform_9(%arg0: i32) -> (i32, i32, i32) {
    %c0_i32 = arith.constant 0 : i32
    %c0_i32_0 = arith.constant 0 : i32
    %c0_i32_1 = arith.constant 0 : i32
    return %arg0, %c0_i32, %c0_i32_0 : i32, i32, i32
  }
}

</mosaic_0001>

<llo_original>
// kernel: bert_encoder_forward.1
$region0: #{bert_encoder_forward.1}
  #allocation0 [shape = 'u32[]', space=smem, size = 0x4, offset = 0x4, fixed_abs, tag = 'smem constant byte address 0x4 - core index']
  #allocation1 [shape = 'u32[144,128]{1,0:T(1,128)}', space=vmem, size = 0x12000, scoped, tag = 'internal scratch']
  %s0 = inlined_call_operand.vmem [shape: f32[2,8,32], index: 0, kind: input, shape index: {}]
  %s1 = inlined_call_operand.vmem [shape: f32[2,32], index: 1, kind: input, shape index: {}]
  %s2 = inlined_call_operand.vmem [shape: bf16[2,32,96], index: 2, kind: input, shape index: {}]
  %s3 = inlined_call_operand.vmem [shape: f32[2,1,96], index: 3, kind: input, shape index: {}]
  %s4 = inlined_call_operand.vmem [shape: bf16[2,32,32], index: 4, kind: input, shape index: {}]
  %s5 = inlined_call_operand.vmem [shape: f32[2,8,32], index: 5, kind: input, shape index: {}]
  %s6 = inlined_call_operand.vmem [shape: bf16[2,32,64], index: 6, kind: input, shape index: {}]
  %s7 = inlined_call_operand.vmem [shape: f32[2,1,64], index: 7, kind: input, shape index: {}]
  %s8 = inlined_call_operand.vmem [shape: bf16[2,64,32], index: 8, kind: input, shape index: {}]
  %s9 = inlined_call_operand.hbm [shape: f32[2,1,32], index: 9, kind: output, shape index: {}]
  %s10 = sld [smem:[#allocation0]]
  $region69: #{bert_encoder_forward.1} parent=0
    _
  %s12 = ssub.s32 1, %s10
  %s13 = scalar_select 0, %s12, %s10
  $region1: #{bert_encoder_forward.1} parent=0
    #allocation2 [shape = 'u8[1024]{0}', space=vmem, size = 0x400, scoped, tag = 'output window, operand 0']
    #allocation3 [shape = 's32[2]{0}', space=sflag, size = 0x8, scoped, tag = 'scoped memory for bert_encoder_forward.1']
    %14 = vsyncpa [#allocation3], 0
    %s15 = scalar_lea.sflag [#allocation3], 1
    %16 = vsyncpa %s15, 0
    loop: start=0, step=1, limit=4
    $region2: #{bert_encoder_forward.1} parent=1 // loop_pre_header
      _
    $region3: #{bert_encoder_forward.1} parent=1 // loop_header
      %s18 = sphi 0, %s22
      %p19 = scmp.ge.s32.totalorder %s18, 4
      %s28 = sphi 0, %s30
      %s31 = sphi 0, %s28
      %s32 = sphi 0, %s31
      %s48 = sphi 0, %s32
      %s52 = sphi 0, %s52
      %s54 = sphi 0, %s52
      %s55 = sphi 0, %s54
      %s69 = sphi 0, %s55
      %s73 = sphi 0, %s73
      %s75 = sphi 0, %s73
      %s76 = sphi 0, %s75
      %s90 = sphi 0, %s76
      %s94 = sphi 0, %s94
      %s96 = sphi 0, %s94
      %s97 = sphi 0, %s96
      %s111 = sphi 0, %s97
      %s115 = sphi 0, %s115
      %s117 = sphi 0, %s115
      %s118 = sphi 0, %s117
      %s132 = sphi 0, %s118
      %s136 = sphi 0, %s136
      %s138 = sphi 0, %s136
      %s139 = sphi 0, %s138
      %s153 = sphi 0, %s139
      %s157 = sphi 0, %s157
      %s159 = sphi 0, %s157
      %s160 = sphi 0, %s159
      %s174 = sphi 0, %s160
      %s178 = sphi 0, %s178
      %s180 = sphi 0, %s178
      %s181 = sphi 0, %s180
      %s195 = sphi 0, %s181
      %s199 = sphi 0, %s199
      %s201 = sphi 0, %s199
      %s202 = sphi 0, %s201
      %s216 = sphi 0, %s202
      %s222 = sphi 0, %s224
      %s225 = sphi 0, %s222
      %s226 = sphi 0, %s225
      %s242 = sphi 0, %s226
    $region4: #{bert_encoder_forward.1} parent=1 // loop_header_branch
      %21 = sbr.rel (%p19) target = $region8
    $region5: #{bert_encoder_forward.1} parent=1 // loop_body
      %s23 = ssub.s32 %s18, 1
      %s24 = ssub.s32 %s18, 2
      %s25 = sadd.s32 %s18, 1
      %s26 = ssub.s32 %s18, %s25
      %p27 = scmp.eq.s32.totalorder %s26, 0
      %s29 = sadd.s32 %s28, 1
      %s30 = scalar_select %p27, %s28, %s29
      %p33 = pneg %p27
      %p34 = scmp.eq.s32.totalorder %s18, 1
      %p35 = por %p33, %p34
      %p36 = scmp.ne.s32.totalorder %s28, %s31
      %p37 = scmp.eq.s32.totalorder %s18, 0
      %p38 = por %p36, %p37
      %p39 = scmp.ne.s32.totalorder %s28, %s31
      %p40 = scmp.eq.s32.totalorder %s23, 1
      %p41 = por %p39, %p40
      %p42 = scmp.ne.s32.totalorder %s31, %s32
      %p43 = scmp.eq.s32.totalorder %s23, 0
      %p44 = por %p42, %p43
      %p45 = scmp.ne.s32.totalorder %s31, %s32
      %p46 = scmp.eq.s32.totalorder %s24, 1
      %p47 = por %p45, %p46
      %p49 = scmp.ne.s32.totalorder %s32, %s48
      %p50 = scmp.eq.s32.totalorder %s24, 0
      %p51 = por %p49, %p50
      %s53 = sadd.s32 %s52, 1
      %p56 = scmp.eq.s32.totalorder %s18, 1
      %p57 = scmp.ne.s32.totalorder %s52, %s54
      %p58 = scmp.eq.s32.totalorder %s18, 0
      %p59 = por %p57, %p58
      %p60 = scmp.ne.s32.totalorder %s52, %s54
      %p61 = scmp.eq.s32.totalorder %s23, 1
      %p62 = por %p60, %p61
      %p63 = scmp.ne.s32.totalorder %s54, %s55
      %p64 = scmp.eq.s32.totalorder %s23, 0
      %p65 = por %p63, %p64
      %p66 = scmp.ne.s32.totalorder %s54, %s55
      %p67 = scmp.eq.s32.totalorder %s24, 1
      %p68 = por %p66, %p67
      %p70 = scmp.ne.s32.totalorder %s55, %s69
      %p71 = scmp.eq.s32.totalorder %s24, 0
      %p72 = por %p70, %p71
      %s74 = sadd.s32 %s73, 1
      %p77 = scmp.eq.s32.totalorder %s18, 1
      %p78 = scmp.ne.s32.totalorder %s73, %s75
      %p79 = scmp.eq.s32.totalorder %s18, 0
      %p80 = por %p78, %p79
      %p81 = scmp.ne.s32.totalorder %s73, %s75
      %p82 = scmp.eq.s32.totalorder %s23, 1
      %p83 = por %p81, %p82
      %p84 = scmp.ne.s32.totalorder %s75, %s76
      %p85 = scmp.eq.s32.totalorder %s23, 0
      %p86 = por %p84, %p85
      %p87 = scmp.ne.s32.totalorder %s75, %s76
      %p88 = scmp.eq.s32.totalorder %s24, 1
      %p89 = por %p87, %p88
      %p91 = scmp.ne.s32.totalorder %s76, %s90
      %p92 = scmp.eq.s32.totalorder %s24, 0
      %p93 = por %p91, %p92
      %s95 = sadd.s32 %s94, 1
      %p98 = scmp.eq.s32.totalorder %s18, 1
      %p99 = scmp.ne.s32.totalorder %s94, %s96
      %p100 = scmp.eq.s32.totalorder %s18, 0
      %p101 = por %p99, %p100
      %p102 = scmp.ne.s32.totalorder %s94, %s96
      %p103 = scmp.eq.s32.totalorder %s23, 1
      %p104 = por %p102, %p103
      %p105 = scmp.ne.s32.totalorder %s96, %s97
      %p106 = scmp.eq.s32.totalorder %s23, 0
      %p107 = por %p105, %p106
      %p108 = scmp.ne.s32.totalorder %s96, %s97
      %p109 = scmp.eq.s32.totalorder %s24, 1
      %p110 = por %p108, %p109
      %p112 = scmp.ne.s32.totalorder %s97, %s111
      %p113 = scmp.eq.s32.totalorder %s24, 0
      %p114 = por %p112, %p113
      %s116 = sadd.s32 %s115, 1
      %p119 = scmp.eq.s32.totalorder %s18, 1
      %p120 = scmp.ne.s32.totalorder %s115, %s117
      %p121 = scmp.eq.s32.totalorder %s18, 0
      %p122 = por %p120, %p121
      %p123 = scmp.ne.s32.totalorder %s115, %s117
      %p124 = scmp.eq.s32.totalorder %s23, 1
      %p125 = por %p123, %p124
      %p126 = scmp.ne.s32.totalorder %s117, %s118
      %p127 = scmp.eq.s32.totalorder %s23, 0
      %p128 = por %p126, %p127
      %p129 = scmp.ne.s32.totalorder %s117, %s118
      %p130 = scmp.eq.s32.totalorder %s24, 1
      %p131 = por %p129, %p130
      %p133 = scmp.ne.s32.totalorder %s118, %s132
      %p134 = scmp.eq.s32.totalorder %s24, 0
      %p135 = por %p133, %p134
      %s137 = sadd.s32 %s136, 1
      %p140 = scmp.eq.s32.totalorder %s18, 1
      %p141 = scmp.ne.s32.totalorder %s136, %s138
      %p142 = scmp.eq.s32.totalorder %s18, 0
      %p143 = por %p141, %p142
      %p144 = scmp.ne.s32.totalorder %s136, %s138
      %p145 = scmp.eq.s32.totalorder %s23, 1
      %p146 = por %p144, %p145
      %p147 = scmp.ne.s32.totalorder %s138, %s139
      %p148 = scmp.eq.s32.totalorder %s23, 0
      %p149 = por %p147, %p148
      %p150 = scmp.ne.s32.totalorder %s138, %s139
      %p151 = scmp.eq.s32.totalorder %s24, 1
      %p152 = por %p150, %p151
      %p154 = scmp.ne.s32.totalorder %s139, %s153
      %p155 = scmp.eq.s32.totalorder %s24, 0
      %p156 = por %p154, %p155
      %s158 = sadd.s32 %s157, 1
      %p161 = scmp.eq.s32.totalorder %s18, 1
      %p162 = scmp.ne.s32.totalorder %s157, %s159
      %p163 = scmp.eq.s32.totalorder %s18, 0
      %p164 = por %p162, %p163
      %p165 = scmp.ne.s32.totalorder %s157, %s159
      %p166 = scmp.eq.s32.totalorder %s23, 1
      %p167 = por %p165, %p166
      %p168 = scmp.ne.s32.totalorder %s159, %s160
      %p169 = scmp.eq.s32.totalorder %s23, 0
      %p170 = por %p168, %p169
      %p171 = scmp.ne.s32.totalorder %s159, %s160
      %p172 = scmp.eq.s32.totalorder %s24, 1
      %p173 = por %p171, %p172
      %p175 = scmp.ne.s32.totalorder %s160, %s174
      %p176 = scmp.eq.s32.totalorder %s24, 0
      %p177 = por %p175, %p176
      %s179 = sadd.s32 %s178, 1
      %p182 = scmp.eq.s32.totalorder %s18, 1
      %p183 = scmp.ne.s32.totalorder %s178, %s180
      %p184 = scmp.eq.s32.totalorder %s18, 0
      %p185 = por %p183, %p184
      %p186 = scmp.ne.s32.totalorder %s178, %s180
      %p187 = scmp.eq.s32.totalorder %s23, 1
      %p188 = por %p186, %p187
      %p189 = scmp.ne.s32.totalorder %s180, %s181
      %p190 = scmp.eq.s32.totalorder %s23, 0
      %p191 = por %p189, %p190
      %p192 = scmp.ne.s32.totalorder %s180, %s181
      %p193 = scmp.eq.s32.totalorder %s24, 1
      %p194 = por %p192, %p193
      %p196 = scmp.ne.s32.totalorder %s181, %s195
      %p197 = scmp.eq.s32.totalorder %s24, 0
      %p198 = por %p196, %p197
      %s200 = sadd.s32 %s199, 1
      %p203 = scmp.eq.s32.totalorder %s18, 1
      %p204 = scmp.ne.s32.totalorder %s199, %s201
      %p205 = scmp.eq.s32.totalorder %s18, 0
      %p206 = por %p204, %p205
      %p207 = scmp.ne.s32.totalorder %s199, %s201
      %p208 = scmp.eq.s32.totalorder %s23, 1
      %p209 = por %p207, %p208
      %p210 = scmp.ne.s32.totalorder %s201, %s202
      %p211 = scmp.eq.s32.totalorder %s23, 0
      %p212 = por %p210, %p211
      %p213 = scmp.ne.s32.totalorder %s201, %s202
      %p214 = scmp.eq.s32.totalorder %s24, 1
      %p215 = por %p213, %p214
      %p217 = scmp.ne.s32.totalorder %s202, %s216
      %p218 = scmp.eq.s32.totalorder %s24, 0
      %p219 = por %p217, %p218
      %s220 = ssub.s32 %s18, %s25
      %p221 = scmp.eq.s32.totalorder %s220, 0
      %s223 = sadd.s32 %s222, 1
      %s224 = scalar_select %p221, %s222, %s223
      %p227 = pneg %p221
      %p228 = scmp.eq.s32.totalorder %s18, 1
      %p229 = por %p227, %p228
      %p230 = scmp.ne.s32.totalorder %s222, %s225
      %p231 = scmp.eq.s32.totalorder %s18, 0
      %p232 = por %p230, %p231
      %p233 = scmp.ne.s32.totalorder %s222, %s225
      %p234 = scmp.eq.s32.totalorder %s23, 1
      %p235 = por %p233, %p234
      %p236 = scmp.ne.s32.totalorder %s225, %s226
      %p237 = scmp.eq.s32.totalorder %s23, 0
      %p238 = por %p236, %p237
      %p239 = scmp.ne.s32.totalorder %s225, %s226
      %p240 = scmp.eq.s32.totalorder %s24, 1
      %p241 = por %p239, %p240
      %p243 = scmp.ne.s32.totalorder %s226, %s242
      %p244 = scmp.eq.s32.totalorder %s24, 0
      %p245 = por %p243, %p244
      %p246 = scmp.le.s32.totalorder 1, %s18
      %p247 = scmp.lt.s32.totalorder %s18, 3
      %p248 = pnand %p246, %p247
      %p249 = pneg %p248
      // Predicated region
      $region9: #{bert_encoder_forward.1} parent=5 // pred_check
        _
      $region10: #{bert_encoder_forward.1} parent=5 // pred_check_branch
        %251 = sbr.rel (%p248) target = $region12
      $region11: #{bert_encoder_forward.1} parent=5 // pred_region
        %s252 = ssub.s32 %s18, 1
        // Predicated region
        $region13: #{bert_encoder_forward.1} parent=11 // pred_check
          %p253 = pneg %p65
        $region14: #{bert_encoder_forward.1} parent=11 // pred_check_branch
          %255 = sbr.rel (%p253) target = $region16
        $region15: #{bert_encoder_forward.1} parent=11 // pred_region
          _
        $region16: #{bert_encoder_forward.1} parent=11 // pred_fallthru
          _
        // Predicated region
        $region17: #{bert_encoder_forward.1} parent=11 // pred_check
          %p256 = pneg %p86
        $region18: #{bert_encoder_forward.1} parent=11 // pred_check_branch
          %258 = sbr.rel (%p256) target = $region20
        $region19: #{bert_encoder_forward.1} parent=11 // pred_region
          _
        $region20: #{bert_encoder_forward.1} parent=11 // pred_fallthru
          _
        // Predicated region
        $region21: #{bert_encoder_forward.1} parent=11 // pred_check
          %p259 = pneg %p107
        $region22: #{bert_encoder_forward.1} parent=11 // pred_check_branch
          %261 = sbr.rel (%p259) target = $region24
        $region23: #{bert_encoder_forward.1} parent=11 // pred_region
          _
        $region24: #{bert_encoder_forward.1} parent=11 // pred_fallthru
          _
        // Predicated region
        $region25: #{bert_encoder_forward.1} parent=11 // pred_check
          %p262 = pneg %p128
        $region26: #{bert_encoder_forward.1} parent=11 // pred_check_branch
          %264 = sbr.rel (%p262) target = $region28
        $region27: #{bert_encoder_forward.1} parent=11 // pred_region
          _
        $region28: #{bert_encoder_forward.1} parent=11 // pred_fallthru
          _
        // Predicated region
        $region29: #{bert_encoder_forward.1} parent=11 // pred_check
          %p265 = pneg %p149
        $region30: #{bert_encoder_forward.1} parent=11 // pred_check_branch
          %267 = sbr.rel (%p265) target = $region32
        $region31: #{bert_encoder_forward.1} parent=11 // pred_region
          _
        $region32: #{bert_encoder_forward.1} parent=11 // pred_fallthru
          _
        // Predicated region
        $region33: #{bert_encoder_forward.1} parent=11 // pred_check
          %p268 = pneg %p170
        $region34: #{bert_encoder_forward.1} parent=11 // pred_check_branch
          %270 = sbr.rel (%p268) target = $region36
        $region35: #{bert_encoder_forward.1} parent=11 // pred_region
          _
        $region36: #{bert_encoder_forward.1} parent=11 // pred_fallthru
          _
        // Predicated region
        $region37: #{bert_encoder_forward.1} parent=11 // pred_check
          %p271 = pneg %p191
        $region38: #{bert_encoder_forward.1} parent=11 // pred_check_branch
          %273 = sbr.rel (%p271) target = $region40
        $region39: #{bert_encoder_forward.1} parent=11 // pred_region
          _
        $region40: #{bert_encoder_forward.1} parent=11 // pred_fallthru
          _
        // Predicated region
        $region41: #{bert_encoder_forward.1} parent=11 // pred_check
          %p274 = pneg %p212
        $region42: #{bert_encoder_forward.1} parent=11 // pred_check_branch
          %276 = sbr.rel (%p274) target = $region44
        $region43: #{bert_encoder_forward.1} parent=11 // pred_region
          _
        $region44: #{bert_encoder_forward.1} parent=11 // pred_fallthru
          _
      $region12: #{bert_encoder_forward.1} parent=5 // pred_fallthru
        _
      %p277 = scmp.lt.s32.totalorder %s18, 2
      // Predicated region
      $region45: #{bert_encoder_forward.1} parent=5 // pred_check
        %p278 = pneg %p277
      $region46: #{bert_encoder_forward.1} parent=5 // pred_check_branch
        %280 = sbr.rel (%p278) target = $region48
      $region47: #{bert_encoder_forward.1} parent=5 // pred_region
        // Predicated region
        $region49: #{bert_encoder_forward.1} parent=47 // pred_check
          %p281 = pneg %p38
        $region50: #{bert_encoder_forward.1} parent=47 // pred_check_branch
          %283 = sbr.rel (%p281) target = $region52
        $region51: #{bert_encoder_forward.1} parent=47 // pred_region
          %p284 = scmp.lt.s32.totalorder %s18, 1
          %s285 = scalar_select %p284, %s18, 1
          %s286 = smul.addr %s285, 8
          %s287 = scalar_lea.vmem %s0, %s286
        $region52: #{bert_encoder_forward.1} parent=47 // pred_fallthru
          _
      $region48: #{bert_encoder_forward.1} parent=5 // pred_fallthru
        _
      %p288 = scmp.le.s32.totalorder 1, %s18
      %p289 = scmp.lt.s32.totalorder %s18, 3
      %p290 = pnand %p288, %p289
      %p291 = pneg %p290
      // Predicated region
      $region53: #{bert_encoder_forward.1} parent=5 // pred_check
        _
      $region54: #{bert_encoder_forward.1} parent=5 // pred_check_branch
        %293 = sbr.rel (%p290) target = $region56
      $region55: #{bert_encoder_forward.1} parent=5 // pred_region
        %s294 = ssub.s32 %s18, 1
        %p295 = scmp.lt.s32.totalorder %s23, 1
        %s296 = scalar_select %p295, %s23, 1
        %s297 = smul.addr %s296, 8
        %s298 = scalar_lea.vmem %s0, %s297
        %p299 = pneg %p44
        %p300 = pneg %p41
        %p301 = pneg %p65
        %p302 = pneg %p62
        %p303 = pneg %p86
        %p304 = pneg %p83
        %p305 = pneg %p107
        %p306 = pneg %p104
        %p307 = pneg %p128
        %p308 = pneg %p125
        %p309 = pneg %p149
        %p310 = pneg %p146
        %p311 = pneg %p170
        %p312 = pneg %p167
        %p313 = pneg %p191
        %p314 = pneg %p188
        %p315 = pneg %p212
        %p316 = pneg %p209
        %p317 = pneg %p238
        %p318 = pneg %p235
        %s319 = sand.u32 %s225, 1
        %s320 = scalar_lea.sflag [#allocation3], %s319
        %s321 = sand.u32 %s225, 1
        %s322 = scalar_lea.vmem [#allocation2], %s321
        %p323 = scmp.lt.s32.totalorder %s23, 1
        %s324 = scalar_select %p323, %s23, 1
        %s325 = smul.addr %s324, 8
        %s326 = scalar_lea.vmem %s0, %s325
        %v328 = vld [vmem:[%s326] sm:$0xff]
        %v329 = vld [vmem:[%s1] sm:$0x1]
        %v330 = vld [vmem:[%s1 + $0x1] sm:$0x1]
        %vm331 = vcmask 261120
        %v332 = vsel %vm331, %v328, 0.0
        %333 = vadd.xlane.f32.xlu0 %v332
        %v334 = vpop.xlane.xlu0 %333
        %v335 = vrcp.pop 32.0
        %v336 = vmul.f32 %v334, %v335
        %v337 = vsub.f32 %v328, %v336
        %v338 = vmul.f32 %v337, %v337
        %v339 = vsel %vm331, %v338, 0.0
        %340 = vadd.xlane.f32.xlu0 %v339
        %v341 = vpop.xlane.xlu0 %340
        %v342 = vmul.f32 %v341, %v335
        %v343 = vadd.f32 %v342, 1e-12
        %v344 = vrsqrt.pop %v343
        %v345 = vmul.f32 %v337, %v344
        %v346 = vlaneseq
        %v347 = vshrl.u32 %v346, 7
        %v348 = vsub.s32 0, %v347
        %v349 = vrot.slane %v329, %v348
        %v350 = vmul.f32 %v345, %v349
        %v351 = vlaneseq
        %v352 = vshrl.u32 %v351, 7
        %v353 = vsub.s32 0, %v352
        %v354 = vrot.slane %v330, %v353
        %v355 = vadd.f32 %v350, %v354
        %v356 = vpack.c.bf16 %v355, %v355
        %v357 = vld [vmem:[%s2] sm:$0xf]
        %v358 = vld [vmem:[%s2 + $0x4] sm:$0xf]
        %v359 = vld [vmem:[%s2 + $0x8] sm:$0xf]
        %v360 = vld [vmem:[%s2 + $0xc] sm:$0xf]
        %v361 = vld [vmem:[%s3] sm:$0x1]
        %v363 = vlaneseq
        %v364 = vshrl.u32 %v363, 7
        %v365 = vsub.s32 0, %v364
        %v366 = vrot.slane %v361, %v365
        %v372 = vunpack.c.l.b16 %v357
        %v373 = vunpack.c.l.b16 %v358
        %v374 = vunpack.c.l.b16 %v359
        %v375 = vunpack.c.l.b16 %v360
        %v376 = vpack.c.b16 %v373, %v372
        %v377 = vpack.c.b16 %v375, %v374
        %v381 = vsel %vm331, %v356, 0
        %383 = vmatprep.subr.bf16.mxu0 0
        %384 = vmatpush1.bf16.msra.mxu0 %v376
        %385 = vmatprep.subr.bf16.mxu0 0
        %386 = vmatpush1.bf16.msra.mxu0 %v377
        %387 = vmatprep.subr.bf16.mxu0 0
        %388 = vmatpush1.bf16.msra.mxu0 0
        %389 = vmatprep.subr.bf16.mxu0 0
        %390 = vmatpush1.bf16.msra.mxu0 0
        %391 = vmatprep.subr.bf16.mxu0 0
        %392 = vmatpush1.bf16.msra.mxu0 0
        %393 = vmatprep.subr.bf16.mxu0 0
        %394 = vmatpush1.bf16.msra.mxu0 0
        %395 = vmatprep.subr.bf16.mxu0 0
        %396 = vmatpush1.bf16.msra.mxu0 0
        %397 = vmatprep.subr.bf16.mxu0 0
        %398 = vmatpush1.bf16.msra.mxu0 0
        %399 = vmatprep.subr.bf16.mxu0 0
        %400 = vmatpush1.bf16.msra.mxu0 0
        %401 = vmatprep.subr.bf16.mxu0 0
        %402 = vmatpush1.bf16.msra.mxu0 0
        %403 = vmatprep.subr.bf16.mxu0 0
        %404 = vmatpush1.bf16.msra.mxu0 0
        %405 = vmatprep.subr.bf16.mxu0 0
        %406 = vmatpush1.bf16.msra.mxu0 0
        %407 = vmatprep.subr.bf16.mxu0 0
        %408 = vmatpush1.bf16.msra.mxu0 0
        %409 = vmatprep.subr.bf16.mxu0 0
        %410 = vmatpush1.bf16.msra.mxu0 0
        %411 = vmatprep.subr.bf16.mxu0 0
        %412 = vmatpush1.bf16.msra.mxu0 0
        %413 = vmatprep.subr.bf16.mxu0 0
        %414 = vmatpush1.bf16.msra.mxu0 0
        %415 = vmatprep.mubr.bf16.mxu0 0
        %416 = vmatmul.mubr.bf16.gmra.mrb[0].mxu0 %v381
        %v417 = vpop.f32.mrb[0].mxu0
        %v418 = vadd.f32 %v366, %v417
        %v419 = vpop.f32.mrb[0].mxu0
        %v420 = vpop.f32.mrb[0].mxu0
        %v421 = vpop.f32.mrb[0].mxu0
        %422 = vdwg.mxu0
        %423 = vxpose.xlu0.b32.start [1/16] %v418, 128
        %424 = vxpose.xlu0.b32.cont [2/16] 0.0, 128
        %425 = vxpose.xlu0.b32.cont [3/16] 0.0, 128
        %426 = vxpose.xlu0.b32.cont [4/16] 0.0, 128
        %427 = vxpose.xlu0.b32.cont [5/16] 0.0, 128
        %428 = vxpose.xlu0.b32.cont [6/16] 0.0, 128
        %429 = vxpose.xlu0.b32.cont [7/16] 0.0, 128
        %430 = vxpose.xlu0.b32.cont [8/16] 0.0, 128
        %431 = vxpose.xlu0.b32.cont [9/16] 0.0, 128
        %432 = vxpose.xlu0.b32.cont [10/16] 0.0, 128
        %433 = vxpose.xlu0.b32.cont [11/16] 0.0, 128
        %434 = vxpose.xlu0.b32.cont [12/16] 0.0, 128
        %435 = vxpose.xlu0.b32.cont [13/16] 0.0, 128
        %436 = vxpose.xlu0.b32.cont [14/16] 0.0, 128
        %437 = vxpose.xlu0.b32.cont [15/16] 0.0, 128
        %438 = vxpose.xlu0.b32.end [16/16] 0.0, 128
        %v439 = vpop.trf.xlu0
        %v440 = vpop.trf.xlu0
        %v441 = vpop.trf.xlu0
        %v442 = vpop.trf.xlu0
        %v443 = vpop.trf.xlu0
        %v444 = vpop.trf.xlu0
        %v445 = vpop.trf.xlu0
        %v446 = vpop.trf.xlu0
        %v447 = vpop.trf.xlu0
        %v448 = vpop.trf.xlu0
        %v449 = vpop.trf.xlu0
        %v450 = vpop.trf.xlu0
        %v451 = vpop.trf.xlu0
        %v452 = vpop.trf.xlu0
        %v453 = vpop.trf.xlu0
        %v454 = vpop.trf.xlu0
        %v455 = vpack.c.bf16 %v439, %v439
        %v456 = vpack.c.bf16 %v443, %v443
        %457 = vxpose.xlu0.c.b16.start [1/8] %v455, 128
        %458 = vxpose.xlu0.c.b16.cont [2/8] 0, 128
        %459 = vxpose.xlu0.c.b16.cont [3/8] 0, 128
        %460 = vxpose.xlu0.c.b16.cont [4/8] 0, 128
        %461 = vxpose.xlu0.c.b16.cont [5/8] 0, 128
        %462 = vxpose.xlu0.c.b16.cont [6/8] 0, 128
        %463 = vxpose.xlu0.c.b16.cont [7/8] 0, 128
        %464 = vxpose.xlu0.c.b16.end [8/8] 0, 128
        %v465 = vpop.trf.xlu0
        %v466 = vpop.trf.xlu0
        %v467 = vpop.trf.xlu0
        %v468 = vpop.trf.xlu0
        %v469 = vpop.trf.xlu0
        %v470 = vpop.trf.xlu0
        %v471 = vpop.trf.xlu0
        %v472 = vpop.trf.xlu0
        %vm473 = vcmask 64512
        %v475 = vsel %vm473, %v465, 0
        %vm477 = vcmask 1043456
        %v479 = vsel %vm477, %v456, 0
        %481 = vmatprep.subr.bf16.mxu0 0
        %482 = vmatpush1.bf16.msra.mxu0 %v479
        %483 = vmatprep.subr.bf16.mxu0 0
        %484 = vmatpush1.bf16.msra.mxu0 0
        %485 = vmatprep.subr.bf16.mxu0 0
        %486 = vmatpush1.bf16.msra.mxu0 0
        %487 = vmatprep.subr.bf16.mxu0 0
        %488 = vmatpush1.bf16.msra.mxu0 0
        %489 = vmatprep.subr.bf16.mxu0 0
        %490 = vmatpush1.bf16.msra.mxu0 0
        %491 = vmatprep.subr.bf16.mxu0 0
        %492 = vmatpush1.bf16.msra.mxu0 0
        %493 = vmatprep.subr.bf16.mxu0 0
        %494 = vmatpush1.bf16.msra.mxu0 0
        %495 = vmatprep.subr.bf16.mxu0 0
        %496 = vmatpush1.bf16.msra.mxu0 0
        %497 = vmatprep.subr.bf16.mxu0 0
        %498 = vmatpush1.bf16.msra.mxu0 0
        %499 = vmatprep.subr.bf16.mxu0 0
        %500 = vmatpush1.bf16.msra.mxu0 0
        %501 = vmatprep.subr.bf16.mxu0 0
        %502 = vmatpush1.bf16.msra.mxu0 0
        %503 = vmatprep.subr.bf16.mxu0 0
        %504 = vmatpush1.bf16.msra.mxu0 0
        %505 = vmatprep.subr.bf16.mxu0 0
        %506 = vmatpush1.bf16.msra.mxu0 0
        %507 = vmatprep.subr.bf16.mxu0 0
        %508 = vmatpush1.bf16.msra.mxu0 0
        %509 = vmatprep.subr.bf16.mxu0 0
        %510 = vmatpush1.bf16.msra.mxu0 0
        %511 = vmatprep.subr.bf16.mxu0 0
        %512 = vmatpush1.bf16.msra.mxu0 0
        %513 = vmatprep.mubr.bf16.mxu0 0
        %514 = vmatmul.mubr.bf16.gmra.mrb[0].mxu0 %v475
        %v515 = vpop.f32.mrb[0].mxu0
        %v516 = vadd.f32 0.0, %v515
        %v517 = vpop.f32.mrb[0].mxu0
        %v518 = vpop.f32.mrb[0].mxu0
        %v519 = vpop.f32.mrb[0].mxu0
        %520 = vdwg.mxu0
        %v521 = vsel %vm473, %v516, -inf
        %522 = vmax.xlane.f32.xlu0 %v521
        %v523 = vpop.xlane.xlu0 %522
        %v524 = vsub.f32 %v516, %v523
        %v525 = vmul.f32 %v524, 1.442695
        %v526 = vpow.pop %v525
        %v527 = vsel %vm473, %v526, 0.0
        %528 = vadd.xlane.f32.xlu0 %v527
        %v529 = vpop.xlane.xlu0 %528
        %v530 = vrcp.pop %v529
        %v531 = vmul.f32 %v526, %v530
        %v532 = vpack.c.bf16 %v447, %v447
        %v533 = vpack.c.bf16 %v531, %v531
        %v535 = vsel %vm473, %v532, 0
        %v538 = vsel %vm473, %v533, 0
        %540 = vmatprep.subr.bf16.mxu0 0
        %541 = vmatpush1.bf16.xpose.msra.mxu0 %v538
        %542 = vmatprep.subr.bf16.mxu0 0
        %543 = vmatpush1.bf16.xpose.msra.mxu0 0
        %544 = vmatprep.subr.bf16.mxu0 0
        %545 = vmatpush1.bf16.xpose.msra.mxu0 0
        %546 = vmatprep.subr.bf16.mxu0 0
        %547 = vmatpush1.bf16.xpose.msra.mxu0 0
        %548 = vmatprep.subr.bf16.mxu0 0
        %549 = vmatpush1.bf16.xpose.msra.mxu0 0
        %550 = vmatprep.subr.bf16.mxu0 0
        %551 = vmatpush1.bf16.xpose.msra.mxu0 0
        %552 = vmatprep.subr.bf16.mxu0 0
        %553 = vmatpush1.bf16.xpose.msra.mxu0 0
        %554 = vmatprep.subr.bf16.mxu0 0
        %555 = vmatpush1.bf16.xpose.msra.mxu0 0
        %556 = vmatprep.subr.bf16.mxu0 0
        %557 = vmatpush1.bf16.xpose.msra.mxu0 0
        %558 = vmatprep.subr.bf16.mxu0 0
        %559 = vmatpush1.bf16.xpose.msra.mxu0 0
        %560 = vmatprep.subr.bf16.mxu0 0
        %561 = vmatpush1.bf16.xpose.msra.mxu0 0
        %562 = vmatprep.subr.bf16.mxu0 0
        %563 = vmatpush1.bf16.xpose.msra.mxu0 0
        %564 = vmatprep.subr.bf16.mxu0 0
        %565 = vmatpush1.bf16.xpose.msra.mxu0 0
        %566 = vmatprep.subr.bf16.mxu0 0
        %567 = vmatpush1.bf16.xpose.msra.mxu0 0
        %568 = vmatprep.subr.bf16.mxu0 0
        %569 = vmatpush1.bf16.xpose.msra.mxu0 0
        %570 = vmatprep.subr.bf16.mxu0 0
        %571 = vmatpush1.bf16.xpose.msra.mxu0 0
        %572 = vmatprep.mubr.bf16.mxu0 0
        %573 = vmatmul.mubr.bf16.gmra.mrb[0].mxu0 %v535
        %v574 = vpop.f32.mrb[0].mxu0
        %v575 = vadd.f32 0.0, %v574
        %v576 = vpop.f32.mrb[0].mxu0
        %v577 = vpop.f32.mrb[0].mxu0
        %v578 = vpop.f32.mrb[0].mxu0
        %579 = vdwg.mxu0
        %v580 = vpack.c.bf16 %v440, %v440
        %v581 = vpack.c.bf16 %v444, %v444
        %582 = vxpose.xlu0.c.b16.start [1/8] %v580, 128
        %583 = vxpose.xlu0.c.b16.cont [2/8] 0, 128
        %584 = vxpose.xlu0.c.b16.cont [3/8] 0, 128
        %585 = vxpose.xlu0.c.b16.cont [4/8] 0, 128
        %586 = vxpose.xlu0.c.b16.cont [5/8] 0, 128
        %587 = vxpose.xlu0.c.b16.cont [6/8] 0, 128
        %588 = vxpose.xlu0.c.b16.cont [7/8] 0, 128
        %589 = vxpose.xlu0.c.b16.end [8/8] 0, 128
        %v590 = vpop.trf.xlu0
        %v591 = vpop.trf.xlu0
        %v592 = vpop.trf.xlu0
        %v593 = vpop.trf.xlu0
        %v594 = vpop.trf.xlu0
        %v595 = vpop.trf.xlu0
        %v596 = vpop.trf.xlu0
        %v597 = vpop.trf.xlu0
        %v599 = vsel %vm473, %v590, 0
        %v602 = vsel %vm477, %v581, 0
        %604 = vmatprep.subr.bf16.mxu0 0
        %605 = vmatpush1.bf16.msra.mxu0 %v602
        %606 = vmatprep.subr.bf16.mxu0 0
        %607 = vmatpush1.bf16.msra.mxu0 0
        %608 = vmatprep.subr.bf16.mxu0 0
        %609 = vmatpush1.bf16.msra.mxu0 0
        %610 = vmatprep.subr.bf16.mxu0 0
        %611 = vmatpush1.bf16.msra.mxu0 0
        %612 = vmatprep.subr.bf16.mxu0 0
        %613 = vmatpush1.bf16.msra.mxu0 0
        %614 = vmatprep.subr.bf16.mxu0 0
        %615 = vmatpush1.bf16.msra.mxu0 0
        %616 = vmatprep.subr.bf16.mxu0 0
        %617 = vmatpush1.bf16.msra.mxu0 0
        %618 = vmatprep.subr.bf16.mxu0 0
        %619 = vmatpush1.bf16.msra.mxu0 0
        %620 = vmatprep.subr.bf16.mxu0 0
        %621 = vmatpush1.bf16.msra.mxu0 0
        %622 = vmatprep.subr.bf16.mxu0 0
        %623 = vmatpush1.bf16.msra.mxu0 0
        %624 = vmatprep.subr.bf16.mxu0 0
        %625 = vmatpush1.bf16.msra.mxu0 0
        %626 = vmatprep.subr.bf16.mxu0 0
        %627 = vmatpush1.bf16.msra.mxu0 0
        %628 = vmatprep.subr.bf16.mxu0 0
        %629 = vmatpush1.bf16.msra.mxu0 0
        %630 = vmatprep.subr.bf16.mxu0 0
        %631 = vmatpush1.bf16.msra.mxu0 0
        %632 = vmatprep.subr.bf16.mxu0 0
        %633 = vmatpush1.bf16.msra.mxu0 0
        %634 = vmatprep.subr.bf16.mxu0 0
        %635 = vmatpush1.bf16.msra.mxu0 0
        %636 = vmatprep.mubr.bf16.mxu0 0
        %637 = vmatmul.mubr.bf16.gmra.mrb[0].mxu0 %v599
        %v638 = vpop.f32.mrb[0].mxu0
        %v639 = vadd.f32 0.0, %v638
        %v640 = vpop.f32.mrb[0].mxu0
        %v641 = vpop.f32.mrb[0].mxu0
        %v642 = vpop.f32.mrb[0].mxu0
        %643 = vdwg.mxu0
        %v644 = vsel %vm473, %v639, -inf
        %645 = vmax.xlane.f32.xlu0 %v644
        %v646 = vpop.xlane.xlu0 %645
        %v647 = vsub.f32 %v639, %v646
        %v648 = vmul.f32 %v647, 1.442695
        %v649 = vpow.pop %v648
        %v650 = vsel %vm473, %v649, 0.0
        %651 = vadd.xlane.f32.xlu0 %v650
        %v652 = vpop.xlane.xlu0 %651
        %v653 = vrcp.pop %v652
        %v654 = vmul.f32 %v649, %v653
        %v655 = vpack.c.bf16 %v448, %v448
        %v656 = vpack.c.bf16 %v654, %v654
        %v658 = vsel %vm473, %v655, 0
        %v661 = vsel %vm473, %v656, 0
        %663 = vmatprep.subr.bf16.mxu0 0
        %664 = vmatpush1.bf16.xpose.msra.mxu0 %v661
        %665 = vmatprep.subr.bf16.mxu0 0
        %666 = vmatpush1.bf16.xpose.msra.mxu0 0
        %667 = vmatprep.subr.bf16.mxu0 0
        %668 = vmatpush1.bf16.xpose.msra.mxu0 0
        %669 = vmatprep.subr.bf16.mxu0 0
        %670 = vmatpush1.bf16.xpose.msra.mxu0 0
        %671 = vmatprep.subr.bf16.mxu0 0
        %672 = vmatpush1.bf16.xpose.msra.mxu0 0
        %673 = vmatprep.subr.bf16.mxu0 0
        %674 = vmatpush1.bf16.xpose.msra.mxu0 0
        %675 = vmatprep.subr.bf16.mxu0 0
        %676 = vmatpush1.bf16.xpose.msra.mxu0 0
        %677 = vmatprep.subr.bf16.mxu0 0
        %678 = vmatpush1.bf16.xpose.msra.mxu0 0
        %679 = vmatprep.subr.bf16.mxu0 0
        %680 = vmatpush1.bf16.xpose.msra.mxu0 0
        %681 = vmatprep.subr.bf16.mxu0 0
        %682 = vmatpush1.bf16.xpose.msra.mxu0 0
        %683 = vmatprep.subr.bf16.mxu0 0
        %684 = vmatpush1.bf16.xpose.msra.mxu0 0
        %685 = vmatprep.subr.bf16.mxu0 0
        %686 = vmatpush1.bf16.xpose.msra.mxu0 0
        %687 = vmatprep.subr.bf16.mxu0 0
        %688 = vmatpush1.bf16.xpose.msra.mxu0 0
        %689 = vmatprep.subr.bf16.mxu0 0
        %690 = vmatpush1.bf16.xpose.msra.mxu0 0
        %691 = vmatprep.subr.bf16.mxu0 0
        %692 = vmatpush1.bf16.xpose.msra.mxu0 0
        %693 = vmatprep.subr.bf16.mxu0 0
        %694 = vmatpush1.bf16.xpose.msra.mxu0 0
        %695 = vmatprep.mubr.bf16.mxu0 0
        %696 = vmatmul.mubr.bf16.gmra.mrb[0].mxu0 %v658
        %v697 = vpop.f32.mrb[0].mxu0
        %v698 = vadd.f32 0.0, %v697
        %v699 = vpop.f32.mrb[0].mxu0
        %v700 = vpop.f32.mrb[0].mxu0
        %v701 = vpop.f32.mrb[0].mxu0
        %702 = vdwg.mxu0
        %v703 = vpack.c.bf16 %v441, %v441
        %v704 = vpack.c.bf16 %v445, %v445
        %705 = vxpose.xlu0.c.b16.start [1/8] %v703, 128
        %706 = vxpose.xlu0.c.b16.cont [2/8] 0, 128
        %707 = vxpose.xlu0.c.b16.cont [3/8] 0, 128
        %708 = vxpose.xlu0.c.b16.cont [4/8] 0, 128
        %709 = vxpose.xlu0.c.b16.cont [5/8] 0, 128
        %710 = vxpose.xlu0.c.b16.cont [6/8] 0, 128
        %711 = vxpose.xlu0.c.b16.cont [7/8] 0, 128
        %712 = vxpose.xlu0.c.b16.end [8/8] 0, 128
        %v713 = vpop.trf.xlu0
        %v714 = vpop.trf.xlu0
        %v715 = vpop.trf.xlu0
        %v716 = vpop.trf.xlu0
        %v717 = vpop.trf.xlu0
        %v718 = vpop.trf.xlu0
        %v719 = vpop.trf.xlu0
        %v720 = vpop.trf.xlu0
        %v722 = vsel %vm473, %v713, 0
        %v725 = vsel %vm477, %v704, 0
        %727 = vmatprep.subr.bf16.mxu0 0
        %728 = vmatpush1.bf16.msra.mxu0 %v725
        %729 = vmatprep.subr.bf16.mxu0 0
        %730 = vmatpush1.bf16.msra.mxu0 0
        %731 = vmatprep.subr.bf16.mxu0 0
        %732 = vmatpush1.bf16.msra.mxu0 0
        %733 = vmatprep.subr.bf16.mxu0 0
        %734 = vmatpush1.bf16.msra.mxu0 0
        %735 = vmatprep.subr.bf16.mxu0 0
        %736 = vmatpush1.bf16.msra.mxu0 0
        %737 = vmatprep.subr.bf16.mxu0 0
        %738 = vmatpush1.bf16.msra.mxu0 0
        %739 = vmatprep.subr.bf16.mxu0 0
        %740 = vmatpush1.bf16.msra.mxu0 0
        %741 = vmatprep.subr.bf16.mxu0 0
        %742 = vmatpush1.bf16.msra.mxu0 0
        %743 = vmatprep.subr.bf16.mxu0 0
        %744 = vmatpush1.bf16.msra.mxu0 0
        %745 = vmatprep.subr.bf16.mxu0 0
        %746 = vmatpush1.bf16.msra.mxu0 0
        %747 = vmatprep.subr.bf16.mxu0 0
        %748 = vmatpush1.bf16.msra.mxu0 0
        %749 = vmatprep.subr.bf16.mxu0 0
        %750 = vmatpush1.bf16.msra.mxu0 0
        %751 = vmatprep.subr.bf16.mxu0 0
        %752 = vmatpush1.bf16.msra.mxu0 0
        %753 = vmatprep.subr.bf16.mxu0 0
        %754 = vmatpush1.bf16.msra.mxu0 0
        %755 = vmatprep.subr.bf16.mxu0 0
        %756 = vmatpush1.bf16.msra.mxu0 0
        %757 = vmatprep.subr.bf16.mxu0 0
        %758 = vmatpush1.bf16.msra.mxu0 0
        %759 = vmatprep.mubr.bf16.mxu0 0
        %760 = vmatmul.mubr.bf16.gmra.mrb[0].mxu0 %v722
        %v761 = vpop.f32.mrb[0].mxu0
        %v762 = vadd.f32 0.0, %v761
        %v763 = vpop.f32.mrb[0].mxu0
        %v764 = vpop.f32.mrb[0].mxu0
        %v765 = vpop.f32.mrb[0].mxu0
        %766 = vdwg.mxu0
        %v767 = vsel %vm473, %v762, -inf
        %768 = vmax.xlane.f32.xlu0 %v767
        %v769 = vpop.xlane.xlu0 %768
        %v770 = vsub.f32 %v762, %v769
        %v771 = vmul.f32 %v770, 1.442695
        %v772 = vpow.pop %v771
        %v773 = vsel %vm473, %v772, 0.0
        %774 = vadd.xlane.f32.xlu0 %v773
        %v775 = vpop.xlane.xlu0 %774
        %v776 = vrcp.pop %v775
        %v777 = vmul.f32 %v772, %v776
        %v778 = vpack.c.bf16 %v449, %v449
        %v779 = vpack.c.bf16 %v777, %v777
        %v781 = vsel %vm473, %v778, 0
        %v784 = vsel %vm473, %v779, 0
        %786 = vmatprep.subr.bf16.mxu0 0
        %787 = vmatpush1.bf16.xpose.msra.mxu0 %v784
        %788 = vmatprep.subr.bf16.mxu0 0
        %789 = vmatpush1.bf16.xpose.msra.mxu0 0
        %790 = vmatprep.subr.bf16.mxu0 0
        %791 = vmatpush1.bf16.xpose.msra.mxu0 0
        %792 = vmatprep.subr.bf16.mxu0 0
        %793 = vmatpush1.bf16.xpose.msra.mxu0 0
        %794 = vmatprep.subr.bf16.mxu0 0
        %795 = vmatpush1.bf16.xpose.msra.mxu0 0
        %796 = vmatprep.subr.bf16.mxu0 0
        %797 = vmatpush1.bf16.xpose.msra.mxu0 0
        %798 = vmatprep.subr.bf16.mxu0 0
        %799 = vmatpush1.bf16.xpose.msra.mxu0 0
        %800 = vmatprep.subr.bf16.mxu0 0
        %801 = vmatpush1.bf16.xpose.msra.mxu0 0
        %802 = vmatprep.subr.bf16.mxu0 0
        %803 = vmatpush1.bf16.xpose.msra.mxu0 0
        %804 = vmatprep.subr.bf16.mxu0 0
        %805 = vmatpush1.bf16.xpose.msra.mxu0 0
        %806 = vmatprep.subr.bf16.mxu0 0
        %807 = vmatpush1.bf16.xpose.msra.mxu0 0
        %808 = vmatprep.subr.bf16.mxu0 0
        %809 = vmatpush1.bf16.xpose.msra.mxu0 0
        %810 = vmatprep.subr.bf16.mxu0 0
        %811 = vmatpush1.bf16.xpose.msra.mxu0 0
        %812 = vmatprep.subr.bf16.mxu0 0
        %813 = vmatpush1.bf16.xpose.msra.mxu0 0
        %814 = vmatprep.subr.bf16.mxu0 0
        %815 = vmatpush1.bf16.xpose.msra.mxu0 0
        %816 = vmatprep.subr.bf16.mxu0 0
        %817 = vmatpush1.bf16.xpose.msra.mxu0 0
        %818 = vmatprep.mubr.bf16.mxu0 0
        %819 = vmatmul.mubr.bf16.gmra.mrb[0].mxu0 %v781
        %v820 = vpop.f32.mrb[0].mxu0
        %v821 = vadd.f32 0.0, %v820
        %v822 = vpop.f32.mrb[0].mxu0
        %v823 = vpop.f32.mrb[0].mxu0
        %v824 = vpop.f32.mrb[0].mxu0
        %825 = vdwg.mxu0
        %v826 = vpack.c.bf16 %v442, %v442
        %v827 = vpack.c.bf16 %v446, %v446
        %828 = vxpose.xlu0.c.b16.start [1/8] %v826, 128
        %829 = vxpose.xlu0.c.b16.cont [2/8] 0, 128
        %830 = vxpose.xlu0.c.b16.cont [3/8] 0, 128
        %831 = vxpose.xlu0.c.b16.cont [4/8] 0, 128
        %832 = vxpose.xlu0.c.b16.cont [5/8] 0, 128
        %833 = vxpose.xlu0.c.b16.cont [6/8] 0, 128
        %834 = vxpose.xlu0.c.b16.cont [7/8] 0, 128
        %835 = vxpose.xlu0.c.b16.end [8/8] 0, 128
        %v836 = vpop.trf.xlu0
        %v837 = vpop.trf.xlu0
        %v838 = vpop.trf.xlu0
        %v839 = vpop.trf.xlu0
        %v840 = vpop.trf.xlu0
        %v841 = vpop.trf.xlu0
        %v842 = vpop.trf.xlu0
        %v843 = vpop.trf.xlu0
        %v845 = vsel %vm473, %v836, 0
        %v848 = vsel %vm477, %v827, 0
        %850 = vmatprep.subr.bf16.mxu0 0
        %851 = vmatpush1.bf16.msra.mxu0 %v848
        %852 = vmatprep.subr.bf16.mxu0 0
        %853 = vmatpush1.bf16.msra.mxu0 0
        %854 = vmatprep.subr.bf16.mxu0 0
        %855 = vmatpush1.bf16.msra.mxu0 0
        %856 = vmatprep.subr.bf16.mxu0 0
        %857 = vmatpush1.bf16.msra.mxu0 0
        %858 = vmatprep.subr.bf16.mxu0 0
        %859 = vmatpush1.bf16.msra.mxu0 0
        %860 = vmatprep.subr.bf16.mxu0 0
        %861 = vmatpush1.bf16.msra.mxu0 0
        %862 = vmatprep.subr.bf16.mxu0 0
        %863 = vmatpush1.bf16.msra.mxu0 0
        %864 = vmatprep.subr.bf16.mxu0 0
        %865 = vmatpush1.bf16.msra.mxu0 0
        %866 = vmatprep.subr.bf16.mxu0 0
        %867 = vmatpush1.bf16.msra.mxu0 0
        %868 = vmatprep.subr.bf16.mxu0 0
        %869 = vmatpush1.bf16.msra.mxu0 0
        %870 = vmatprep.subr.bf16.mxu0 0
        %871 = vmatpush1.bf16.msra.mxu0 0
        %872 = vmatprep.subr.bf16.mxu0 0
        %873 = vmatpush1.bf16.msra.mxu0 0
        %874 = vmatprep.subr.bf16.mxu0 0
        %875 = vmatpush1.bf16.msra.mxu0 0
        %876 = vmatprep.subr.bf16.mxu0 0
        %877 = vmatpush1.bf16.msra.mxu0 0
        %878 = vmatprep.subr.bf16.mxu0 0
        %879 = vmatpush1.bf16.msra.mxu0 0
        %880 = vmatprep.subr.bf16.mxu0 0
        %881 = vmatpush1.bf16.msra.mxu0 0
        %882 = vmatprep.mubr.bf16.mxu0 0
        %883 = vmatmul.mubr.bf16.gmra.mrb[0].mxu0 %v845
        %v884 = vpop.f32.mrb[0].mxu0
        %v885 = vadd.f32 0.0, %v884
        %v886 = vpop.f32.mrb[0].mxu0
        %v887 = vpop.f32.mrb[0].mxu0
        %v888 = vpop.f32.mrb[0].mxu0
        %889 = vdwg.mxu0
        %v890 = vsel %vm473, %v885, -inf
        %891 = vmax.xlane.f32.xlu0 %v890
        %v892 = vpop.xlane.xlu0 %891
        %v893 = vsub.f32 %v885, %v892
        %v894 = vmul.f32 %v893, 1.442695
        %v895 = vpow.pop %v894
        %v896 = vsel %vm473, %v895, 0.0
        %897 = vadd.xlane.f32.xlu0 %v896
        %v898 = vpop.xlane.xlu0 %897
        %v899 = vrcp.pop %v898
        %v900 = vmul.f32 %v895, %v899
        %v901 = vpack.c.bf16 %v450, %v450
        %v902 = vpack.c.bf16 %v900, %v900
        %v904 = vsel %vm473, %v901, 0
        %v907 = vsel %vm473, %v902, 0
        %909 = vmatprep.subr.bf16.mxu0 0
        %910 = vmatpush1.bf16.xpose.msra.mxu0 %v907
        %911 = vmatprep.subr.bf16.mxu0 0
        %912 = vmatpush1.bf16.xpose.msra.mxu0 0
        %913 = vmatprep.subr.bf16.mxu0 0
        %914 = vmatpush1.bf16.xpose.msra.mxu0 0
        %915 = vmatprep.subr.bf16.mxu0 0
        %916 = vmatpush1.bf16.xpose.msra.mxu0 0
        %917 = vmatprep.subr.bf16.mxu0 0
        %918 = vmatpush1.bf16.xpose.msra.mxu0 0
        %919 = vmatprep.subr.bf16.mxu0 0
        %920 = vmatpush1.bf16.xpose.msra.mxu0 0
        %921 = vmatprep.subr.bf16.mxu0 0
        %922 = vmatpush1.bf16.xpose.msra.mxu0 0
        %923 = vmatprep.subr.bf16.mxu0 0
        %924 = vmatpush1.bf16.xpose.msra.mxu0 0
        %925 = vmatprep.subr.bf16.mxu0 0
        %926 = vmatpush1.bf16.xpose.msra.mxu0 0
        %927 = vmatprep.subr.bf16.mxu0 0
        %928 = vmatpush1.bf16.xpose.msra.mxu0 0
        %929 = vmatprep.subr.bf16.mxu0 0
        %930 = vmatpush1.bf16.xpose.msra.mxu0 0
        %931 = vmatprep.subr.bf16.mxu0 0
        %932 = vmatpush1.bf16.xpose.msra.mxu0 0
        %933 = vmatprep.subr.bf16.mxu0 0
        %934 = vmatpush1.bf16.xpose.msra.mxu0 0
        %935 = vmatprep.subr.bf16.mxu0 0
        %936 = vmatpush1.bf16.xpose.msra.mxu0 0
        %937 = vmatprep.subr.bf16.mxu0 0
        %938 = vmatpush1.bf16.xpose.msra.mxu0 0
        %939 = vmatprep.subr.bf16.mxu0 0
        %940 = vmatpush1.bf16.xpose.msra.mxu0 0
        %941 = vmatprep.mubr.bf16.mxu0 0
        %942 = vmatmul.mubr.bf16.gmra.mrb[0].mxu0 %v904
        %v943 = vpop.f32.mrb[0].mxu0
        %v944 = vadd.f32 0.0, %v943
        %v945 = vpop.f32.mrb[0].mxu0
        %v946 = vpop.f32.mrb[0].mxu0
        %v947 = vpop.f32.mrb[0].mxu0
        %948 = vdwg.mxu0
        %949 = vxpose.xlu0.b32.start [1/16] %v575, 128
        %950 = vxpose.xlu0.b32.cont [2/16] %v698, 128
        %951 = vxpose.xlu0.b32.cont [3/16] %v821, 128
        %952 = vxpose.xlu0.b32.cont [4/16] %v944, 128
        %953 = vxpose.xlu0.b32.cont [5/16] 0.0, 128
        %954 = vxpose.xlu0.b32.cont [6/16] 0.0, 128
        %955 = vxpose.xlu0.b32.cont [7/16] 0.0, 128
        %956 = vxpose.xlu0.b32.cont [8/16] 0.0, 128
        %957 = vxpose.xlu0.b32.cont [9/16] 0.0, 128
        %958 = vxpose.xlu0.b32.cont [10/16] 0.0, 128
        %959 = vxpose.xlu0.b32.cont [11/16] 0.0, 128
        %960 = vxpose.xlu0.b32.cont [12/16] 0.0, 128
        %961 = vxpose.xlu0.b32.cont [13/16] 0.0, 128
        %962 = vxpose.xlu0.b32.cont [14/16] 0.0, 128
        %963 = vxpose.xlu0.b32.cont [15/16] 0.0, 128
        %964 = vxpose.xlu0.b32.end [16/16] 0.0, 128
        %v965 = vpop.trf.xlu0
        %v966 = vpop.trf.xlu0
        %v967 = vpop.trf.xlu0
        %v968 = vpop.trf.xlu0
        %v969 = vpop.trf.xlu0
        %v970 = vpop.trf.xlu0
        %v971 = vpop.trf.xlu0
        %v972 = vpop.trf.xlu0
        %v973 = vpop.trf.xlu0
        %v974 = vpop.trf.xlu0
        %v975 = vpop.trf.xlu0
        %v976 = vpop.trf.xlu0
        %v977 = vpop.trf.xlu0
        %v978 = vpop.trf.xlu0
        %v979 = vpop.trf.xlu0
        %v980 = vpop.trf.xlu0
        %v981 = vld [vmem:[%s5] sm:$0xff]
        %v982 = vpack.c.bf16 %v965, %v965
        %v983 = vld [vmem:[%s4] sm:$0xf]
        %v984 = vld [vmem:[%s4 + $0x4] sm:$0xf]
        %v985 = vld [vmem:[%s4 + $0x8] sm:$0xf]
        %v986 = vld [vmem:[%s4 + $0xc] sm:$0xf]
        %v987 = vlaneseq
        %v988 = vshrl.u32 %v987, 7
        %v989 = vsub.s32 0, %v988
        %v990 = vrot.slane %v981, %v989
        %v995 = vunpack.c.l.b16 %v983
        %v996 = vunpack.c.l.b16 %v984
        %v997 = vunpack.c.l.b16 %v985
        %v998 = vunpack.c.l.b16 %v986
        %v999 = vpack.c.b16 %v996, %v995
        %v1000 = vpack.c.b16 %v998, %v997
        %v1004 = vsel %vm331, %v982, 0
        %1006 = vmatprep.subr.bf16.mxu0 0
        %1007 = vmatpush1.bf16.msra.mxu0 %v999
        %1008 = vmatprep.subr.bf16.mxu0 0
        %1009 = vmatpush1.bf16.msra.mxu0 %v1000
        %1010 = vmatprep.subr.bf16.mxu0 0
        %1011 = vmatpush1.bf16.msra.mxu0 0
        %1012 = vmatprep.subr.bf16.mxu0 0
        %1013 = vmatpush1.bf16.msra.mxu0 0
        %1014 = vmatprep.subr.bf16.mxu0 0
        %1015 = vmatpush1.bf16.msra.mxu0 0
        %1016 = vmatprep.subr.bf16.mxu0 0
        %1017 = vmatpush1.bf16.msra.mxu0 0
        %1018 = vmatprep.subr.bf16.mxu0 0
        %1019 = vmatpush1.bf16.msra.mxu0 0
        %1020 = vmatprep.subr.bf16.mxu0 0
        %1021 = vmatpush1.bf16.msra.mxu0 0
        %1022 = vmatprep.subr.bf16.mxu0 0
        %1023 = vmatpush1.bf16.msra.mxu0 0
        %1024 = vmatprep.subr.bf16.mxu0 0
        %1025 = vmatpush1.bf16.msra.mxu0 0
        %1026 = vmatprep.subr.bf16.mxu0 0
        %1027 = vmatpush1.bf16.msra.mxu0 0
        %1028 = vmatprep.subr.bf16.mxu0 0
        %1029 = vmatpush1.bf16.msra.mxu0 0
        %1030 = vmatprep.subr.bf16.mxu0 0
        %1031 = vmatpush1.bf16.msra.mxu0 0
        %1032 = vmatprep.subr.bf16.mxu0 0
        %1033 = vmatpush1.bf16.msra.mxu0 0
        %1034 = vmatprep.subr.bf16.mxu0 0
        %1035 = vmatpush1.bf16.msra.mxu0 0
        %1036 = vmatprep.subr.bf16.mxu0 0
        %1037 = vmatpush1.bf16.msra.mxu0 0
        %1038 = vmatprep.mubr.bf16.mxu0 0
        %1039 = vmatmul.mubr.bf16.gmra.mrb[0].mxu0 %v1004
        %v1040 = vpop.f32.mrb[0].mxu0
        %v1041 = vadd.f32 %v990, %v1040
        %v1042 = vpop.f32.mrb[0].mxu0
        %v1043 = vpop.f32.mrb[0].mxu0
        %v1044 = vpop.f32.mrb[0].mxu0
        %1045 = vdwg.mxu0
        %v1046 = vadd.f32 %v355, %v1041
        %v1047 = vsel %vm331, %v1046, 0.0
        %1048 = vadd.xlane.f32.xlu0 %v1047
        %v1049 = vpop.xlane.xlu0 %1048
        %v1050 = vmul.f32 %v1049, %v335
        %v1051 = vsub.f32 %v1046, %v1050
        %v1052 = vmul.f32 %v1051, %v1051
        %v1053 = vsel %vm331, %v1052, 0.0
        %1054 = vadd.xlane.f32.xlu0 %v1053
        %v1055 = vpop.xlane.xlu0 %1054
        %v1056 = vmul.f32 %v1055, %v335
        %v1057 = vadd.f32 %v1056, 1e-12
        %v1058 = vrsqrt.pop %v1057
        %v1059 = vmul.f32 %v1051, %v1058
        %v1060 = vlaneseq
        %v1061 = vshrl.u32 %v1060, 7
        %v1062 = vsub.s32 1, %v1061
        %v1063 = vrot.slane %v981, %v1062
        %v1064 = vmul.f32 %v1059, %v1063
        %v1065 = vlaneseq
        %v1066 = vshrl.u32 %v1065, 7
        %v1067 = vsub.s32 2, %v1066
        %v1068 = vrot.slane %v981, %v1067
        %v1069 = vadd.f32 %v1064, %v1068
        %v1070 = vpack.c.bf16 %v1069, %v1069
        %v1071 = vld [vmem:[%s6] sm:$0xf]
        %v1072 = vld [vmem:[%s6 + $0x4] sm:$0xf]
        %v1073 = vld [vmem:[%s6 + $0x8] sm:$0xf]
        %v1074 = vld [vmem:[%s6 + $0xc] sm:$0xf]
        %v1075 = vld [vmem:[%s7] sm:$0x1]
        %v1077 = vlaneseq
        %v1078 = vshrl.u32 %v1077, 7
        %v1079 = vsub.s32 0, %v1078
        %v1080 = vrot.slane %v1075, %v1079
        %v1086 = vunpack.c.l.b16 %v1071
        %v1087 = vunpack.c.l.b16 %v1072
        %v1088 = vunpack.c.l.b16 %v1073
        %v1089 = vunpack.c.l.b16 %v1074
        %v1090 = vpack.c.b16 %v1087, %v1086
        %v1091 = vpack.c.b16 %v1089, %v1088
        %v1095 = vsel %vm331, %v1070, 0
        %1097 = vmatprep.subr.bf16.mxu0 0
        %1098 = vmatpush1.bf16.msra.mxu0 %v1090
        %1099 = vmatprep.subr.bf16.mxu0 0
        %1100 = vmatpush1.bf16.msra.mxu0 %v1091
        %1101 = vmatprep.subr.bf16.mxu0 0
        %1102 = vmatpush1.bf16.msra.mxu0 0
        %1103 = vmatprep.subr.bf16.mxu0 0
        %1104 = vmatpush1.bf16.msra.mxu0 0
        %1105 = vmatprep.subr.bf16.mxu0 0
        %1106 = vmatpush1.bf16.msra.mxu0 0
        %1107 = vmatprep.subr.bf16.mxu0 0
        %1108 = vmatpush1.bf16.msra.mxu0 0
        %1109 = vmatprep.subr.bf16.mxu0 0
        %1110 = vmatpush1.bf16.msra.mxu0 0
        %1111 = vmatprep.subr.bf16.mxu0 0
        %1112 = vmatpush1.bf16.msra.mxu0 0
        %1113 = vmatprep.subr.bf16.mxu0 0
        %1114 = vmatpush1.bf16.msra.mxu0 0
        %1115 = vmatprep.subr.bf16.mxu0 0
        %1116 = vmatpush1.bf16.msra.mxu0 0
        %1117 = vmatprep.subr.bf16.mxu0 0
        %1118 = vmatpush1.bf16.msra.mxu0 0
        %1119 = vmatprep.subr.bf16.mxu0 0
        %1120 = vmatpush1.bf16.msra.mxu0 0
        %1121 = vmatprep.subr.bf16.mxu0 0
        %1122 = vmatpush1.bf16.msra.mxu0 0
        %1123 = vmatprep.subr.bf16.mxu0 0
        %1124 = vmatpush1.bf16.msra.mxu0 0
        %1125 = vmatprep.subr.bf16.mxu0 0
        %1126 = vmatpush1.bf16.msra.mxu0 0
        %1127 = vmatprep.subr.bf16.mxu0 0
        %1128 = vmatpush1.bf16.msra.mxu0 0
        %1129 = vmatprep.mubr.bf16.mxu0 0
        %1130 = vmatmul.mubr.bf16.gmra.mrb[0].mxu0 %v1095
        %v1131 = vpop.f32.mrb[0].mxu0
        %v1132 = vadd.f32 %v1080, %v1131
        %v1133 = vpop.f32.mrb[0].mxu0
        %v1134 = vpop.f32.mrb[0].mxu0
        %v1135 = vpop.f32.mrb[0].mxu0
        %1136 = vdwg.mxu0
        %v1137 = vmul.f32 %v1132, 0.5
        %v1138 = vmul.f32 %v1132, 0.044715
        %v1139 = vmul.f32 %v1138, %v1132
        %v1140 = vmul.f32 %v1139, %v1132
        %v1141 = vadd.f32 %v1132, %v1140
        %v1142 = vmul.f32 %v1141, 0.7978846
        %v1143 = vtanh.pop %v1142
        %v1144 = vadd.f32 %v1143, 1.0
        %v1145 = vmul.f32 %v1137, %v1144
        %v1146 = vpack.c.bf16 %v1145, %v1145
        %v1147 = vld [vmem:[%s8] sm:$0xf]
        %v1148 = vld [vmem:[%s8 + $0x4] sm:$0xf]
        %v1149 = vld [vmem:[%s8 + $0x8] sm:$0xf]
        %v1150 = vld [vmem:[%s8 + $0xc] sm:$0xf]
        %v1151 = vld [vmem:[%s8 + $0x10] sm:$0xf]
        %v1152 = vld [vmem:[%s8 + $0x14] sm:$0xf]
        %v1153 = vld [vmem:[%s8 + $0x18] sm:$0xf]
        %v1154 = vld [vmem:[%s8 + $0x1c] sm:$0xf]
        %v1155 = vlaneseq
        %v1156 = vshrl.u32 %v1155, 7
        %v1157 = vsub.s32 3, %v1156
        %v1158 = vrot.slane %v981, %v1157
        %v1167 = vunpack.c.l.b16 %v1147
        %v1168 = vunpack.c.l.b16 %v1148
        %v1169 = vunpack.c.l.b16 %v1149
        %v1170 = vunpack.c.l.b16 %v1150
        %v1171 = vunpack.c.l.b16 %v1151
        %v1172 = vunpack.c.l.b16 %v1152
        %v1173 = vunpack.c.l.b16 %v1153
        %v1174 = vunpack.c.l.b16 %v1154
        %v1175 = vpack.c.b16 %v1168, %v1167
        %v1176 = vpack.c.b16 %v1170, %v1169
        %v1177 = vpack.c.b16 %v1172, %v1171
        %v1178 = vpack.c.b16 %v1174, %v1173
        %vm1183 = vcmask 523264
        %v1185 = vsel %vm1183, %v1146, 0
        %1187 = vmatprep.subr.bf16.mxu0 0
        %1188 = vmatpush1.bf16.msra.mxu0 %v1175
        %1189 = vmatprep.subr.bf16.mxu0 0
        %1190 = vmatpush1.bf16.msra.mxu0 %v1176
        %1191 = vmatprep.subr.bf16.mxu0 0
        %1192 = vmatpush1.bf16.msra.mxu0 %v1177
        %1193 = vmatprep.subr.bf16.mxu0 0
        %1194 = vmatpush1.bf16.msra.mxu0 %v1178
        %1195 = vmatprep.subr.bf16.mxu0 0
        %1196 = vmatpush1.bf16.msra.mxu0 0
        %1197 = vmatprep.subr.bf16.mxu0 0
        %1198 = vmatpush1.bf16.msra.mxu0 0
        %1199 = vmatprep.subr.bf16.mxu0 0
        %1200 = vmatpush1.bf16.msra.mxu0 0
        %1201 = vmatprep.subr.bf16.mxu0 0
        %1202 = vmatpush1.bf16.msra.mxu0 0
        %1203 = vmatprep.subr.bf16.mxu0 0
        %1204 = vmatpush1.bf16.msra.mxu0 0
        %1205 = vmatprep.subr.bf16.mxu0 0
        %1206 = vmatpush1.bf16.msra.mxu0 0
        %1207 = vmatprep.subr.bf16.mxu0 0
        %1208 = vmatpush1.bf16.msra.mxu0 0
        %1209 = vmatprep.subr.bf16.mxu0 0
        %1210 = vmatpush1.bf16.msra.mxu0 0
        %1211 = vmatprep.subr.bf16.mxu0 0
        %1212 = vmatpush1.bf16.msra.mxu0 0
        %1213 = vmatprep.subr.bf16.mxu0 0
        %1214 = vmatpush1.bf16.msra.mxu0 0
        %1215 = vmatprep.subr.bf16.mxu0 0
        %1216 = vmatpush1.bf16.msra.mxu0 0
        %1217 = vmatprep.subr.bf16.mxu0 0
        %1218 = vmatpush1.bf16.msra.mxu0 0
        %1219 = vmatprep.mubr.bf16.mxu0 0
        %1220 = vmatmul.mubr.bf16.gmra.mrb[0].mxu0 %v1185
        %v1221 = vpop.f32.mrb[0].mxu0
        %v1222 = vadd.f32 %v1158, %v1221
        %v1223 = vpop.f32.mrb[0].mxu0
        %v1224 = vpop.f32.mrb[0].mxu0
        %v1225 = vpop.f32.mrb[0].mxu0
        %1226 = vdwg.mxu0
        %v1227 = vadd.f32 %v1069, %v1222
        %v1228 = vsel %vm331, %v1227, 0.0
        %1229 = vadd.xlane.f32.xlu0 %v1228
        %v1230 = vpop.xlane.xlu0 %1229
        %v1231 = vmul.f32 %v1230, %v335
        %v1232 = vsub.f32 %v1227, %v1231
        %v1233 = vmul.f32 %v1232, %v1232
        %v1234 = vsel %vm331, %v1233, 0.0
        %1235 = vadd.xlane.f32.xlu0 %v1234
        %v1236 = vpop.xlane.xlu0 %1235
        %v1237 = vmul.f32 %v1236, %v335
        %v1238 = vadd.f32 %v1237, 1e-12
        %v1239 = vrsqrt.pop %v1238
        %v1240 = vmul.f32 %v1232, %v1239
        %v1241 = vlaneseq
        %v1242 = vshrl.u32 %v1241, 7
        %v1243 = vsub.s32 4, %v1242
        %v1244 = vrot.slane %v981, %v1243
        %v1245 = vmul.f32 %v1240, %v1244
        %v1246 = vlaneseq
        %v1247 = vshrl.u32 %v1246, 7
        %v1248 = vsub.s32 5, %v1247
        %v1249 = vrot.slane %v981, %v1248
        %v1250 = vadd.f32 %v1245, %v1249
        %v1251 = vpack.c.bf16 %v1250, %v1250
        %s1252 = scalar_lea.vmem %s2, 16
        %v1253 = vld [vmem:[%s1252] sm:$0xf]
        %v1254 = vld [vmem:[%s1252 + $0x4] sm:$0xf]
        %v1255 = vld [vmem:[%s1252 + $0x8] sm:$0xf]
        %v1256 = vld [vmem:[%s1252 + $0xc] sm:$0xf]
        %s1257 = scalar_lea.vmem %s3, 1
        %v1258 = vld [vmem:[%s1257] sm:$0x1]
        %v1260 = vlaneseq
        %v1261 = vshrl.u32 %v1260, 7
        %v1262 = vsub.s32 0, %v1261
        %v1263 = vrot.slane %v1258, %v1262
        %v1269 = vunpack.c.l.b16 %v1253
        %v1270 = vunpack.c.l.b16 %v1254
        %v1271 = vunpack.c.l.b16 %v1255
        %v1272 = vunpack.c.l.b16 %v1256
        %v1273 = vpack.c.b16 %v1270, %v1269
        %v1274 = vpack.c.b16 %v1272, %v1271
        %v1278 = vsel %vm331, %v1251, 0
        %1280 = vmatprep.subr.bf16.mxu0 0
        %1281 = vmatpush1.bf16.msra.mxu0 %v1273
        %1282 = vmatprep.subr.bf16.mxu0 0
        %1283 = vmatpush1.bf16.msra.mxu0 %v1274
        %1284 = vmatprep.subr.bf16.mxu0 0
        %1285 = vmatpush1.bf16.msra.mxu0 0
        %1286 = vmatprep.subr.bf16.mxu0 0
        %1287 = vmatpush1.bf16.msra.mxu0 0
        %1288 = vmatprep.subr.bf16.mxu0 0
        %1289 = vmatpush1.bf16.msra.mxu0 0
        %1290 = vmatprep.subr.bf16.mxu0 0
        %1291 = vmatpush1.bf16.msra.mxu0 0
        %1292 = vmatprep.subr.bf16.mxu0 0
        %1293 = vmatpush1.bf16.msra.mxu0 0
        %1294 = vmatprep.subr.bf16.mxu0 0
        %1295 = vmatpush1.bf16.msra.mxu0 0
        %1296 = vmatprep.subr.bf16.mxu0 0
        %1297 = vmatpush1.bf16.msra.mxu0 0
        %1298 = vmatprep.subr.bf16.mxu0 0
        %1299 = vmatpush1.bf16.msra.mxu0 0
        %1300 = vmatprep.subr.bf16.mxu0 0
        %1301 = vmatpush1.bf16.msra.mxu0 0
        %1302 = vmatprep.subr.bf16.mxu0 0
        %1303 = vmatpush1.bf16.msra.mxu0 0
        %1304 = vmatprep.subr.bf16.mxu0 0
        %1305 = vmatpush1.bf16.msra.mxu0 0
        %1306 = vmatprep.subr.bf16.mxu0 0
        %1307 = vmatpush1.bf16.msra.mxu0 0
        %1308 = vmatprep.subr.bf16.mxu0 0
        %1309 = vmatpush1.bf16.msra.mxu0 0
        %1310 = vmatprep.subr.bf16.mxu0 0
        %1311 = vmatpush1.bf16.msra.mxu0 0
        %1312 = vmatprep.mubr.bf16.mxu0 0
        %1313 = vmatmul.mubr.bf16.gmra.mrb[0].mxu0 %v1278
        %v1314 = vpop.f32.mrb[0].mxu0
        %v1315 = vadd.f32 %v1263, %v1314
        %v1316 = vpop.f32.mrb[0].mxu0
        %v1317 = vpop.f32.mrb[0].mxu0
        %v1318 = vpop.f32.mrb[0].mxu0
        %1319 = vdwg.mxu0
        %1320 = vxpose.xlu0.b32.start [1/16] %v1315, 128
        %1321 = vxpose.xlu0.b32.cont [2/16] 0.0, 128
        %1322 = vxpose.xlu0.b32.cont [3/16] 0.0, 128
        %1323 = vxpose.xlu0.b32.cont [4/16] 0.0, 128
        %1324 = vxpose.xlu0.b32.cont [5/16] 0.0, 128
        %1325 = vxpose.xlu0.b32.cont [6/16] 0.0, 128
        %1326 = vxpose.xlu0.b32.cont [7/16] 0.0, 128
        %1327 = vxpose.xlu0.b32.cont [8/16] 0.0, 128
        %1328 = vxpose.xlu0.b32.cont [9/16] 0.0, 128
        %1329 = vxpose.xlu0.b32.cont [10/16] 0.0, 128
        %1330 = vxpose.xlu0.b32.cont [11/16] 0.0, 128
        %1331 = vxpose.xlu0.b32.cont [12/16] 0.0, 128
        %1332 = vxpose.xlu0.b32.cont [13/16] 0.0, 128
        %1333 = vxpose.xlu0.b32.cont [14/16] 0.0, 128
        %1334 = vxpose.xlu0.b32.cont [15/16] 0.0, 128
        %1335 = vxpose.xlu0.b32.end [16/16] 0.0, 128
        %v1336 = vpop.trf.xlu0
        %v1337 = vpop.trf.xlu0
        %v1338 = vpop.trf.xlu0
        %v1339 = vpop.trf.xlu0
        %v1340 = vpop.trf.xlu0
        %v1341 = vpop.trf.xlu0
        %v1342 = vpop.trf.xlu0
        %v1343 = vpop.trf.xlu0
        %v1344 = vpop.trf.xlu0
        %v1345 = vpop.trf.xlu0
        %v1346 = vpop.trf.xlu0
        %v1347 = vpop.trf.xlu0
        %v1348 = vpop.trf.xlu0
        %v1349 = vpop.trf.xlu0
        %v1350 = vpop.trf.xlu0
        %v1351 = vpop.trf.xlu0
        %v1352 = vpack.c.bf16 %v1336, %v1336
        %v1353 = vpack.c.bf16 %v1340, %v1340
        %1354 = vxpose.xlu0.c.b16.start [1/8] %v1352, 128
        %1355 = vxpose.xlu0.c.b16.cont [2/8] 0, 128
        %1356 = vxpose.xlu0.c.b16.cont [3/8] 0, 128
        %1357 = vxpose.xlu0.c.b16.cont [4/8] 0, 128
        %1358 = vxpose.xlu0.c.b16.cont [5/8] 0, 128
        %1359 = vxpose.xlu0.c.b16.cont [6/8] 0, 128
        %1360 = vxpose.xlu0.c.b16.cont [7/8] 0, 128
        %1361 = vxpose.xlu0.c.b16.end [8/8] 0, 128
        %v1362 = vpop.trf.xlu0
        %v1363 = vpop.trf.xlu0
        %v1364 = vpop.trf.xlu0
        %v1365 = vpop.trf.xlu0
        %v1366 = vpop.trf.xlu0
        %v1367 = vpop.trf.xlu0
        %v1368 = vpop.trf.xlu0
        %v1369 = vpop.trf.xlu0
        %v1371 = vsel %vm473, %v1362, 0
        %v1374 = vsel %vm477, %v1353, 0
        %1376 = vmatprep.subr.bf16.mxu0 0
        %1377 = vmatpush1.bf16.msra.mxu0 %v1374
        %1378 = vmatprep.subr.bf16.mxu0 0
        %1379 = vmatpush1.bf16.msra.mxu0 0
        %1380 = vmatprep.subr.bf16.mxu0 0
        %1381 = vmatpush1.bf16.msra.mxu0 0
        %1382 = vmatprep.subr.bf16.mxu0 0
        %1383 = vmatpush1.bf16.msra.mxu0 0
        %1384 = vmatprep.subr.bf16.mxu0 0
        %1385 = vmatpush1.bf16.msra.mxu0 0
        %1386 = vmatprep.subr.bf16.mxu0 0
        %1387 = vmatpush1.bf16.msra.mxu0 0
        %1388 = vmatprep.subr.bf16.mxu0 0
        %1389 = vmatpush1.bf16.msra.mxu0 0
        %1390 = vmatprep.subr.bf16.mxu0 0
        %1391 = vmatpush1.bf16.msra.mxu0 0
        %1392 = vmatprep.subr.bf16.mxu0 0
        %1393 = vmatpush1.bf16.msra.mxu0 0
        %1394 = vmatprep.subr.bf16.mxu0 0
        %1395 = vmatpush1.bf16.msra.mxu0 0
        %1396 = vmatprep.subr.bf16.mxu0 0
        %1397 = vmatpush1.bf16.msra.mxu0 0
        %1398 = vmatprep.subr.bf16.mxu0 0
        %1399 = vmatpush1.bf16.msra.mxu0 0
        %1400 = vmatprep.subr.bf16.mxu0 0
        %1401 = vmatpush1.bf16.msra.mxu0 0
        %1402 = vmatprep.subr.bf16.mxu0 0
        %1403 = vmatpush1.bf16.msra.mxu0 0
        %1404 = vmatprep.subr.bf16.mxu0 0
        %1405 = vmatpush1.bf16.msra.mxu0 0
        %1406 = vmatprep.subr.bf16.mxu0 0
        %1407 = vmatpush1.bf16.msra.mxu0 0
        %1408 = vmatprep.mubr.bf16.mxu0 0
        %1409 = vmatmul.mubr.bf16.gmra.mrb[0].mxu0 %v1371
        %v1410 = vpop.f32.mrb[0].mxu0
        %v1411 = vadd.f32 0.0, %v1410
        %v1412 = vpop.f32.mrb[0].mxu0
        %v1413 = vpop.f32.mrb[0].mxu0
        %v1414 = vpop.f32.mrb[0].mxu0
        %1415 = vdwg.mxu0
        %v1416 = vsel %vm473, %v1411, -inf
        %1417 = vmax.xlane.f32.xlu0 %v1416
        %v1418 = vpop.xlane.xlu0 %1417
        %v1419 = vsub.f32 %v1411, %v1418
        %v1420 = vmul.f32 %v1419, 1.442695
        %v1421 = vpow.pop %v1420
        %v1422 = vsel %vm473, %v1421, 0.0
        %1423 = vadd.xlane.f32.xlu0 %v1422
        %v1424 = vpop.xlane.xlu0 %1423
        %v1425 = vrcp.pop %v1424
        %v1426 = vmul.f32 %v1421, %v1425
        %v1427 = vpack.c.bf16 %v1344, %v1344
        %v1428 = vpack.c.bf16 %v1426, %v1426
        %v1430 = vsel %vm473, %v1427, 0
        %v1433 = vsel %vm473, %v1428, 0
        %1435 = vmatprep.subr.bf16.mxu0 0
        %1436 = vmatpush1.bf16.xpose.msra.mxu0 %v1433
        %1437 = vmatprep.subr.bf16.mxu0 0
        %1438 = vmatpush1.bf16.xpose.msra.mxu0 0
        %1439 = vmatprep.subr.bf16.mxu0 0
        %1440 = vmatpush1.bf16.xpose.msra.mxu0 0
        %1441 = vmatprep.subr.bf16.mxu0 0
        %1442 = vmatpush1.bf16.xpose.msra.mxu0 0
        %1443 = vmatprep.subr.bf16.mxu0 0
        %1444 = vmatpush1.bf16.xpose.msra.mxu0 0
        %1445 = vmatprep.subr.bf16.mxu0 0
        %1446 = vmatpush1.bf16.xpose.msra.mxu0 0
        %1447 = vmatprep.subr.bf16.mxu0 0
        %1448 = vmatpush1.bf16.xpose.msra.mxu0 0
        %1449 = vmatprep.subr.bf16.mxu0 0
        %1450 = vmatpush1.bf16.xpose.msra.mxu0 0
        %1451 = vmatprep.subr.bf16.mxu0 0
        %1452 = vmatpush1.bf16.xpose.msra.mxu0 0
        %1453 = vmatprep.subr.bf16.mxu0 0
        %1454 = vmatpush1.bf16.xpose.msra.mxu0 0
        %1455 = vmatprep.subr.bf16.mxu0 0
        %1456 = vmatpush1.bf16.xpose.msra.mxu0 0
        %1457 = vmatprep.subr.bf16.mxu0 0
        %1458 = vmatpush1.bf16.xpose.msra.mxu0 0
        %1459 = vmatprep.subr.bf16.mxu0 0
        %1460 = vmatpush1.bf16.xpose.msra.mxu0 0
        %1461 = vmatprep.subr.bf16.mxu0 0
        %1462 = vmatpush1.bf16.xpose.msra.mxu0 0
        %1463 = vmatprep.subr.bf16.mxu0 0
        %1464 = vmatpush1.bf16.xpose.msra.mxu0 0
        %1465 = vmatprep.subr.bf16.mxu0 0
        %1466 = vmatpush1.bf16.xpose.msra.mxu0 0
        %1467 = vmatprep.mubr.bf16.mxu0 0
        %1468 = vmatmul.mubr.bf16.gmra.mrb[0].mxu0 %v1430
        %v1469 = vpop.f32.mrb[0].mxu0
        %v1470 = vadd.f32 0.0, %v1469
        %v1471 = vpop.f32.mrb[0].mxu0
        %v1472 = vpop.f32.mrb[0].mxu0
        %v1473 = vpop.f32.mrb[0].mxu0
        %1474 = vdwg.mxu0
        %v1475 = vpack.c.bf16 %v1337, %v1337
        %v1476 = vpack.c.bf16 %v1341, %v1341
        %1477 = vxpose.xlu0.c.b16.start [1/8] %v1475, 128
        %1478 = vxpose.xlu0.c.b16.cont [2/8] 0, 128
        %1479 = vxpose.xlu0.c.b16.cont [3/8] 0, 128
        %1480 = vxpose.xlu0.c.b16.cont [4/8] 0, 128
        %1481 = vxpose.xlu0.c.b16.cont [5/8] 0, 128
        %1482 = vxpose.xlu0.c.b16.cont [6/8] 0, 128
        %1483 = vxpose.xlu0.c.b16.cont [7/8] 0, 128
        %1484 = vxpose.xlu0.c.b16.end [8/8] 0, 128
        %v1485 = vpop.trf.xlu0
        %v1486 = vpop.trf.xlu0
        %v1487 = vpop.trf.xlu0
        %v1488 = vpop.trf.xlu0
        %v1489 = vpop.trf.xlu0
        %v1490 = vpop.trf.xlu0
        %v1491 = vpop.trf.xlu0
        %v1492 = vpop.trf.xlu0
        %v1494 = vsel %vm473, %v1485, 0
        %v1497 = vsel %vm477, %v1476, 0
        %1499 = vmatprep.subr.bf16.mxu0 0
        %1500 = vmatpush1.bf16.msra.mxu0 %v1497
        %1501 = vmatprep.subr.bf16.mxu0 0
        %1502 = vmatpush1.bf16.msra.mxu0 0
        %1503 = vmatprep.subr.bf16.mxu0 0
        %1504 = vmatpush1.bf16.msra.mxu0 0
        %1505 = vmatprep.subr.bf16.mxu0 0
        %1506 = vmatpush1.bf16.msra.mxu0 0
        %1507 = vmatprep.subr.bf16.mxu0 0
        %1508 = vmatpush1.bf16.msra.mxu0 0
        %1509 = vmatprep.subr.bf16.mxu0 0
        %1510 = vmatpush1.bf16.msra.mxu0 0
        %1511 = vmatprep.subr.bf16.mxu0 0
        %1512 = vmatpush1.bf16.msra.mxu0 0
        %1513 = vmatprep.subr.bf16.mxu0 0
        %1514 = vmatpush1.bf16.msra.mxu0 0
        %1515 = vmatprep.subr.bf16.mxu0 0
        %1516 = vmatpush1.bf16.msra.mxu0 0
        %1517 = vmatprep.subr.bf16.mxu0 0
        %1518 = vmatpush1.bf16.msra.mxu0 0
        %1519 = vmatprep.subr.bf16.mxu0 0
        %1520 = vmatpush1.bf16.msra.mxu0 0
        %1521 = vmatprep.subr.bf16.mxu0 0
        %1522 = vmatpush1.bf16.msra.mxu0 0
        %1523 = vmatprep.subr.bf16.mxu0 0
        %1524 = vmatpush1.bf16.msra.mxu0 0
        %1525 = vmatprep.subr.bf16.mxu0 0
        %1526 = vmatpush1.bf16.msra.mxu0 0
        %1527 = vmatprep.subr.bf16.mxu0 0
        %1528 = vmatpush1.bf16.msra.mxu0 0
        %1529 = vmatprep.subr.bf16.mxu0 0
        %1530 = vmatpush1.bf16.msra.mxu0 0
        %1531 = vmatprep.mubr.bf16.mxu0 0
        %1532 = vmatmul.mubr.bf16.gmra.mrb[0].mxu0 %v1494
        %v1533 = vpop.f32.mrb[0].mxu0
        %v1534 = vadd.f32 0.0, %v1533
        %v1535 = vpop.f32.mrb[0].mxu0
        %v1536 = vpop.f32.mrb[0].mxu0
        %v1537 = vpop.f32.mrb[0].mxu0
        %1538 = vdwg.mxu0
        %v1539 = vsel %vm473, %v1534, -inf
        %1540 = vmax.xlane.f32.xlu0 %v1539
        %v1541 = vpop.xlane.xlu0 %1540
        %v1542 = vsub.f32 %v1534, %v1541
        %v1543 = vmul.f32 %v1542, 1.442695
        %v1544 = vpow.pop %v1543
        %v1545 = vsel %vm473, %v1544, 0.0
        %1546 = vadd.xlane.f32.xlu0 %v1545
        %v1547 = vpop.xlane.xlu0 %1546
        %v1548 = vrcp.pop %v1547
        %v1549 = vmul.f32 %v1544, %v1548
        %v1550 = vpack.c.bf16 %v1345, %v1345
        %v1551 = vpack.c.bf16 %v1549, %v1549
        %v1553 = vsel %vm473, %v1550, 0
        %v1556 = vsel %vm473, %v1551, 0
        %1558 = vmatprep.subr.bf16.mxu0 0
        %1559 = vmatpush1.bf16.xpose.msra.mxu0 %v1556
        %1560 = vmatprep.subr.bf16.mxu0 0
        %1561 = vmatpush1.bf16.xpose.msra.mxu0 0
        %1562 = vmatprep.subr.bf16.mxu0 0
        %1563 = vmatpush1.bf16.xpose.msra.mxu0 0
        %1564 = vmatprep.subr.bf16.mxu0 0
        %1565 = vmatpush1.bf16.xpose.msra.mxu0 0
        %1566 = vmatprep.subr.bf16.mxu0 0
        %1567 = vmatpush1.bf16.xpose.msra.mxu0 0
        %1568 = vmatprep.subr.bf16.mxu0 0
        %1569 = vmatpush1.bf16.xpose.msra.mxu0 0
        %1570 = vmatprep.subr.bf16.mxu0 0
        %1571 = vmatpush1.bf16.xpose.msra.mxu0 0
        %1572 = vmatprep.subr.bf16.mxu0 0
        %1573 = vmatpush1.bf16.xpose.msra.mxu0 0
        %1574 = vmatprep.subr.bf16.mxu0 0
        %1575 = vmatpush1.bf16.xpose.msra.mxu0 0
        %1576 = vmatprep.subr.bf16.mxu0 0
        %1577 = vmatpush1.bf16.xpose.msra.mxu0 0
        %1578 = vmatprep.subr.bf16.mxu0 0
        %1579 = vmatpush1.bf16.xpose.msra.mxu0 0
        %1580 = vmatprep.subr.bf16.mxu0 0
        %1581 = vmatpush1.bf16.xpose.msra.mxu0 0
        %1582 = vmatprep.subr.bf16.mxu0 0
        %1583 = vmatpush1.bf16.xpose.msra.mxu0 0
        %1584 = vmatprep.subr.bf16.mxu0 0
        %1585 = vmatpush1.bf16.xpose.msra.mxu0 0
        %1586 = vmatprep.subr.bf16.mxu0 0
        %1587 = vmatpush1.bf16.xpose.msra.mxu0 0
        %1588 = vmatprep.subr.bf16.mxu0 0
        %1589 = vmatpush1.bf16.xpose.msra.mxu0 0
        %1590 = vmatprep.mubr.bf16.mxu0 0
        %1591 = vmatmul.mubr.bf16.gmra.mrb[0].mxu0 %v1553
        %v1592 = vpop.f32.mrb[0].mxu0
        %v1593 = vadd.f32 0.0, %v1592
        %v1594 = vpop.f32.mrb[0].mxu0
        %v1595 = vpop.f32.mrb[0].mxu0
        %v1596 = vpop.f32.mrb[0].mxu0
        %1597 = vdwg.mxu0
        %v1598 = vpack.c.bf16 %v1338, %v1338
        %v1599 = vpack.c.bf16 %v1342, %v1342
        %1600 = vxpose.xlu0.c.b16.start [1/8] %v1598, 128
        %1601 = vxpose.xlu0.c.b16.cont [2/8] 0, 128
        %1602 = vxpose.xlu0.c.b16.cont [3/8] 0, 128
        %1603 = vxpose.xlu0.c.b16.cont [4/8] 0, 128
        %1604 = vxpose.xlu0.c.b16.cont [5/8] 0, 128
        %1605 = vxpose.xlu0.c.b16.cont [6/8] 0, 128
        %1606 = vxpose.xlu0.c.b16.cont [7/8] 0, 128
        %1607 = vxpose.xlu0.c.b16.end [8/8] 0, 128
        %v1608 = vpop.trf.xlu0
        %v1609 = vpop.trf.xlu0
        %v1610 = vpop.trf.xlu0
        %v1611 = vpop.trf.xlu0
        %v1612 = vpop.trf.xlu0
        %v1613 = vpop.trf.xlu0
        %v1614 = vpop.trf.xlu0
        %v1615 = vpop.trf.xlu0
        %v1617 = vsel %vm473, %v1608, 0
        %v1620 = vsel %vm477, %v1599, 0
        %1622 = vmatprep.subr.bf16.mxu0 0
        %1623 = vmatpush1.bf16.msra.mxu0 %v1620
        %1624 = vmatprep.subr.bf16.mxu0 0
        %1625 = vmatpush1.bf16.msra.mxu0 0
        %1626 = vmatprep.subr.bf16.mxu0 0
        %1627 = vmatpush1.bf16.msra.mxu0 0
        %1628 = vmatprep.subr.bf16.mxu0 0
        %1629 = vmatpush1.bf16.msra.mxu0 0
        %1630 = vmatprep.subr.bf16.mxu0 0
        %1631 = vmatpush1.bf16.msra.mxu0 0
        %1632 = vmatprep.subr.bf16.mxu0 0
        %1633 = vmatpush1.bf16.msra.mxu0 0
        %1634 = vmatprep.subr.bf16.mxu0 0
        %1635 = vmatpush1.bf16.msra.mxu0 0
        %1636 = vmatprep.subr.bf16.mxu0 0
        %1637 = vmatpush1.bf16.msra.mxu0 0
        %1638 = vmatprep.subr.bf16.mxu0 0
        %1639 = vmatpush1.bf16.msra.mxu0 0
        %1640 = vmatprep.subr.bf16.mxu0 0
        %1641 = vmatpush1.bf16.msra.mxu0 0
        %1642 = vmatprep.subr.bf16.mxu0 0
        %1643 = vmatpush1.bf16.msra.mxu0 0
        %1644 = vmatprep.subr.bf16.mxu0 0
        %1645 = vmatpush1.bf16.msra.mxu0 0
        %1646 = vmatprep.subr.bf16.mxu0 0
        %1647 = vmatpush1.bf16.msra.mxu0 0
        %1648 = vmatprep.subr.bf16.mxu0 0
        %1649 = vmatpush1.bf16.msra.mxu0 0
        %1650 = vmatprep.subr.bf16.mxu0 0
        %1651 = vmatpush1.bf16.msra.mxu0 0
        %1652 = vmatprep.subr.bf16.mxu0 0
        %1653 = vmatpush1.bf16.msra.mxu0 0
        %1654 = vmatprep.mubr.bf16.mxu0 0
        %1655 = vmatmul.mubr.bf16.gmra.mrb[0].mxu0 %v1617
        %v1656 = vpop.f32.mrb[0].mxu0
        %v1657 = vadd.f32 0.0, %v1656
        %v1658 = vpop.f32.mrb[0].mxu0
        %v1659 = vpop.f32.mrb[0].mxu0
        %v1660 = vpop.f32.mrb[0].mxu0
        %1661 = vdwg.mxu0
        %v1662 = vsel %vm473, %v1657, -inf
        %1663 = vmax.xlane.f32.xlu0 %v1662
        %v1664 = vpop.xlane.xlu0 %1663
        %v1665 = vsub.f32 %v1657, %v1664
        %v1666 = vmul.f32 %v1665, 1.442695
        %v1667 = vpow.pop %v1666
        %v1668 = vsel %vm473, %v1667, 0.0
        %1669 = vadd.xlane.f32.xlu0 %v1668
        %v1670 = vpop.xlane.xlu0 %1669
        %v1671 = vrcp.pop %v1670
        %v1672 = vmul.f32 %v1667, %v1671
        %v1673 = vpack.c.bf16 %v1346, %v1346
        %v1674 = vpack.c.bf16 %v1672, %v1672
        %v1676 = vsel %vm473, %v1673, 0
        %v1679 = vsel %vm473, %v1674, 0
        %1681 = vmatprep.subr.bf16.mxu0 0
        %1682 = vmatpush1.bf16.xpose.msra.mxu0 %v1679
        %1683 = vmatprep.subr.bf16.mxu0 0
        %1684 = vmatpush1.bf16.xpose.msra.mxu0 0
        %1685 = vmatprep.subr.bf16.mxu0 0
        %1686 = vmatpush1.bf16.xpose.msra.mxu0 0
        %1687 = vmatprep.subr.bf16.mxu0 0
        %1688 = vmatpush1.bf16.xpose.msra.mxu0 0
        %1689 = vmatprep.subr.bf16.mxu0 0
        %1690 = vmatpush1.bf16.xpose.msra.mxu0 0
        %1691 = vmatprep.subr.bf16.mxu0 0
        %1692 = vmatpush1.bf16.xpose.msra.mxu0 0
        %1693 = vmatprep.subr.bf16.mxu0 0
        %1694 = vmatpush1.bf16.xpose.msra.mxu0 0
        %1695 = vmatprep.subr.bf16.mxu0 0
        %1696 = vmatpush1.bf16.xpose.msra.mxu0 0
        %1697 = vmatprep.subr.bf16.mxu0 0
        %1698 = vmatpush1.bf16.xpose.msra.mxu0 0
        %1699 = vmatprep.subr.bf16.mxu0 0
        %1700 = vmatpush1.bf16.xpose.msra.mxu0 0
        %1701 = vmatprep.subr.bf16.mxu0 0
        %1702 = vmatpush1.bf16.xpose.msra.mxu0 0
        %1703 = vmatprep.subr.bf16.mxu0 0
        %1704 = vmatpush1.bf16.xpose.msra.mxu0 0
        %1705 = vmatprep.subr.bf16.mxu0 0
        %1706 = vmatpush1.bf16.xpose.msra.mxu0 0
        %1707 = vmatprep.subr.bf16.mxu0 0
        %1708 = vmatpush1.bf16.xpose.msra.mxu0 0
        %1709 = vmatprep.subr.bf16.mxu0 0
        %1710 = vmatpush1.bf16.xpose.msra.mxu0 0
        %1711 = vmatprep.subr.bf16.mxu0 0
        %1712 = vmatpush1.bf16.xpose.msra.mxu0 0
        %1713 = vmatprep.mubr.bf16.mxu0 0
        %1714 = vmatmul.mubr.bf16.gmra.mrb[0].mxu0 %v1676
        %v1715 = vpop.f32.mrb[0].mxu0
        %v1716 = vadd.f32 0.0, %v1715
        %v1717 = vpop.f32.mrb[0].mxu0
        %v1718 = vpop.f32.mrb[0].mxu0
        %v1719 = vpop.f32.mrb[0].mxu0
        %1720 = vdwg.mxu0
        %v1721 = vpack.c.bf16 %v1339, %v1339
        %v1722 = vpack.c.bf16 %v1343, %v1343
        %1723 = vxpose.xlu0.c.b16.start [1/8] %v1721, 128
        %1724 = vxpose.xlu0.c.b16.cont [2/8] 0, 128
        %1725 = vxpose.xlu0.c.b16.cont [3/8] 0, 128
        %1726 = vxpose.xlu0.c.b16.cont [4/8] 0, 128
        %1727 = vxpose.xlu0.c.b16.cont [5/8] 0, 128
        %1728 = vxpose.xlu0.c.b16.cont [6/8] 0, 128
        %1729 = vxpose.xlu0.c.b16.cont [7/8] 0, 128
        %1730 = vxpose.xlu0.c.b16.end [8/8] 0, 128
        %v1731 = vpop.trf.xlu0
        %v1732 = vpop.trf.xlu0
        %v1733 = vpop.trf.xlu0
        %v1734 = vpop.trf.xlu0
        %v1735 = vpop.trf.xlu0
        %v1736 = vpop.trf.xlu0
        %v1737 = vpop.trf.xlu0
        %v1738 = vpop.trf.xlu0
        %v1740 = vsel %vm473, %v1731, 0
        %v1743 = vsel %vm477, %v1722, 0
        %1745 = vmatprep.subr.bf16.mxu0 0
        %1746 = vmatpush1.bf16.msra.mxu0 %v1743
        %1747 = vmatprep.subr.bf16.mxu0 0
        %1748 = vmatpush1.bf16.msra.mxu0 0
        %1749 = vmatprep.subr.bf16.mxu0 0
        %1750 = vmatpush1.bf16.msra.mxu0 0
        %1751 = vmatprep.subr.bf16.mxu0 0
        %1752 = vmatpush1.bf16.msra.mxu0 0
        %1753 = vmatprep.subr.bf16.mxu0 0
        %1754 = vmatpush1.bf16.msra.mxu0 0
        %1755 = vmatprep.subr.bf16.mxu0 0
        %1756 = vmatpush1.bf16.msra.mxu0 0
        %1757 = vmatprep.subr.bf16.mxu0 0
        %1758 = vmatpush1.bf16.msra.mxu0 0
        %1759 = vmatprep.subr.bf16.mxu0 0
        %1760 = vmatpush1.bf16.msra.mxu0 0
        %1761 = vmatprep.subr.bf16.mxu0 0
        %1762 = vmatpush1.bf16.msra.mxu0 0
        %1763 = vmatprep.subr.bf16.mxu0 0
        %1764 = vmatpush1.bf16.msra.mxu0 0
        %1765 = vmatprep.subr.bf16.mxu0 0
        %1766 = vmatpush1.bf16.msra.mxu0 0
        %1767 = vmatprep.subr.bf16.mxu0 0
        %1768 = vmatpush1.bf16.msra.mxu0 0
        %1769 = vmatprep.subr.bf16.mxu0 0
        %1770 = vmatpush1.bf16.msra.mxu0 0
        %1771 = vmatprep.subr.bf16.mxu0 0
        %1772 = vmatpush1.bf16.msra.mxu0 0
        %1773 = vmatprep.subr.bf16.mxu0 0
        %1774 = vmatpush1.bf16.msra.mxu0 0
        %1775 = vmatprep.subr.bf16.mxu0 0
        %1776 = vmatpush1.bf16.msra.mxu0 0
        %1777 = vmatprep.mubr.bf16.mxu0 0
        %1778 = vmatmul.mubr.bf16.gmra.mrb[0].mxu0 %v1740
        %v1779 = vpop.f32.mrb[0].mxu0
        %v1780 = vadd.f32 0.0, %v1779
        %v1781 = vpop.f32.mrb[0].mxu0
        %v1782 = vpop.f32.mrb[0].mxu0
        %v1783 = vpop.f32.mrb[0].mxu0
        %1784 = vdwg.mxu0
        %v1785 = vsel %vm473, %v1780, -inf
        %1786 = vmax.xlane.f32.xlu0 %v1785
        %v1787 = vpop.xlane.xlu0 %1786
        %v1788 = vsub.f32 %v1780, %v1787
        %v1789 = vmul.f32 %v1788, 1.442695
        %v1790 = vpow.pop %v1789
        %v1791 = vsel %vm473, %v1790, 0.0
        %1792 = vadd.xlane.f32.xlu0 %v1791
        %v1793 = vpop.xlane.xlu0 %1792
        %v1794 = vrcp.pop %v1793
        %v1795 = vmul.f32 %v1790, %v1794
        %v1796 = vpack.c.bf16 %v1347, %v1347
        %v1797 = vpack.c.bf16 %v1795, %v1795
        %v1799 = vsel %vm473, %v1796, 0
        %v1802 = vsel %vm473, %v1797, 0
        %1804 = vmatprep.subr.bf16.mxu0 0
        %1805 = vmatpush1.bf16.xpose.msra.mxu0 %v1802
        %1806 = vmatprep.subr.bf16.mxu0 0
        %1807 = vmatpush1.bf16.xpose.msra.mxu0 0
        %1808 = vmatprep.subr.bf16.mxu0 0
        %1809 = vmatpush1.bf16.xpose.msra.mxu0 0
        %1810 = vmatprep.subr.bf16.mxu0 0
        %1811 = vmatpush1.bf16.xpose.msra.mxu0 0
        %1812 = vmatprep.subr.bf16.mxu0 0
        %1813 = vmatpush1.bf16.xpose.msra.mxu0 0
        %1814 = vmatprep.subr.bf16.mxu0 0
        %1815 = vmatpush1.bf16.xpose.msra.mxu0 0
        %1816 = vmatprep.subr.bf16.mxu0 0
        %1817 = vmatpush1.bf16.xpose.msra.mxu0 0
        %1818 = vmatprep.subr.bf16.mxu0 0
        %1819 = vmatpush1.bf16.xpose.msra.mxu0 0
        %1820 = vmatprep.subr.bf16.mxu0 0
        %1821 = vmatpush1.bf16.xpose.msra.mxu0 0
        %1822 = vmatprep.subr.bf16.mxu0 0
        %1823 = vmatpush1.bf16.xpose.msra.mxu0 0
        %1824 = vmatprep.subr.bf16.mxu0 0
        %1825 = vmatpush1.bf16.xpose.msra.mxu0 0
        %1826 = vmatprep.subr.bf16.mxu0 0
        %1827 = vmatpush1.bf16.xpose.msra.mxu0 0
        %1828 = vmatprep.subr.bf16.mxu0 0
        %1829 = vmatpush1.bf16.xpose.msra.mxu0 0
        %1830 = vmatprep.subr.bf16.mxu0 0
        %1831 = vmatpush1.bf16.xpose.msra.mxu0 0
        %1832 = vmatprep.subr.bf16.mxu0 0
        %1833 = vmatpush1.bf16.xpose.msra.mxu0 0
        %1834 = vmatprep.subr.bf16.mxu0 0
        %1835 = vmatpush1.bf16.xpose.msra.mxu0 0
        %1836 = vmatprep.mubr.bf16.mxu0 0
        %1837 = vmatmul.mubr.bf16.gmra.mrb[0].mxu0 %v1799
        %v1838 = vpop.f32.mrb[0].mxu0
        %v1839 = vadd.f32 0.0, %v1838
        %v1840 = vpop.f32.mrb[0].mxu0
        %v1841 = vpop.f32.mrb[0].mxu0
        %v1842 = vpop.f32.mrb[0].mxu0
        %1843 = vdwg.mxu0
        %1844 = vxpose.xlu0.b32.start [1/16] %v1470, 128
        %1845 = vxpose.xlu0.b32.cont [2/16] %v1593, 128
        %1846 = vxpose.xlu0.b32.cont [3/16] %v1716, 128
        %1847 = vxpose.xlu0.b32.cont [4/16] %v1839, 128
        %1848 = vxpose.xlu0.b32.cont [5/16] 0.0, 128
        %1849 = vxpose.xlu0.b32.cont [6/16] 0.0, 128
        %1850 = vxpose.xlu0.b32.cont [7/16] 0.0, 128
        %1851 = vxpose.xlu0.b32.cont [8/16] 0.0, 128
        %1852 = vxpose.xlu0.b32.cont [9/16] 0.0, 128
        %1853 = vxpose.xlu0.b32.cont [10/16] 0.0, 128
        %1854 = vxpose.xlu0.b32.cont [11/16] 0.0, 128
        %1855 = vxpose.xlu0.b32.cont [12/16] 0.0, 128
        %1856 = vxpose.xlu0.b32.cont [13/16] 0.0, 128
        %1857 = vxpose.xlu0.b32.cont [14/16] 0.0, 128
        %1858 = vxpose.xlu0.b32.cont [15/16] 0.0, 128
        %1859 = vxpose.xlu0.b32.end [16/16] 0.0, 128
        %v1860 = vpop.trf.xlu0
        %v1861 = vpop.trf.xlu0
        %v1862 = vpop.trf.xlu0
        %v1863 = vpop.trf.xlu0
        %v1864 = vpop.trf.xlu0
        %v1865 = vpop.trf.xlu0
        %v1866 = vpop.trf.xlu0
        %v1867 = vpop.trf.xlu0
        %v1868 = vpop.trf.xlu0
        %v1869 = vpop.trf.xlu0
        %v1870 = vpop.trf.xlu0
        %v1871 = vpop.trf.xlu0
        %v1872 = vpop.trf.xlu0
        %v1873 = vpop.trf.xlu0
        %v1874 = vpop.trf.xlu0
        %v1875 = vpop.trf.xlu0
        %s1876 = scalar_lea.vmem %s5, 8
        %v1877 = vld [vmem:[%s1876] sm:$0xff]
        %v1878 = vpack.c.bf16 %v1860, %v1860
        %s1879 = scalar_lea.vmem %s4, 16
        %v1880 = vld [vmem:[%s1879] sm:$0xf]
        %v1881 = vld [vmem:[%s1879 + $0x4] sm:$0xf]
        %v1882 = vld [vmem:[%s1879 + $0x8] sm:$0xf]
        %v1883 = vld [vmem:[%s1879 + $0xc] sm:$0xf]
        %v1884 = vlaneseq
        %v1885 = vshrl.u32 %v1884, 7
        %v1886 = vsub.s32 0, %v1885
        %v1887 = vrot.slane %v1877, %v1886
        %v1892 = vunpack.c.l.b16 %v1880
        %v1893 = vunpack.c.l.b16 %v1881
        %v1894 = vunpack.c.l.b16 %v1882
        %v1895 = vunpack.c.l.b16 %v1883
        %v1896 = vpack.c.b16 %v1893, %v1892
        %v1897 = vpack.c.b16 %v1895, %v1894
        %v1901 = vsel %vm331, %v1878, 0
        %1903 = vmatprep.subr.bf16.mxu0 0
        %1904 = vmatpush1.bf16.msra.mxu0 %v1896
        %1905 = vmatprep.subr.bf16.mxu0 0
        %1906 = vmatpush1.bf16.msra.mxu0 %v1897
        %1907 = vmatprep.subr.bf16.mxu0 0
        %1908 = vmatpush1.bf16.msra.mxu0 0
        %1909 = vmatprep.subr.bf16.mxu0 0
        %1910 = vmatpush1.bf16.msra.mxu0 0
        %1911 = vmatprep.subr.bf16.mxu0 0
        %1912 = vmatpush1.bf16.msra.mxu0 0
        %1913 = vmatprep.subr.bf16.mxu0 0
        %1914 = vmatpush1.bf16.msra.mxu0 0
        %1915 = vmatprep.subr.bf16.mxu0 0
        %1916 = vmatpush1.bf16.msra.mxu0 0
        %1917 = vmatprep.subr.bf16.mxu0 0
        %1918 = vmatpush1.bf16.msra.mxu0 0
        %1919 = vmatprep.subr.bf16.mxu0 0
        %1920 = vmatpush1.bf16.msra.mxu0 0
        %1921 = vmatprep.subr.bf16.mxu0 0
        %1922 = vmatpush1.bf16.msra.mxu0 0
        %1923 = vmatprep.subr.bf16.mxu0 0
        %1924 = vmatpush1.bf16.msra.mxu0 0
        %1925 = vmatprep.subr.bf16.mxu0 0
        %1926 = vmatpush1.bf16.msra.mxu0 0
        %1927 = vmatprep.subr.bf16.mxu0 0
        %1928 = vmatpush1.bf16.msra.mxu0 0
        %1929 = vmatprep.subr.bf16.mxu0 0
        %1930 = vmatpush1.bf16.msra.mxu0 0
        %1931 = vmatprep.subr.bf16.mxu0 0
        %1932 = vmatpush1.bf16.msra.mxu0 0
        %1933 = vmatprep.subr.bf16.mxu0 0
        %1934 = vmatpush1.bf16.msra.mxu0 0
        %1935 = vmatprep.mubr.bf16.mxu0 0
        %1936 = vmatmul.mubr.bf16.gmra.mrb[0].mxu0 %v1901
        %v1937 = vpop.f32.mrb[0].mxu0
        %v1938 = vadd.f32 %v1887, %v1937
        %v1939 = vpop.f32.mrb[0].mxu0
        %v1940 = vpop.f32.mrb[0].mxu0
        %v1941 = vpop.f32.mrb[0].mxu0
        %1942 = vdwg.mxu0
        %v1943 = vadd.f32 %v1250, %v1938
        %v1944 = vsel %vm331, %v1943, 0.0
        %1945 = vadd.xlane.f32.xlu0 %v1944
        %v1946 = vpop.xlane.xlu0 %1945
        %v1947 = vmul.f32 %v1946, %v335
        %v1948 = vsub.f32 %v1943, %v1947
        %v1949 = vmul.f32 %v1948, %v1948
        %v1950 = vsel %vm331, %v1949, 0.0
        %1951 = vadd.xlane.f32.xlu0 %v1950
        %v1952 = vpop.xlane.xlu0 %1951
        %v1953 = vmul.f32 %v1952, %v335
        %v1954 = vadd.f32 %v1953, 1e-12
        %v1955 = vrsqrt.pop %v1954
        %v1956 = vmul.f32 %v1948, %v1955
        %v1957 = vlaneseq
        %v1958 = vshrl.u32 %v1957, 7
        %v1959 = vsub.s32 1, %v1958
        %v1960 = vrot.slane %v1877, %v1959
        %v1961 = vmul.f32 %v1956, %v1960
        %v1962 = vlaneseq
        %v1963 = vshrl.u32 %v1962, 7
        %v1964 = vsub.s32 2, %v1963
        %v1965 = vrot.slane %v1877, %v1964
        %v1966 = vadd.f32 %v1961, %v1965
        %v1967 = vpack.c.bf16 %v1966, %v1966
        %s1968 = scalar_lea.vmem %s6, 16
        %v1969 = vld [vmem:[%s1968] sm:$0xf]
        %v1970 = vld [vmem:[%s1968 + $0x4] sm:$0xf]
        %v1971 = vld [vmem:[%s1968 + $0x8] sm:$0xf]
        %v1972 = vld [vmem:[%s1968 + $0xc] sm:$0xf]
        %s1973 = scalar_lea.vmem %s7, 1
        %v1974 = vld [vmem:[%s1973] sm:$0x1]
        %v1976 = vlaneseq
        %v1977 = vshrl.u32 %v1976, 7
        %v1978 = vsub.s32 0, %v1977
        %v1979 = vrot.slane %v1974, %v1978
        %v1985 = vunpack.c.l.b16 %v1969
        %v1986 = vunpack.c.l.b16 %v1970
        %v1987 = vunpack.c.l.b16 %v1971
        %v1988 = vunpack.c.l.b16 %v1972
        %v1989 = vpack.c.b16 %v1986, %v1985
        %v1990 = vpack.c.b16 %v1988, %v1987
        %v1994 = vsel %vm331, %v1967, 0
        %1996 = vmatprep.subr.bf16.mxu0 0
        %1997 = vmatpush1.bf16.msra.mxu0 %v1989
        %1998 = vmatprep.subr.bf16.mxu0 0
        %1999 = vmatpush1.bf16.msra.mxu0 %v1990
        %2000 = vmatprep.subr.bf16.mxu0 0
        %2001 = vmatpush1.bf16.msra.mxu0 0
        %2002 = vmatprep.subr.bf16.mxu0 0
        %2003 = vmatpush1.bf16.msra.mxu0 0
        %2004 = vmatprep.subr.bf16.mxu0 0
        %2005 = vmatpush1.bf16.msra.mxu0 0
        %2006 = vmatprep.subr.bf16.mxu0 0
        %2007 = vmatpush1.bf16.msra.mxu0 0
        %2008 = vmatprep.subr.bf16.mxu0 0
        %2009 = vmatpush1.bf16.msra.mxu0 0
        %2010 = vmatprep.subr.bf16.mxu0 0
        %2011 = vmatpush1.bf16.msra.mxu0 0
        %2012 = vmatprep.subr.bf16.mxu0 0
        %2013 = vmatpush1.bf16.msra.mxu0 0
        %2014 = vmatprep.subr.bf16.mxu0 0
        %2015 = vmatpush1.bf16.msra.mxu0 0
        %2016 = vmatprep.subr.bf16.mxu0 0
        %2017 = vmatpush1.bf16.msra.mxu0 0
        %2018 = vmatprep.subr.bf16.mxu0 0
        %2019 = vmatpush1.bf16.msra.mxu0 0
        %2020 = vmatprep.subr.bf16.mxu0 0
        %2021 = vmatpush1.bf16.msra.mxu0 0
        %2022 = vmatprep.subr.bf16.mxu0 0
        %2023 = vmatpush1.bf16.msra.mxu0 0
        %2024 = vmatprep.subr.bf16.mxu0 0
        %2025 = vmatpush1.bf16.msra.mxu0 0
        %2026 = vmatprep.subr.bf16.mxu0 0
        %2027 = vmatpush1.bf16.msra.mxu0 0
        %2028 = vmatprep.mubr.bf16.mxu0 0
        %2029 = vmatmul.mubr.bf16.gmra.mrb[0].mxu0 %v1994
        %v2030 = vpop.f32.mrb[0].mxu0
        %v2031 = vadd.f32 %v1979, %v2030
        %v2032 = vpop.f32.mrb[0].mxu0
        %v2033 = vpop.f32.mrb[0].mxu0
        %v2034 = vpop.f32.mrb[0].mxu0
        %2035 = vdwg.mxu0
        %v2036 = vmul.f32 %v2031, 0.5
        %v2037 = vmul.f32 %v2031, 0.044715
        %v2038 = vmul.f32 %v2037, %v2031
        %v2039 = vmul.f32 %v2038, %v2031
        %v2040 = vadd.f32 %v2031, %v2039
        %v2041 = vmul.f32 %v2040, 0.7978846
        %v2042 = vtanh.pop %v2041
        %v2043 = vadd.f32 %v2042, 1.0
        %v2044 = vmul.f32 %v2036, %v2043
        %v2045 = vpack.c.bf16 %v2044, %v2044
        %s2046 = scalar_lea.vmem %s8, 32
        %v2047 = vld [vmem:[%s2046] sm:$0xf]
        %v2048 = vld [vmem:[%s2046 + $0x4] sm:$0xf]
        %v2049 = vld [vmem:[%s2046 + $0x8] sm:$0xf]
        %v2050 = vld [vmem:[%s2046 + $0xc] sm:$0xf]
        %v2051 = vld [vmem:[%s2046 + $0x10] sm:$0xf]
        %v2052 = vld [vmem:[%s2046 + $0x14] sm:$0xf]
        %v2053 = vld [vmem:[%s2046 + $0x18] sm:$0xf]
        %v2054 = vld [vmem:[%s2046 + $0x1c] sm:$0xf]
        %v2055 = vlaneseq
        %v2056 = vshrl.u32 %v2055, 7
        %v2057 = vsub.s32 3, %v2056
        %v2058 = vrot.slane %v1877, %v2057
        %v2067 = vunpack.c.l.b16 %v2047
        %v2068 = vunpack.c.l.b16 %v2048
        %v2069 = vunpack.c.l.b16 %v2049
        %v2070 = vunpack.c.l.b16 %v2050
        %v2071 = vunpack.c.l.b16 %v2051
        %v2072 = vunpack.c.l.b16 %v2052
        %v2073 = vunpack.c.l.b16 %v2053
        %v2074 = vunpack.c.l.b16 %v2054
        %v2075 = vpack.c.b16 %v2068, %v2067
        %v2076 = vpack.c.b16 %v2070, %v2069
        %v2077 = vpack.c.b16 %v2072, %v2071
        %v2078 = vpack.c.b16 %v2074, %v2073
        %v2084 = vsel %vm1183, %v2045, 0
        %2086 = vmatprep.subr.bf16.mxu0 0
        %2087 = vmatpush1.bf16.msra.mxu0 %v2075
        %2088 = vmatprep.subr.bf16.mxu0 0
        %2089 = vmatpush1.bf16.msra.mxu0 %v2076
        %2090 = vmatprep.subr.bf16.mxu0 0
        %2091 = vmatpush1.bf16.msra.mxu0 %v2077
        %2092 = vmatprep.subr.bf16.mxu0 0
        %2093 = vmatpush1.bf16.msra.mxu0 %v2078
        %2094 = vmatprep.subr.bf16.mxu0 0
        %2095 = vmatpush1.bf16.msra.mxu0 0
        %2096 = vmatprep.subr.bf16.mxu0 0
        %2097 = vmatpush1.bf16.msra.mxu0 0
        %2098 = vmatprep.subr.bf16.mxu0 0
        %2099 = vmatpush1.bf16.msra.mxu0 0
        %2100 = vmatprep.subr.bf16.mxu0 0
        %2101 = vmatpush1.bf16.msra.mxu0 0
        %2102 = vmatprep.subr.bf16.mxu0 0
        %2103 = vmatpush1.bf16.msra.mxu0 0
        %2104 = vmatprep.subr.bf16.mxu0 0
        %2105 = vmatpush1.bf16.msra.mxu0 0
        %2106 = vmatprep.subr.bf16.mxu0 0
        %2107 = vmatpush1.bf16.msra.mxu0 0
        %2108 = vmatprep.subr.bf16.mxu0 0
        %2109 = vmatpush1.bf16.msra.mxu0 0
        %2110 = vmatprep.subr.bf16.mxu0 0
        %2111 = vmatpush1.bf16.msra.mxu0 0
        %2112 = vmatprep.subr.bf16.mxu0 0
        %2113 = vmatpush1.bf16.msra.mxu0 0
        %2114 = vmatprep.subr.bf16.mxu0 0
        %2115 = vmatpush1.bf16.msra.mxu0 0
        %2116 = vmatprep.subr.bf16.mxu0 0
        %2117 = vmatpush1.bf16.msra.mxu0 0
        %2118 = vmatprep.mubr.bf16.mxu0 0
        %2119 = vmatmul.mubr.bf16.gmra.mrb[0].mxu0 %v2084
        %v2120 = vpop.f32.mrb[0].mxu0
        %v2121 = vadd.f32 %v2058, %v2120
        %v2122 = vpop.f32.mrb[0].mxu0
        %v2123 = vpop.f32.mrb[0].mxu0
        %v2124 = vpop.f32.mrb[0].mxu0
        %2125 = vdwg.mxu0
        %v2126 = vadd.f32 %v1966, %v2121
        %v2127 = vsel %vm331, %v2126, 0.0
        %2128 = vadd.xlane.f32.xlu0 %v2127
        %v2129 = vpop.xlane.xlu0 %2128
        %v2130 = vmul.f32 %v2129, %v335
        %v2131 = vsub.f32 %v2126, %v2130
        %v2132 = vmul.f32 %v2131, %v2131
        %v2133 = vsel %vm331, %v2132, 0.0
        %2134 = vadd.xlane.f32.xlu0 %v2133
        %v2135 = vpop.xlane.xlu0 %2134
        %v2136 = vmul.f32 %v2135, %v335
        %v2137 = vadd.f32 %v2136, 1e-12
        %v2138 = vrsqrt.pop %v2137
        %v2139 = vmul.f32 %v2131, %v2138
        %v2140 = vlaneseq
        %v2141 = vshrl.u32 %v2140, 7
        %v2142 = vsub.s32 4, %v2141
        %v2143 = vrot.slane %v1877, %v2142
        %v2144 = vmul.f32 %v2139, %v2143
        %v2145 = vlaneseq
        %v2146 = vshrl.u32 %v2145, 7
        %v2147 = vsub.s32 5, %v2146
        %v2148 = vrot.slane %v1877, %v2147
        %v2149 = vadd.f32 %v2144, %v2148
        %v2150 = vsel %vm331, %v2149, 0.0
        %v2151 = vrot.slane %v2150, 4
        %v2152 = vadd.f32 %v2150, %v2151
        %v2153 = vrot.slane %v2152, 2
        %v2154 = vadd.f32 %v2152, %v2153
        %v2155 = vrot.slane %v2154, 1
        %v2156 = vadd.f32 %v2154, %v2155
        %v2157 = vrcp.pop 8.0
        %v2158 = vmul.f32 %v2156, %v2157
        %vm2159 = vcmask 253952
        %2160 = vst.msk [vmem:[%s322] sm:$0x1] %vm2159, %v2158
        %s2161 = sand.u32 %s225, 1
        %s2162 = scalar_lea.sflag [#allocation3], %s2161
        %s2163 = sand.u32 %s225, 1
        %s2164 = scalar_lea.vmem [#allocation2], %s2163
        // Predicated region
        $region57: #{bert_encoder_forward.1} parent=55 // pred_check
          %p2165 = pneg %p235
        $region58: #{bert_encoder_forward.1} parent=55 // pred_check_branch
          %2167 = sbr.rel (%p2165) target = $region60
        $region59: #{bert_encoder_forward.1} parent=55 // pred_region
          %s2169 = ssub.s32 16, 16
          %2170 = vsyncadd %s2162, %s2169
          %s2171 = smul.addr %s23, 16
          %s2172 = scalar_lea.hbm %s9, %s2171
          %s2174 = sshll.u32 %s2164, 4
          %s2175 = int_to_ptr.vmem [resolvable:$true] %s2174
          %2177 = dma.vmem_to_hbm [thread:$0]  %s2175, 16, %s2172, %s2162
        $region60: #{bert_encoder_forward.1} parent=55 // pred_fallthru
          _
      $region56: #{bert_encoder_forward.1} parent=5 // pred_fallthru
        _
      %p2178 = scmp.le.s32.totalorder 2, %s18
      // Predicated region
      $region61: #{bert_encoder_forward.1} parent=5 // pred_check
        %p2179 = pneg %p2178
      $region62: #{bert_encoder_forward.1} parent=5 // pred_check_branch
        %2181 = sbr.rel (%p2179) target = $region64
      $region63: #{bert_encoder_forward.1} parent=5 // pred_region
        %s2182 = ssub.s32 %s18, 2
        // Predicated region
        $region65: #{bert_encoder_forward.1} parent=63 // pred_check
          %p2183 = pneg %p241
        $region66: #{bert_encoder_forward.1} parent=63 // pred_check_branch
          %2185 = sbr.rel (%p2183) target = $region68
        $region67: #{bert_encoder_forward.1} parent=63 // pred_region
          %s2186 = sand.u32 %s226, 1
          %s2187 = scalar_lea.sflag [#allocation3], %s2186
          %s2188 = sand.u32 %s226, 1
          %s2189 = scalar_lea.vmem [#allocation2], %s2188
          %2190 = dma.done %s2187, 16
        $region68: #{bert_encoder_forward.1} parent=63 // pred_fallthru
          _
      $region64: #{bert_encoder_forward.1} parent=5 // pred_fallthru
        _
    $region6: #{bert_encoder_forward.1} parent=1 // loop_footer
      %s22 = sadd.s32 1, %s18
    $region7: #{bert_encoder_forward.1} parent=1 // loop_footer_branch
      %17 = sbr.rel target = $region3
    $region8: #{bert_encoder_forward.1} parent=1 // loop_exit
      _
    %2191 = vsyncpa [#allocation3], 1
    %s2192 = scalar_lea.sflag [#allocation3], 1
    %2193 = vsyncpa %s2192, 1

</llo_original>
